<compile_context>
chip_gen: v7x
topology: tpu7x:2x2x1
jax: 0.10.0
libtpu: 0.0.40
codegen_flags: <defaults>
</compile_context>

<pallas_src>
import functools

import jax
import jax.numpy as jnp
from jax.experimental import pallas as pl
from jax.experimental.pallas import tpu as pltpu


# ----------------------------------------------------------------------------
# Fused kernel: all layers + directions + fc, single invocation (grid=()).
# ----------------------------------------------------------------------------
def _make_fused_kernel(T, B, E, H, D, num_layers, O_pad):
    HD = H * D          # per-timestep hidden width (both directions)
    G = 4 * HD          # stacked gate width: [i | f | o | g], dirs interleaved
    TB = T * B
    refs_per_layer = 4 if D == 2 else 3   # (w_in_f, [w_in_b], w_hh, bias)
    n_layer_refs = num_layers * refs_per_layer
    n_ybuf = 2 if num_layers > 1 else 1
    unroll = T if T <= 8 else 8           # bounded unroll (vreg pressure)

    def kernel(*args):
        x_ref = args[0]                           # (T*B, E)
        layer_refs = args[1:1 + n_layer_refs]
        wfc_ref = args[1 + n_layer_refs]          # (HD, O_pad)
        bfc_ref = args[2 + n_layer_refs]          # (1, O_pad)
        out_ref = args[3 + n_layer_refs]          # (T*B, O_pad)
        scratch = args[4 + n_layer_refs:]
        si = 0
        pf_buf = scratch[si]; si += 1             # (T*B, G) fwd input proj
        pb_buf = None
        if D == 2:
            pb_buf = scratch[si]; si += 1         # (T*B, G) bwd input proj
        ybufs = scratch[si:si + n_ybuf]           # each (T*B, HD)

        def run_layer(wrefs, inp_ref, dst_ref):
            if D == 2:
                wf_ref, wb_ref, whh_ref, b_ref = wrefs
            else:
                wf_ref, whh_ref, b_ref = wrefs
                wb_ref = None

            # --- hoisted input projection (one dense matmul per direction) --
            inp = inp_ref[...]                                   # (T*B, IN)
            pf_buf[...] = (
                jnp.dot(inp, wf_ref[...], preferred_element_type=jnp.float32)
                + jnp.broadcast_to(b_ref[...], (TB, G)))
            if D == 2:
                pb_buf[...] = jnp.dot(inp, wb_ref[...],
                                      preferred_element_type=jnp.float32)

            # --- recurrence: only h @ W_hh + precomputed rows per step ------
            def step(s, carry):
                h2, c2 = carry                                   # (B, HD)
                row_f = pl.multiple_of(s * B, B)
                gates = jnp.dot(h2, whh_ref[...],
                                preferred_element_type=jnp.float32)  # (B, G)
                gates = gates + pf_buf[pl.ds(row_f, B), :]
                if D == 2:
                    t_rev = T - 1 - s
                    row_b = pl.multiple_of(t_rev * B, B)
                    gates = gates + pb_buf[pl.ds(row_b, B), :]
                # One wide sigmoid (i,f,o for both dirs) + one wide tanh (g).
                sig = jax.nn.sigmoid(gates[:, 0:3 * HD])
                i_g = sig[:, 0:HD]
                f_g = sig[:, HD:2 * HD]
                o_g = sig[:, 2 * HD:3 * HD]
                g_g = jnp.tanh(gates[:, 3 * HD:4 * HD])
                c_new = f_g * c2 + i_g * g_g                     # (B, HD)
                h_new = o_g * jnp.tanh(c_new)                    # (B, HD)
                if D == 1:
                    dst_ref[pl.ds(row_f, B), :] = h_new
                else:
                    # fwd half at time s, bwd half at time T-1-s.
                    dst_ref[pl.ds(row_f, B), 0:H] = h_new[:, 0:H]
                    dst_ref[pl.ds(row_b, B), H:2 * H] = h_new[:, H:2 * H]
                return h_new, c_new

            zeros = jnp.zeros((B, HD), jnp.float32)
            jax.lax.fori_loop(0, T, step, (zeros, zeros), unroll=unroll)

        # ---- stacked LSTM layers (ping-pong the hidden scratch) ------------
        for layer in range(num_layers):
            wrefs = layer_refs[layer * refs_per_layer:
                               (layer + 1) * refs_per_layer]
            inp_ref = x_ref if layer == 0 else ybufs[(layer - 1) % n_ybuf]
            dst_ref = ybufs[layer % n_ybuf]
            run_layer(wrefs, inp_ref, dst_ref)
            # TODO(synk): inter-layer dropout is train-mode only; identity here.

        # ---- fc epilogue: one matmul, fully dense store ---------------------
        feats = ybufs[(num_layers - 1) % n_ybuf][...]            # (T*B, HD)
        out_ref[...] = (
            jnp.dot(feats, wfc_ref[...], preferred_element_type=jnp.float32)
            + jnp.broadcast_to(bfc_ref[...], (TB, O_pad)))

    return kernel


def _fused_forward(x_2d, layer_weights, wfc_pad, bfc_pad, *, T, B, H, D,
                   num_layers, O_pad):
    TB, E = x_2d.shape
    HD = H * D
    G = 4 * HD
    kernel = _make_fused_kernel(T, B, E, H, D, num_layers, O_pad)

    inputs = [x_2d]
    in_specs = [pl.BlockSpec(x_2d.shape, lambda: (0, 0))]
    for mats in layer_weights:
        for m in mats:
            inputs.append(m)
            in_specs.append(pl.BlockSpec(m.shape, lambda: (0, 0)))
    inputs += [wfc_pad, bfc_pad]
    in_specs += [pl.BlockSpec(wfc_pad.shape, lambda: (0, 0)),
                 pl.BlockSpec(bfc_pad.shape, lambda: (0, 0))]

    n_ybuf = 2 if num_layers > 1 else 1
    scratch_shapes = [pltpu.VMEM((TB, G), jnp.float32)]       # fwd input proj
    if D == 2:
        scratch_shapes.append(pltpu.VMEM((TB, G), jnp.float32))  # bwd proj
    scratch_shapes += [pltpu.VMEM((TB, HD), jnp.float32)
                       for _ in range(n_ybuf)]                # hidden slabs

    return pl.pallas_call(
        kernel,
        out_shape=jax.ShapeDtypeStruct((TB, O_pad), jnp.float32),
        grid=(),
        in_specs=in_specs,
        out_specs=pl.BlockSpec((TB, O_pad), lambda: (0, 0)),
        scratch_shapes=scratch_shapes,
    )(*inputs)


# ----------------------------------------------------------------------------
# Weight preparation (outside the kernel): re-stacked gate weights.
# Target column layout: [i | f | o | g], each group HD wide with the two
# directions interleaved (forward lanes [0:H], backward lanes [H:2H]).
# PyTorch gate row-block order is [i, f, g, o].
# ----------------------------------------------------------------------------
def _prep_layer_weights(dir_params, D, H):
    HD = H * D
    G = 4 * HD
    src_of_tgt = (0, 1, 3, 2)   # target [i, f, o, g] <- pytorch [i, f, g, o]

    def place_cols(mat, d):     # mat: (4H, X) pytorch layout -> (X, G)
        out = jnp.zeros((mat.shape[1], G), jnp.float32)
        for tgt, src in enumerate(src_of_tgt):
            out = out.at[:, tgt * HD + d * H: tgt * HD + (d + 1) * H].set(
                mat[src * H:(src + 1) * H, :].T.astype(jnp.float32))
        return out

    def place_bias(b, d):       # (4H,) -> (G,)
        out = jnp.zeros((G,), jnp.float32)
        for tgt, src in enumerate(src_of_tgt):
            out = out.at[tgt * HD + d * H: tgt * HD + (d + 1) * H].set(
                b[src * H:(src + 1) * H].astype(jnp.float32))
        return out

    w_in = [place_cols(dir_params[d]["w_ih"], d) for d in range(D)]
    whh = jnp.zeros((HD, G), jnp.float32)
    bias = jnp.zeros((G,), jnp.float32)
    for d in range(D):
        whh = whh.at[d * H:(d + 1) * H, :].set(
            place_cols(dir_params[d]["w_hh"], d))
        bias = bias + place_bias(
            dir_params[d]["b_ih"] + dir_params[d]["b_hh"], d)

    mats = [w_in[0]]
    if D == 2:
        mats.append(w_in[1])
    mats += [whh, bias[None, :]]
    return tuple(mats)


# ----------------------------------------------------------------------------
# Full NER_LSTM forward
# ----------------------------------------------------------------------------
def ner_lstm_forward(x_tokens, params, *, num_layers, bidirectional):
    """x_tokens: (B, T) int32 token ids -> logits (B, T, output_size)."""
    D = 2 if bidirectional else 1
    B, T = x_tokens.shape

    # Embedding lookup (gather) is glue in plain JAX; dropout == identity.
    emb = params["embedding"][x_tokens]                        # (B, T, E)
    x_tbe = jnp.transpose(emb, (1, 0, 2)).astype(jnp.float32)  # (T, B, E)
    E = x_tbe.shape[-1]
    H = params["lstm"][(0, 0)]["w_hh"].shape[1]

    # Pad batch to a full sublane tile (>= 8) so all (B, .) work is dense.
    B_pad = max(8, ((B + 7) // 8) * 8)
    if B_pad != B:
        x_tbe = jnp.pad(x_tbe, ((0, 0), (0, B_pad - B), (0, 0)))
    x_2d = x_tbe.reshape(T * B_pad, E)                         # (T*B_pad, E)

    layer_weights = []
    for layer in range(num_layers):
        dir_params = [params["lstm"][(layer, d)] for d in range(D)]
        layer_weights.append(_prep_layer_weights(dir_params, D, H))

    O = params["fc_w"].shape[0]
    O_pad = ((O + 127) // 128) * 128
    wfc_pad = jnp.zeros((H * D, O_pad), jnp.float32).at[:, :O].set(
        params["fc_w"].T.astype(jnp.float32))
    bfc_pad = jnp.zeros((1, O_pad), jnp.float32).at[0, :O].set(
        params["fc_b"].astype(jnp.float32))

    out = _fused_forward(x_2d, layer_weights, wfc_pad, bfc_pad,
                         T=T, B=B_pad, H=H, D=D, num_layers=num_layers,
                         O_pad=O_pad)                          # (T*B_pad, O_pad)
    out = out.reshape(T, B_pad, O_pad)[:, :B, :O]              # (T, B, O)
    return jnp.transpose(out, (1, 0, 2))                       # (B, T, O)


# ----------------------------------------------------------------------------
# Deterministic parameter init (shapes from NER_LSTM.__init__)
# ----------------------------------------------------------------------------
def make_params(key, *, input_size, embedding_size, hidden_size, output_size,
                num_layers, bidirectional):
    num_dirs = 2 if bidirectional else 1
    keys = jax.random.split(key, 2 + 4 * num_layers * num_dirs + 2)
    ki = iter(keys)

    def rnd(k, shape, scale=0.1):
        return scale * jax.random.normal(k, shape, jnp.float32)

    params = {
        "embedding": rnd(next(ki), (input_size, embedding_size)),
        "lstm": {},
    }
    for layer in range(num_layers):
        in_size = embedding_size if layer == 0 else hidden_size * num_dirs
        for d in range(num_dirs):
            params["lstm"][(layer, d)] = {
                "w_ih": rnd(next(ki), (4 * hidden_size, in_size)),
                "w_hh": rnd(next(ki), (4 * hidden_size, hidden_size)),
                "b_ih": rnd(next(ki), (4 * hidden_size,)),
                "b_hh": rnd(next(ki), (4 * hidden_size,)),
            }
    params["fc_w"] = rnd(next(ki), (output_size, hidden_size * num_dirs))
    params["fc_b"] = rnd(next(ki), (output_size,))
    return params


if __name__ == "__main__":
    # Small, module-consistent shapes.
    input_size = 50        # vocab
    embedding_size = 32
    hidden_size = 32
    output_size = 8        # NER tag set size
    num_layers = 2
    bidirectional = True   # num_dirs flag in the PyTorch module
    B, T = 2, 8

    key = jax.random.PRNGKey(0)
    pkey, xkey = jax.random.split(key)
    params = make_params(
        pkey,
        input_size=input_size,
        embedding_size=embedding_size,
        hidden_size=hidden_size,
        output_size=output_size,
        num_layers=num_layers,
        bidirectional=bidirectional,
    )
    x_tokens = jax.random.randint(xkey, (B, T), 0, input_size, dtype=jnp.int32)

    fwd = functools.partial(
        ner_lstm_forward, num_layers=num_layers, bidirectional=bidirectional
    )
    logits = jax.jit(fwd)(x_tokens, params)
    jax.block_until_ready(logits)

    assert logits.shape == (B, T, output_size), logits.shape
    assert logits.dtype == jnp.float32
    print("KERNEL_OK")
</pallas_src>

<mosaic_0001>
module attributes {stable_mosaic.version = 11 : i64} {
  func.func @kernel(%arg0: memref<64x32xf32, #tpu.memory_space<vmem>>, %arg1: memref<32x256xf32, #tpu.memory_space<vmem>>, %arg2: memref<32x256xf32, #tpu.memory_space<vmem>>, %arg3: memref<64x256xf32, #tpu.memory_space<vmem>>, %arg4: memref<1x256xf32, #tpu.memory_space<vmem>>, %arg5: memref<64x256xf32, #tpu.memory_space<vmem>>, %arg6: memref<64x256xf32, #tpu.memory_space<vmem>>, %arg7: memref<64x256xf32, #tpu.memory_space<vmem>>, %arg8: memref<1x256xf32, #tpu.memory_space<vmem>>, %arg9: memref<64x128xf32, #tpu.memory_space<vmem>>, %arg10: memref<1x128xf32, #tpu.memory_space<vmem>>, %arg11: memref<64x128xf32, #tpu.memory_space<vmem>>, %arg12: memref<64x256xf32, #tpu.memory_space<vmem>>, %arg13: memref<64x256xf32, #tpu.memory_space<vmem>>, %arg14: memref<64x64xf32, #tpu.memory_space<vmem>>, %arg15: memref<64x64xf32, #tpu.memory_space<vmem>>) attributes {dimension_semantics = [], scalar_prefetch = 0 : i64, scratch_operands = 4 : i64, tpu.core_type = #tpu.core_type<tc>} {
    %c0 = arith.constant 0 : index
    %c0_0 = arith.constant 0 : index
    %0 = vector.load %arg0[%c0, %c0_0] : memref<64x32xf32, #tpu.memory_space<vmem>>, vector<64x32xf32>
    %c0_1 = arith.constant 0 : index
    %c0_2 = arith.constant 0 : index
    %1 = vector.load %arg1[%c0_1, %c0_2] : memref<32x256xf32, #tpu.memory_space<vmem>>, vector<32x256xf32>
    %cst = arith.constant dense<0.000000e+00> : vector<64x256xf32>
    %2 = tpu.matmul %0, %1, %cst {dimension_numbers = #tpu.dot_dimension_numbers<[1], [0], [0], [1], [0, 0, 1, 1], [], []>} : vector<64x32xf32>, vector<32x256xf32>, vector<64x256xf32> -> vector<64x256xf32>
    %c0_3 = arith.constant 0 : index
    %c0_4 = arith.constant 0 : index
    %3 = vector.load %arg4[%c0_3, %c0_4] : memref<1x256xf32, #tpu.memory_space<vmem>>, vector<1x256xf32>
    %4 = vector.shape_cast %3 : vector<1x256xf32> to vector<1x256xf32>
    %5 = vector.broadcast %4 : vector<1x256xf32> to vector<64x256xf32>
    %6 = arith.addf %2, %5 : vector<64x256xf32>
    %c0_5 = arith.constant 0 : index
    %c0_6 = arith.constant 0 : index
    %7 = vector.load %arg12[%c0_5, %c0_6] : memref<64x256xf32, #tpu.memory_space<vmem>>, vector<64x256xf32>
    tpu.vector_store %arg12[%c0_5, %c0_6], %6 {strides = array<i32>} : memref<64x256xf32, #tpu.memory_space<vmem>>, vector<64x256xf32>,
    %c0_7 = arith.constant 0 : index
    %c0_8 = arith.constant 0 : index
    %8 = vector.load %arg2[%c0_7, %c0_8] : memref<32x256xf32, #tpu.memory_space<vmem>>, vector<32x256xf32>
    %cst_9 = arith.constant dense<0.000000e+00> : vector<64x256xf32>
    %9 = tpu.matmul %0, %8, %cst_9 {dimension_numbers = #tpu.dot_dimension_numbers<[1], [0], [0], [1], [0, 0, 1, 1], [], []>} : vector<64x32xf32>, vector<32x256xf32>, vector<64x256xf32> -> vector<64x256xf32>
    %c0_10 = arith.constant 0 : index
    %c0_11 = arith.constant 0 : index
    %10 = vector.load %arg13[%c0_10, %c0_11] : memref<64x256xf32, #tpu.memory_space<vmem>>, vector<64x256xf32>
    tpu.vector_store %arg13[%c0_10, %c0_11], %9 {strides = array<i32>} : memref<64x256xf32, #tpu.memory_space<vmem>>, vector<64x256xf32>,
    %cst_12 = arith.constant 0.000000e+00 : f32
    %11 = vector.broadcast %cst_12 : f32 to vector<8x64xf32>
    %c0_i32 = arith.constant 0 : i32
    %c8_i32 = arith.constant 8 : i32
    %12 = arith.muli %c0_i32, %c8_i32 : i32
    %13 = tpu.assume_multiple %12, 8 : i32
    %c0_13 = arith.constant 0 : index
    %c0_14 = arith.constant 0 : index
    %14 = vector.load %arg3[%c0_13, %c0_14] : memref<64x256xf32, #tpu.memory_space<vmem>>, vector<64x256xf32>
    %cst_15 = arith.constant dense<0.000000e+00> : vector<8x256xf32>
    %15 = tpu.matmul %11, %14, %cst_15 {dimension_numbers = #tpu.dot_dimension_numbers<[1], [0], [0], [1], [0, 0, 1, 1], [], []>} : vector<8x64xf32>, vector<64x256xf32>, vector<8x256xf32> -> vector<8x256xf32>
    %16 = arith.index_cast %13 : i32 to index
    %c0_16 = arith.constant 0 : index
    %17 = vector.load %arg12[%16, %c0_16] : memref<64x256xf32, #tpu.memory_space<vmem>>, vector<8x256xf32>
    %18 = arith.addf %15, %17 : vector<8x256xf32>
    %c7_i32 = arith.constant 7 : i32
    %19 = arith.subi %c7_i32, %c0_i32 : i32
    %c8_i32_17 = arith.constant 8 : i32
    %20 = arith.muli %19, %c8_i32_17 : i32
    %21 = tpu.assume_multiple %20, 8 : i32
    %22 = arith.index_cast %21 : i32 to index
    %c0_18 = arith.constant 0 : index
    %23 = vector.load %arg13[%22, %c0_18] : memref<64x256xf32, #tpu.memory_space<vmem>>, vector<8x256xf32>
    %24 = arith.addf %18, %23 : vector<8x256xf32>
    %25 = vector.extract_strided_slice %24 {offsets = [0, 0], sizes = [8, 192], strides = [1, 1]} : vector<8x256xf32> to vector<8x192xf32>
    %26 = arith.negf %25 : vector<8x192xf32>
    %27 = math.exp %26 : vector<8x192xf32>
    %cst_19 = arith.constant 1.000000e+00 : f32
    %28 = vector.broadcast %cst_19 : f32 to vector<8x192xf32>
    %29 = arith.addf %28, %27 : vector<8x192xf32>
    %30 = arith.divf %28, %29 : vector<8x192xf32>
    %31 = vector.extract_strided_slice %30 {offsets = [0, 0], sizes = [8, 64], strides = [1, 1]} : vector<8x192xf32> to vector<8x64xf32>
    %32 = vector.extract_strided_slice %30 {offsets = [0, 64], sizes = [8, 64], strides = [1, 1]} : vector<8x192xf32> to vector<8x64xf32>
    %33 = vector.extract_strided_slice %30 {offsets = [0, 128], sizes = [8, 64], strides = [1, 1]} : vector<8x192xf32> to vector<8x64xf32>
    %34 = vector.extract_strided_slice %24 {offsets = [0, 192], sizes = [8, 64], strides = [1, 1]} : vector<8x256xf32> to vector<8x64xf32>
    %35 = math.tanh %34 : vector<8x64xf32>
    %36 = arith.mulf %32, %11 : vector<8x64xf32>
    %37 = arith.mulf %31, %35 : vector<8x64xf32>
    %38 = arith.addf %36, %37 : vector<8x64xf32>
    %39 = math.tanh %38 : vector<8x64xf32>
    %40 = arith.mulf %33, %39 : vector<8x64xf32>
    %41 = vector.extract_strided_slice %40 {offsets = [0, 0], sizes = [8, 32], strides = [1, 1]} : vector<8x64xf32> to vector<8x32xf32>
    %42 = arith.index_cast %13 : i32 to index
    %c0_20 = arith.constant 0 : index
    %43 = vector.load %arg14[%42, %c0_20] : memref<64x64xf32, #tpu.memory_space<vmem>>, vector<8x32xf32>
    tpu.vector_store %arg14[%42, %c0_20], %41 {strides = array<i32>} : memref<64x64xf32, #tpu.memory_space<vmem>>, vector<8x32xf32>,
    %44 = vector.extract_strided_slice %40 {offsets = [0, 32], sizes = [8, 32], strides = [1, 1]} : vector<8x64xf32> to vector<8x32xf32>
    %45 = arith.index_cast %21 : i32 to index
    %c32 = arith.constant 32 : index
    %46 = vector.load %arg14[%45, %c32] : memref<64x64xf32, #tpu.memory_space<vmem>>, vector<8x32xf32>
    tpu.vector_store %arg14[%45, %c32], %44 {strides = array<i32>} : memref<64x64xf32, #tpu.memory_space<vmem>>, vector<8x32xf32>,
    %c1_i32 = arith.constant 1 : i32
    %c8_i32_21 = arith.constant 8 : i32
    %47 = arith.muli %c1_i32, %c8_i32_21 : i32
    %48 = tpu.assume_multiple %47, 8 : i32
    %c0_22 = arith.constant 0 : index
    %c0_23 = arith.constant 0 : index
    %49 = vector.load %arg3[%c0_22, %c0_23] : memref<64x256xf32, #tpu.memory_space<vmem>>, vector<64x256xf32>
    %cst_24 = arith.constant dense<0.000000e+00> : vector<8x256xf32>
    %50 = tpu.matmul %40, %49, %cst_24 {dimension_numbers = #tpu.dot_dimension_numbers<[1], [0], [0], [1], [0, 0, 1, 1], [], []>} : vector<8x64xf32>, vector<64x256xf32>, vector<8x256xf32> -> vector<8x256xf32>
    %51 = arith.index_cast %48 : i32 to index
    %c0_25 = arith.constant 0 : index
    %52 = vector.load %arg12[%51, %c0_25] : memref<64x256xf32, #tpu.memory_space<vmem>>, vector<8x256xf32>
    %53 = arith.addf %50, %52 : vector<8x256xf32>
    %c7_i32_26 = arith.constant 7 : i32
    %54 = arith.subi %c7_i32_26, %c1_i32 : i32
    %c8_i32_27 = arith.constant 8 : i32
    %55 = arith.muli %54, %c8_i32_27 : i32
    %56 = tpu.assume_multiple %55, 8 : i32
    %57 = arith.index_cast %56 : i32 to index
    %c0_28 = arith.constant 0 : index
    %58 = vector.load %arg13[%57, %c0_28] : memref<64x256xf32, #tpu.memory_space<vmem>>, vector<8x256xf32>
    %59 = arith.addf %53, %58 : vector<8x256xf32>
    %60 = vector.extract_strided_slice %59 {offsets = [0, 0], sizes = [8, 192], strides = [1, 1]} : vector<8x256xf32> to vector<8x192xf32>
    %61 = arith.negf %60 : vector<8x192xf32>
    %62 = math.exp %61 : vector<8x192xf32>
    %cst_29 = arith.constant 1.000000e+00 : f32
    %63 = vector.broadcast %cst_29 : f32 to vector<8x192xf32>
    %64 = arith.addf %63, %62 : vector<8x192xf32>
    %65 = arith.divf %63, %64 : vector<8x192xf32>
    %66 = vector.extract_strided_slice %65 {offsets = [0, 0], sizes = [8, 64], strides = [1, 1]} : vector<8x192xf32> to vector<8x64xf32>
    %67 = vector.extract_strided_slice %65 {offsets = [0, 64], sizes = [8, 64], strides = [1, 1]} : vector<8x192xf32> to vector<8x64xf32>
    %68 = vector.extract_strided_slice %65 {offsets = [0, 128], sizes = [8, 64], strides = [1, 1]} : vector<8x192xf32> to vector<8x64xf32>
    %69 = vector.extract_strided_slice %59 {offsets = [0, 192], sizes = [8, 64], strides = [1, 1]} : vector<8x256xf32> to vector<8x64xf32>
    %70 = math.tanh %69 : vector<8x64xf32>
    %71 = arith.mulf %67, %38 : vector<8x64xf32>
    %72 = arith.mulf %66, %70 : vector<8x64xf32>
    %73 = arith.addf %71, %72 : vector<8x64xf32>
    %74 = math.tanh %73 : vector<8x64xf32>
    %75 = arith.mulf %68, %74 : vector<8x64xf32>
    %76 = vector.extract_strided_slice %75 {offsets = [0, 0], sizes = [8, 32], strides = [1, 1]} : vector<8x64xf32> to vector<8x32xf32>
    %77 = arith.index_cast %48 : i32 to index
    %c0_30 = arith.constant 0 : index
    %78 = vector.load %arg14[%77, %c0_30] : memref<64x64xf32, #tpu.memory_space<vmem>>, vector<8x32xf32>
    tpu.vector_store %arg14[%77, %c0_30], %76 {strides = array<i32>} : memref<64x64xf32, #tpu.memory_space<vmem>>, vector<8x32xf32>,
    %79 = vector.extract_strided_slice %75 {offsets = [0, 32], sizes = [8, 32], strides = [1, 1]} : vector<8x64xf32> to vector<8x32xf32>
    %80 = arith.index_cast %56 : i32 to index
    %c32_31 = arith.constant 32 : index
    %81 = vector.load %arg14[%80, %c32_31] : memref<64x64xf32, #tpu.memory_space<vmem>>, vector<8x32xf32>
    tpu.vector_store %arg14[%80, %c32_31], %79 {strides = array<i32>} : memref<64x64xf32, #tpu.memory_space<vmem>>, vector<8x32xf32>,
    %c2_i32 = arith.constant 2 : i32
    %c8_i32_32 = arith.constant 8 : i32
    %82 = arith.muli %c2_i32, %c8_i32_32 : i32
    %83 = tpu.assume_multiple %82, 8 : i32
    %c0_33 = arith.constant 0 : index
    %c0_34 = arith.constant 0 : index
    %84 = vector.load %arg3[%c0_33, %c0_34] : memref<64x256xf32, #tpu.memory_space<vmem>>, vector<64x256xf32>
    %cst_35 = arith.constant dense<0.000000e+00> : vector<8x256xf32>
    %85 = tpu.matmul %75, %84, %cst_35 {dimension_numbers = #tpu.dot_dimension_numbers<[1], [0], [0], [1], [0, 0, 1, 1], [], []>} : vector<8x64xf32>, vector<64x256xf32>, vector<8x256xf32> -> vector<8x256xf32>
    %86 = arith.index_cast %83 : i32 to index
    %c0_36 = arith.constant 0 : index
    %87 = vector.load %arg12[%86, %c0_36] : memref<64x256xf32, #tpu.memory_space<vmem>>, vector<8x256xf32>
    %88 = arith.addf %85, %87 : vector<8x256xf32>
    %c7_i32_37 = arith.constant 7 : i32
    %89 = arith.subi %c7_i32_37, %c2_i32 : i32
    %c8_i32_38 = arith.constant 8 : i32
    %90 = arith.muli %89, %c8_i32_38 : i32
    %91 = tpu.assume_multiple %90, 8 : i32
    %92 = arith.index_cast %91 : i32 to index
    %c0_39 = arith.constant 0 : index
    %93 = vector.load %arg13[%92, %c0_39] : memref<64x256xf32, #tpu.memory_space<vmem>>, vector<8x256xf32>
    %94 = arith.addf %88, %93 : vector<8x256xf32>
    %95 = vector.extract_strided_slice %94 {offsets = [0, 0], sizes = [8, 192], strides = [1, 1]} : vector<8x256xf32> to vector<8x192xf32>
    %96 = arith.negf %95 : vector<8x192xf32>
    %97 = math.exp %96 : vector<8x192xf32>
    %cst_40 = arith.constant 1.000000e+00 : f32
    %98 = vector.broadcast %cst_40 : f32 to vector<8x192xf32>
    %99 = arith.addf %98, %97 : vector<8x192xf32>
    %100 = arith.divf %98, %99 : vector<8x192xf32>
    %101 = vector.extract_strided_slice %100 {offsets = [0, 0], sizes = [8, 64], strides = [1, 1]} : vector<8x192xf32> to vector<8x64xf32>
    %102 = vector.extract_strided_slice %100 {offsets = [0, 64], sizes = [8, 64], strides = [1, 1]} : vector<8x192xf32> to vector<8x64xf32>
    %103 = vector.extract_strided_slice %100 {offsets = [0, 128], sizes = [8, 64], strides = [1, 1]} : vector<8x192xf32> to vector<8x64xf32>
    %104 = vector.extract_strided_slice %94 {offsets = [0, 192], sizes = [8, 64], strides = [1, 1]} : vector<8x256xf32> to vector<8x64xf32>
    %105 = math.tanh %104 : vector<8x64xf32>
    %106 = arith.mulf %102, %73 : vector<8x64xf32>
    %107 = arith.mulf %101, %105 : vector<8x64xf32>
    %108 = arith.addf %106, %107 : vector<8x64xf32>
    %109 = math.tanh %108 : vector<8x64xf32>
    %110 = arith.mulf %103, %109 : vector<8x64xf32>
    %111 = vector.extract_strided_slice %110 {offsets = [0, 0], sizes = [8, 32], strides = [1, 1]} : vector<8x64xf32> to vector<8x32xf32>
    %112 = arith.index_cast %83 : i32 to index
    %c0_41 = arith.constant 0 : index
    %113 = vector.load %arg14[%112, %c0_41] : memref<64x64xf32, #tpu.memory_space<vmem>>, vector<8x32xf32>
    tpu.vector_store %arg14[%112, %c0_41], %111 {strides = array<i32>} : memref<64x64xf32, #tpu.memory_space<vmem>>, vector<8x32xf32>,
    %114 = vector.extract_strided_slice %110 {offsets = [0, 32], sizes = [8, 32], strides = [1, 1]} : vector<8x64xf32> to vector<8x32xf32>
    %115 = arith.index_cast %91 : i32 to index
    %c32_42 = arith.constant 32 : index
    %116 = vector.load %arg14[%115, %c32_42] : memref<64x64xf32, #tpu.memory_space<vmem>>, vector<8x32xf32>
    tpu.vector_store %arg14[%115, %c32_42], %114 {strides = array<i32>} : memref<64x64xf32, #tpu.memory_space<vmem>>, vector<8x32xf32>,
    %c3_i32 = arith.constant 3 : i32
    %c8_i32_43 = arith.constant 8 : i32
    %117 = arith.muli %c3_i32, %c8_i32_43 : i32
    %118 = tpu.assume_multiple %117, 8 : i32
    %c0_44 = arith.constant 0 : index
    %c0_45 = arith.constant 0 : index
    %119 = vector.load %arg3[%c0_44, %c0_45] : memref<64x256xf32, #tpu.memory_space<vmem>>, vector<64x256xf32>
    %cst_46 = arith.constant dense<0.000000e+00> : vector<8x256xf32>
    %120 = tpu.matmul %110, %119, %cst_46 {dimension_numbers = #tpu.dot_dimension_numbers<[1], [0], [0], [1], [0, 0, 1, 1], [], []>} : vector<8x64xf32>, vector<64x256xf32>, vector<8x256xf32> -> vector<8x256xf32>
    %121 = arith.index_cast %118 : i32 to index
    %c0_47 = arith.constant 0 : index
    %122 = vector.load %arg12[%121, %c0_47] : memref<64x256xf32, #tpu.memory_space<vmem>>, vector<8x256xf32>
    %123 = arith.addf %120, %122 : vector<8x256xf32>
    %c7_i32_48 = arith.constant 7 : i32
    %124 = arith.subi %c7_i32_48, %c3_i32 : i32
    %c8_i32_49 = arith.constant 8 : i32
    %125 = arith.muli %124, %c8_i32_49 : i32
    %126 = tpu.assume_multiple %125, 8 : i32
    %127 = arith.index_cast %126 : i32 to index
    %c0_50 = arith.constant 0 : index
    %128 = vector.load %arg13[%127, %c0_50] : memref<64x256xf32, #tpu.memory_space<vmem>>, vector<8x256xf32>
    %129 = arith.addf %123, %128 : vector<8x256xf32>
    %130 = vector.extract_strided_slice %129 {offsets = [0, 0], sizes = [8, 192], strides = [1, 1]} : vector<8x256xf32> to vector<8x192xf32>
    %131 = arith.negf %130 : vector<8x192xf32>
    %132 = math.exp %131 : vector<8x192xf32>
    %cst_51 = arith.constant 1.000000e+00 : f32
    %133 = vector.broadcast %cst_51 : f32 to vector<8x192xf32>
    %134 = arith.addf %133, %132 : vector<8x192xf32>
    %135 = arith.divf %133, %134 : vector<8x192xf32>
    %136 = vector.extract_strided_slice %135 {offsets = [0, 0], sizes = [8, 64], strides = [1, 1]} : vector<8x192xf32> to vector<8x64xf32>
    %137 = vector.extract_strided_slice %135 {offsets = [0, 64], sizes = [8, 64], strides = [1, 1]} : vector<8x192xf32> to vector<8x64xf32>
    %138 = vector.extract_strided_slice %135 {offsets = [0, 128], sizes = [8, 64], strides = [1, 1]} : vector<8x192xf32> to vector<8x64xf32>
    %139 = vector.extract_strided_slice %129 {offsets = [0, 192], sizes = [8, 64], strides = [1, 1]} : vector<8x256xf32> to vector<8x64xf32>
    %140 = math.tanh %139 : vector<8x64xf32>
    %141 = arith.mulf %137, %108 : vector<8x64xf32>
    %142 = arith.mulf %136, %140 : vector<8x64xf32>
    %143 = arith.addf %141, %142 : vector<8x64xf32>
    %144 = math.tanh %143 : vector<8x64xf32>
    %145 = arith.mulf %138, %144 : vector<8x64xf32>
    %146 = vector.extract_strided_slice %145 {offsets = [0, 0], sizes = [8, 32], strides = [1, 1]} : vector<8x64xf32> to vector<8x32xf32>
    %147 = arith.index_cast %118 : i32 to index
    %c0_52 = arith.constant 0 : index
    %148 = vector.load %arg14[%147, %c0_52] : memref<64x64xf32, #tpu.memory_space<vmem>>, vector<8x32xf32>
    tpu.vector_store %arg14[%147, %c0_52], %146 {strides = array<i32>} : memref<64x64xf32, #tpu.memory_space<vmem>>, vector<8x32xf32>,
    %149 = vector.extract_strided_slice %145 {offsets = [0, 32], sizes = [8, 32], strides = [1, 1]} : vector<8x64xf32> to vector<8x32xf32>
    %150 = arith.index_cast %126 : i32 to index
    %c32_53 = arith.constant 32 : index
    %151 = vector.load %arg14[%150, %c32_53] : memref<64x64xf32, #tpu.memory_space<vmem>>, vector<8x32xf32>
    tpu.vector_store %arg14[%150, %c32_53], %149 {strides = array<i32>} : memref<64x64xf32, #tpu.memory_space<vmem>>, vector<8x32xf32>,
    %c4_i32 = arith.constant 4 : i32
    %c8_i32_54 = arith.constant 8 : i32
    %152 = arith.muli %c4_i32, %c8_i32_54 : i32
    %153 = tpu.assume_multiple %152, 8 : i32
    %c0_55 = arith.constant 0 : index
    %c0_56 = arith.constant 0 : index
    %154 = vector.load %arg3[%c0_55, %c0_56] : memref<64x256xf32, #tpu.memory_space<vmem>>, vector<64x256xf32>
    %cst_57 = arith.constant dense<0.000000e+00> : vector<8x256xf32>
    %155 = tpu.matmul %145, %154, %cst_57 {dimension_numbers = #tpu.dot_dimension_numbers<[1], [0], [0], [1], [0, 0, 1, 1], [], []>} : vector<8x64xf32>, vector<64x256xf32>, vector<8x256xf32> -> vector<8x256xf32>
    %156 = arith.index_cast %153 : i32 to index
    %c0_58 = arith.constant 0 : index
    %157 = vector.load %arg12[%156, %c0_58] : memref<64x256xf32, #tpu.memory_space<vmem>>, vector<8x256xf32>
    %158 = arith.addf %155, %157 : vector<8x256xf32>
    %c7_i32_59 = arith.constant 7 : i32
    %159 = arith.subi %c7_i32_59, %c4_i32 : i32
    %c8_i32_60 = arith.constant 8 : i32
    %160 = arith.muli %159, %c8_i32_60 : i32
    %161 = tpu.assume_multiple %160, 8 : i32
    %162 = arith.index_cast %161 : i32 to index
    %c0_61 = arith.constant 0 : index
    %163 = vector.load %arg13[%162, %c0_61] : memref<64x256xf32, #tpu.memory_space<vmem>>, vector<8x256xf32>
    %164 = arith.addf %158, %163 : vector<8x256xf32>
    %165 = vector.extract_strided_slice %164 {offsets = [0, 0], sizes = [8, 192], strides = [1, 1]} : vector<8x256xf32> to vector<8x192xf32>
    %166 = arith.negf %165 : vector<8x192xf32>
    %167 = math.exp %166 : vector<8x192xf32>
    %cst_62 = arith.constant 1.000000e+00 : f32
    %168 = vector.broadcast %cst_62 : f32 to vector<8x192xf32>
    %169 = arith.addf %168, %167 : vector<8x192xf32>
    %170 = arith.divf %168, %169 : vector<8x192xf32>
    %171 = vector.extract_strided_slice %170 {offsets = [0, 0], sizes = [8, 64], strides = [1, 1]} : vector<8x192xf32> to vector<8x64xf32>
    %172 = vector.extract_strided_slice %170 {offsets = [0, 64], sizes = [8, 64], strides = [1, 1]} : vector<8x192xf32> to vector<8x64xf32>
    %173 = vector.extract_strided_slice %170 {offsets = [0, 128], sizes = [8, 64], strides = [1, 1]} : vector<8x192xf32> to vector<8x64xf32>
    %174 = vector.extract_strided_slice %164 {offsets = [0, 192], sizes = [8, 64], strides = [1, 1]} : vector<8x256xf32> to vector<8x64xf32>
    %175 = math.tanh %174 : vector<8x64xf32>
    %176 = arith.mulf %172, %143 : vector<8x64xf32>
    %177 = arith.mulf %171, %175 : vector<8x64xf32>
    %178 = arith.addf %176, %177 : vector<8x64xf32>
    %179 = math.tanh %178 : vector<8x64xf32>
    %180 = arith.mulf %173, %179 : vector<8x64xf32>
    %181 = vector.extract_strided_slice %180 {offsets = [0, 0], sizes = [8, 32], strides = [1, 1]} : vector<8x64xf32> to vector<8x32xf32>
    %182 = arith.index_cast %153 : i32 to index
    %c0_63 = arith.constant 0 : index
    %183 = vector.load %arg14[%182, %c0_63] : memref<64x64xf32, #tpu.memory_space<vmem>>, vector<8x32xf32>
    tpu.vector_store %arg14[%182, %c0_63], %181 {strides = array<i32>} : memref<64x64xf32, #tpu.memory_space<vmem>>, vector<8x32xf32>,
    %184 = vector.extract_strided_slice %180 {offsets = [0, 32], sizes = [8, 32], strides = [1, 1]} : vector<8x64xf32> to vector<8x32xf32>
    %185 = arith.index_cast %161 : i32 to index
    %c32_64 = arith.constant 32 : index
    %186 = vector.load %arg14[%185, %c32_64] : memref<64x64xf32, #tpu.memory_space<vmem>>, vector<8x32xf32>
    tpu.vector_store %arg14[%185, %c32_64], %184 {strides = array<i32>} : memref<64x64xf32, #tpu.memory_space<vmem>>, vector<8x32xf32>,
    %c5_i32 = arith.constant 5 : i32
    %c8_i32_65 = arith.constant 8 : i32
    %187 = arith.muli %c5_i32, %c8_i32_65 : i32
    %188 = tpu.assume_multiple %187, 8 : i32
    %c0_66 = arith.constant 0 : index
    %c0_67 = arith.constant 0 : index
    %189 = vector.load %arg3[%c0_66, %c0_67] : memref<64x256xf32, #tpu.memory_space<vmem>>, vector<64x256xf32>
    %cst_68 = arith.constant dense<0.000000e+00> : vector<8x256xf32>
    %190 = tpu.matmul %180, %189, %cst_68 {dimension_numbers = #tpu.dot_dimension_numbers<[1], [0], [0], [1], [0, 0, 1, 1], [], []>} : vector<8x64xf32>, vector<64x256xf32>, vector<8x256xf32> -> vector<8x256xf32>
    %191 = arith.index_cast %188 : i32 to index
    %c0_69 = arith.constant 0 : index
    %192 = vector.load %arg12[%191, %c0_69] : memref<64x256xf32, #tpu.memory_space<vmem>>, vector<8x256xf32>
    %193 = arith.addf %190, %192 : vector<8x256xf32>
    %c7_i32_70 = arith.constant 7 : i32
    %194 = arith.subi %c7_i32_70, %c5_i32 : i32
    %c8_i32_71 = arith.constant 8 : i32
    %195 = arith.muli %194, %c8_i32_71 : i32
    %196 = tpu.assume_multiple %195, 8 : i32
    %197 = arith.index_cast %196 : i32 to index
    %c0_72 = arith.constant 0 : index
    %198 = vector.load %arg13[%197, %c0_72] : memref<64x256xf32, #tpu.memory_space<vmem>>, vector<8x256xf32>
    %199 = arith.addf %193, %198 : vector<8x256xf32>
    %200 = vector.extract_strided_slice %199 {offsets = [0, 0], sizes = [8, 192], strides = [1, 1]} : vector<8x256xf32> to vector<8x192xf32>
    %201 = arith.negf %200 : vector<8x192xf32>
    %202 = math.exp %201 : vector<8x192xf32>
    %cst_73 = arith.constant 1.000000e+00 : f32
    %203 = vector.broadcast %cst_73 : f32 to vector<8x192xf32>
    %204 = arith.addf %203, %202 : vector<8x192xf32>
    %205 = arith.divf %203, %204 : vector<8x192xf32>
    %206 = vector.extract_strided_slice %205 {offsets = [0, 0], sizes = [8, 64], strides = [1, 1]} : vector<8x192xf32> to vector<8x64xf32>
    %207 = vector.extract_strided_slice %205 {offsets = [0, 64], sizes = [8, 64], strides = [1, 1]} : vector<8x192xf32> to vector<8x64xf32>
    %208 = vector.extract_strided_slice %205 {offsets = [0, 128], sizes = [8, 64], strides = [1, 1]} : vector<8x192xf32> to vector<8x64xf32>
    %209 = vector.extract_strided_slice %199 {offsets = [0, 192], sizes = [8, 64], strides = [1, 1]} : vector<8x256xf32> to vector<8x64xf32>
    %210 = math.tanh %209 : vector<8x64xf32>
    %211 = arith.mulf %207, %178 : vector<8x64xf32>
    %212 = arith.mulf %206, %210 : vector<8x64xf32>
    %213 = arith.addf %211, %212 : vector<8x64xf32>
    %214 = math.tanh %213 : vector<8x64xf32>
    %215 = arith.mulf %208, %214 : vector<8x64xf32>
    %216 = vector.extract_strided_slice %215 {offsets = [0, 0], sizes = [8, 32], strides = [1, 1]} : vector<8x64xf32> to vector<8x32xf32>
    %217 = arith.index_cast %188 : i32 to index
    %c0_74 = arith.constant 0 : index
    %218 = vector.load %arg14[%217, %c0_74] : memref<64x64xf32, #tpu.memory_space<vmem>>, vector<8x32xf32>
    tpu.vector_store %arg14[%217, %c0_74], %216 {strides = array<i32>} : memref<64x64xf32, #tpu.memory_space<vmem>>, vector<8x32xf32>,
    %219 = vector.extract_strided_slice %215 {offsets = [0, 32], sizes = [8, 32], strides = [1, 1]} : vector<8x64xf32> to vector<8x32xf32>
    %220 = arith.index_cast %196 : i32 to index
    %c32_75 = arith.constant 32 : index
    %221 = vector.load %arg14[%220, %c32_75] : memref<64x64xf32, #tpu.memory_space<vmem>>, vector<8x32xf32>
    tpu.vector_store %arg14[%220, %c32_75], %219 {strides = array<i32>} : memref<64x64xf32, #tpu.memory_space<vmem>>, vector<8x32xf32>,
    %c6_i32 = arith.constant 6 : i32
    %c8_i32_76 = arith.constant 8 : i32
    %222 = arith.muli %c6_i32, %c8_i32_76 : i32
    %223 = tpu.assume_multiple %222, 8 : i32
    %c0_77 = arith.constant 0 : index
    %c0_78 = arith.constant 0 : index
    %224 = vector.load %arg3[%c0_77, %c0_78] : memref<64x256xf32, #tpu.memory_space<vmem>>, vector<64x256xf32>
    %cst_79 = arith.constant dense<0.000000e+00> : vector<8x256xf32>
    %225 = tpu.matmul %215, %224, %cst_79 {dimension_numbers = #tpu.dot_dimension_numbers<[1], [0], [0], [1], [0, 0, 1, 1], [], []>} : vector<8x64xf32>, vector<64x256xf32>, vector<8x256xf32> -> vector<8x256xf32>
    %226 = arith.index_cast %223 : i32 to index
    %c0_80 = arith.constant 0 : index
    %227 = vector.load %arg12[%226, %c0_80] : memref<64x256xf32, #tpu.memory_space<vmem>>, vector<8x256xf32>
    %228 = arith.addf %225, %227 : vector<8x256xf32>
    %c7_i32_81 = arith.constant 7 : i32
    %229 = arith.subi %c7_i32_81, %c6_i32 : i32
    %c8_i32_82 = arith.constant 8 : i32
    %230 = arith.muli %229, %c8_i32_82 : i32
    %231 = tpu.assume_multiple %230, 8 : i32
    %232 = arith.index_cast %231 : i32 to index
    %c0_83 = arith.constant 0 : index
    %233 = vector.load %arg13[%232, %c0_83] : memref<64x256xf32, #tpu.memory_space<vmem>>, vector<8x256xf32>
    %234 = arith.addf %228, %233 : vector<8x256xf32>
    %235 = vector.extract_strided_slice %234 {offsets = [0, 0], sizes = [8, 192], strides = [1, 1]} : vector<8x256xf32> to vector<8x192xf32>
    %236 = arith.negf %235 : vector<8x192xf32>
    %237 = math.exp %236 : vector<8x192xf32>
    %cst_84 = arith.constant 1.000000e+00 : f32
    %238 = vector.broadcast %cst_84 : f32 to vector<8x192xf32>
    %239 = arith.addf %238, %237 : vector<8x192xf32>
    %240 = arith.divf %238, %239 : vector<8x192xf32>
    %241 = vector.extract_strided_slice %240 {offsets = [0, 0], sizes = [8, 64], strides = [1, 1]} : vector<8x192xf32> to vector<8x64xf32>
    %242 = vector.extract_strided_slice %240 {offsets = [0, 64], sizes = [8, 64], strides = [1, 1]} : vector<8x192xf32> to vector<8x64xf32>
    %243 = vector.extract_strided_slice %240 {offsets = [0, 128], sizes = [8, 64], strides = [1, 1]} : vector<8x192xf32> to vector<8x64xf32>
    %244 = vector.extract_strided_slice %234 {offsets = [0, 192], sizes = [8, 64], strides = [1, 1]} : vector<8x256xf32> to vector<8x64xf32>
    %245 = math.tanh %244 : vector<8x64xf32>
    %246 = arith.mulf %242, %213 : vector<8x64xf32>
    %247 = arith.mulf %241, %245 : vector<8x64xf32>
    %248 = arith.addf %246, %247 : vector<8x64xf32>
    %249 = math.tanh %248 : vector<8x64xf32>
    %250 = arith.mulf %243, %249 : vector<8x64xf32>
    %251 = vector.extract_strided_slice %250 {offsets = [0, 0], sizes = [8, 32], strides = [1, 1]} : vector<8x64xf32> to vector<8x32xf32>
    %252 = arith.index_cast %223 : i32 to index
    %c0_85 = arith.constant 0 : index
    %253 = vector.load %arg14[%252, %c0_85] : memref<64x64xf32, #tpu.memory_space<vmem>>, vector<8x32xf32>
    tpu.vector_store %arg14[%252, %c0_85], %251 {strides = array<i32>} : memref<64x64xf32, #tpu.memory_space<vmem>>, vector<8x32xf32>,
    %254 = vector.extract_strided_slice %250 {offsets = [0, 32], sizes = [8, 32], strides = [1, 1]} : vector<8x64xf32> to vector<8x32xf32>
    %255 = arith.index_cast %231 : i32 to index
    %c32_86 = arith.constant 32 : index
    %256 = vector.load %arg14[%255, %c32_86] : memref<64x64xf32, #tpu.memory_space<vmem>>, vector<8x32xf32>
    tpu.vector_store %arg14[%255, %c32_86], %254 {strides = array<i32>} : memref<64x64xf32, #tpu.memory_space<vmem>>, vector<8x32xf32>,
    %c7_i32_87 = arith.constant 7 : i32
    %c8_i32_88 = arith.constant 8 : i32
    %257 = arith.muli %c7_i32_87, %c8_i32_88 : i32
    %258 = tpu.assume_multiple %257, 8 : i32
    %c0_89 = arith.constant 0 : index
    %c0_90 = arith.constant 0 : index
    %259 = vector.load %arg3[%c0_89, %c0_90] : memref<64x256xf32, #tpu.memory_space<vmem>>, vector<64x256xf32>
    %cst_91 = arith.constant dense<0.000000e+00> : vector<8x256xf32>
    %260 = tpu.matmul %250, %259, %cst_91 {dimension_numbers = #tpu.dot_dimension_numbers<[1], [0], [0], [1], [0, 0, 1, 1], [], []>} : vector<8x64xf32>, vector<64x256xf32>, vector<8x256xf32> -> vector<8x256xf32>
    %261 = arith.index_cast %258 : i32 to index
    %c0_92 = arith.constant 0 : index
    %262 = vector.load %arg12[%261, %c0_92] : memref<64x256xf32, #tpu.memory_space<vmem>>, vector<8x256xf32>
    %263 = arith.addf %260, %262 : vector<8x256xf32>
    %c7_i32_93 = arith.constant 7 : i32
    %264 = arith.subi %c7_i32_93, %c7_i32_87 : i32
    %c8_i32_94 = arith.constant 8 : i32
    %265 = arith.muli %264, %c8_i32_94 : i32
    %266 = tpu.assume_multiple %265, 8 : i32
    %267 = arith.index_cast %266 : i32 to index
    %c0_95 = arith.constant 0 : index
    %268 = vector.load %arg13[%267, %c0_95] : memref<64x256xf32, #tpu.memory_space<vmem>>, vector<8x256xf32>
    %269 = arith.addf %263, %268 : vector<8x256xf32>
    %270 = vector.extract_strided_slice %269 {offsets = [0, 0], sizes = [8, 192], strides = [1, 1]} : vector<8x256xf32> to vector<8x192xf32>
    %271 = arith.negf %270 : vector<8x192xf32>
    %272 = math.exp %271 : vector<8x192xf32>
    %cst_96 = arith.constant 1.000000e+00 : f32
    %273 = vector.broadcast %cst_96 : f32 to vector<8x192xf32>
    %274 = arith.addf %273, %272 : vector<8x192xf32>
    %275 = arith.divf %273, %274 : vector<8x192xf32>
    %276 = vector.extract_strided_slice %275 {offsets = [0, 0], sizes = [8, 64], strides = [1, 1]} : vector<8x192xf32> to vector<8x64xf32>
    %277 = vector.extract_strided_slice %275 {offsets = [0, 64], sizes = [8, 64], strides = [1, 1]} : vector<8x192xf32> to vector<8x64xf32>
    %278 = vector.extract_strided_slice %275 {offsets = [0, 128], sizes = [8, 64], strides = [1, 1]} : vector<8x192xf32> to vector<8x64xf32>
    %279 = vector.extract_strided_slice %269 {offsets = [0, 192], sizes = [8, 64], strides = [1, 1]} : vector<8x256xf32> to vector<8x64xf32>
    %280 = math.tanh %279 : vector<8x64xf32>
    %281 = arith.mulf %277, %248 : vector<8x64xf32>
    %282 = arith.mulf %276, %280 : vector<8x64xf32>
    %283 = arith.addf %281, %282 : vector<8x64xf32>
    %284 = math.tanh %283 : vector<8x64xf32>
    %285 = arith.mulf %278, %284 : vector<8x64xf32>
    %286 = vector.extract_strided_slice %285 {offsets = [0, 0], sizes = [8, 32], strides = [1, 1]} : vector<8x64xf32> to vector<8x32xf32>
    %287 = arith.index_cast %258 : i32 to index
    %c0_97 = arith.constant 0 : index
    %288 = vector.load %arg14[%287, %c0_97] : memref<64x64xf32, #tpu.memory_space<vmem>>, vector<8x32xf32>
    tpu.vector_store %arg14[%287, %c0_97], %286 {strides = array<i32>} : memref<64x64xf32, #tpu.memory_space<vmem>>, vector<8x32xf32>,
    %289 = vector.extract_strided_slice %285 {offsets = [0, 32], sizes = [8, 32], strides = [1, 1]} : vector<8x64xf32> to vector<8x32xf32>
    %290 = arith.index_cast %266 : i32 to index
    %c32_98 = arith.constant 32 : index
    %291 = vector.load %arg14[%290, %c32_98] : memref<64x64xf32, #tpu.memory_space<vmem>>, vector<8x32xf32>
    tpu.vector_store %arg14[%290, %c32_98], %289 {strides = array<i32>} : memref<64x64xf32, #tpu.memory_space<vmem>>, vector<8x32xf32>,
    %c8_i32_99 = arith.constant 8 : i32
    %c0_100 = arith.constant 0 : index
    %c0_101 = arith.constant 0 : index
    %292 = vector.load %arg14[%c0_100, %c0_101] : memref<64x64xf32, #tpu.memory_space<vmem>>, vector<64x64xf32>
    %c0_102 = arith.constant 0 : index
    %c0_103 = arith.constant 0 : index
    %293 = vector.load %arg5[%c0_102, %c0_103] : memref<64x256xf32, #tpu.memory_space<vmem>>, vector<64x256xf32>
    %cst_104 = arith.constant dense<0.000000e+00> : vector<64x256xf32>
    %294 = tpu.matmul %292, %293, %cst_104 {dimension_numbers = #tpu.dot_dimension_numbers<[1], [0], [0], [1], [0, 0, 1, 1], [], []>} : vector<64x64xf32>, vector<64x256xf32>, vector<64x256xf32> -> vector<64x256xf32>
    %c0_105 = arith.constant 0 : index
    %c0_106 = arith.constant 0 : index
    %295 = vector.load %arg8[%c0_105, %c0_106] : memref<1x256xf32, #tpu.memory_space<vmem>>, vector<1x256xf32>
    %296 = vector.shape_cast %295 : vector<1x256xf32> to vector<1x256xf32>
    %297 = vector.broadcast %296 : vector<1x256xf32> to vector<64x256xf32>
    %298 = arith.addf %294, %297 : vector<64x256xf32>
    %c0_107 = arith.constant 0 : index
    %c0_108 = arith.constant 0 : index
    %299 = vector.load %arg12[%c0_107, %c0_108] : memref<64x256xf32, #tpu.memory_space<vmem>>, vector<64x256xf32>
    tpu.vector_store %arg12[%c0_107, %c0_108], %298 {strides = array<i32>} : memref<64x256xf32, #tpu.memory_space<vmem>>, vector<64x256xf32>,
    %c0_109 = arith.constant 0 : index
    %c0_110 = arith.constant 0 : index
    %300 = vector.load %arg6[%c0_109, %c0_110] : memref<64x256xf32, #tpu.memory_space<vmem>>, vector<64x256xf32>
    %cst_111 = arith.constant dense<0.000000e+00> : vector<64x256xf32>
    %301 = tpu.matmul %292, %300, %cst_111 {dimension_numbers = #tpu.dot_dimension_numbers<[1], [0], [0], [1], [0, 0, 1, 1], [], []>} : vector<64x64xf32>, vector<64x256xf32>, vector<64x256xf32> -> vector<64x256xf32>
    %c0_112 = arith.constant 0 : index
    %c0_113 = arith.constant 0 : index
    %302 = vector.load %arg13[%c0_112, %c0_113] : memref<64x256xf32, #tpu.memory_space<vmem>>, vector<64x256xf32>
    tpu.vector_store %arg13[%c0_112, %c0_113], %301 {strides = array<i32>} : memref<64x256xf32, #tpu.memory_space<vmem>>, vector<64x256xf32>,
    %cst_114 = arith.constant 0.000000e+00 : f32
    %303 = vector.broadcast %cst_114 : f32 to vector<8x64xf32>
    %c0_i32_115 = arith.constant 0 : i32
    %c8_i32_116 = arith.constant 8 : i32
    %304 = arith.muli %c0_i32_115, %c8_i32_116 : i32
    %305 = tpu.assume_multiple %304, 8 : i32
    %c0_117 = arith.constant 0 : index
    %c0_118 = arith.constant 0 : index
    %306 = vector.load %arg7[%c0_117, %c0_118] : memref<64x256xf32, #tpu.memory_space<vmem>>, vector<64x256xf32>
    %cst_119 = arith.constant dense<0.000000e+00> : vector<8x256xf32>
    %307 = tpu.matmul %303, %306, %cst_119 {dimension_numbers = #tpu.dot_dimension_numbers<[1], [0], [0], [1], [0, 0, 1, 1], [], []>} : vector<8x64xf32>, vector<64x256xf32>, vector<8x256xf32> -> vector<8x256xf32>
    %308 = arith.index_cast %305 : i32 to index
    %c0_120 = arith.constant 0 : index
    %309 = vector.load %arg12[%308, %c0_120] : memref<64x256xf32, #tpu.memory_space<vmem>>, vector<8x256xf32>
    %310 = arith.addf %307, %309 : vector<8x256xf32>
    %c7_i32_121 = arith.constant 7 : i32
    %311 = arith.subi %c7_i32_121, %c0_i32_115 : i32
    %c8_i32_122 = arith.constant 8 : i32
    %312 = arith.muli %311, %c8_i32_122 : i32
    %313 = tpu.assume_multiple %312, 8 : i32
    %314 = arith.index_cast %313 : i32 to index
    %c0_123 = arith.constant 0 : index
    %315 = vector.load %arg13[%314, %c0_123] : memref<64x256xf32, #tpu.memory_space<vmem>>, vector<8x256xf32>
    %316 = arith.addf %310, %315 : vector<8x256xf32>
    %317 = vector.extract_strided_slice %316 {offsets = [0, 0], sizes = [8, 192], strides = [1, 1]} : vector<8x256xf32> to vector<8x192xf32>
    %318 = arith.negf %317 : vector<8x192xf32>
    %319 = math.exp %318 : vector<8x192xf32>
    %cst_124 = arith.constant 1.000000e+00 : f32
    %320 = vector.broadcast %cst_124 : f32 to vector<8x192xf32>
    %321 = arith.addf %320, %319 : vector<8x192xf32>
    %322 = arith.divf %320, %321 : vector<8x192xf32>
    %323 = vector.extract_strided_slice %322 {offsets = [0, 0], sizes = [8, 64], strides = [1, 1]} : vector<8x192xf32> to vector<8x64xf32>
    %324 = vector.extract_strided_slice %322 {offsets = [0, 64], sizes = [8, 64], strides = [1, 1]} : vector<8x192xf32> to vector<8x64xf32>
    %325 = vector.extract_strided_slice %322 {offsets = [0, 128], sizes = [8, 64], strides = [1, 1]} : vector<8x192xf32> to vector<8x64xf32>
    %326 = vector.extract_strided_slice %316 {offsets = [0, 192], sizes = [8, 64], strides = [1, 1]} : vector<8x256xf32> to vector<8x64xf32>
    %327 = math.tanh %326 : vector<8x64xf32>
    %328 = arith.mulf %324, %303 : vector<8x64xf32>
    %329 = arith.mulf %323, %327 : vector<8x64xf32>
    %330 = arith.addf %328, %329 : vector<8x64xf32>
    %331 = math.tanh %330 : vector<8x64xf32>
    %332 = arith.mulf %325, %331 : vector<8x64xf32>
    %333 = vector.extract_strided_slice %332 {offsets = [0, 0], sizes = [8, 32], strides = [1, 1]} : vector<8x64xf32> to vector<8x32xf32>
    %334 = arith.index_cast %305 : i32 to index
    %c0_125 = arith.constant 0 : index
    %335 = vector.load %arg15[%334, %c0_125] : memref<64x64xf32, #tpu.memory_space<vmem>>, vector<8x32xf32>
    tpu.vector_store %arg15[%334, %c0_125], %333 {strides = array<i32>} : memref<64x64xf32, #tpu.memory_space<vmem>>, vector<8x32xf32>,
    %336 = vector.extract_strided_slice %332 {offsets = [0, 32], sizes = [8, 32], strides = [1, 1]} : vector<8x64xf32> to vector<8x32xf32>
    %337 = arith.index_cast %313 : i32 to index
    %c32_126 = arith.constant 32 : index
    %338 = vector.load %arg15[%337, %c32_126] : memref<64x64xf32, #tpu.memory_space<vmem>>, vector<8x32xf32>
    tpu.vector_store %arg15[%337, %c32_126], %336 {strides = array<i32>} : memref<64x64xf32, #tpu.memory_space<vmem>>, vector<8x32xf32>,
    %c1_i32_127 = arith.constant 1 : i32
    %c8_i32_128 = arith.constant 8 : i32
    %339 = arith.muli %c1_i32_127, %c8_i32_128 : i32
    %340 = tpu.assume_multiple %339, 8 : i32
    %c0_129 = arith.constant 0 : index
    %c0_130 = arith.constant 0 : index
    %341 = vector.load %arg7[%c0_129, %c0_130] : memref<64x256xf32, #tpu.memory_space<vmem>>, vector<64x256xf32>
    %cst_131 = arith.constant dense<0.000000e+00> : vector<8x256xf32>
    %342 = tpu.matmul %332, %341, %cst_131 {dimension_numbers = #tpu.dot_dimension_numbers<[1], [0], [0], [1], [0, 0, 1, 1], [], []>} : vector<8x64xf32>, vector<64x256xf32>, vector<8x256xf32> -> vector<8x256xf32>
    %343 = arith.index_cast %340 : i32 to index
    %c0_132 = arith.constant 0 : index
    %344 = vector.load %arg12[%343, %c0_132] : memref<64x256xf32, #tpu.memory_space<vmem>>, vector<8x256xf32>
    %345 = arith.addf %342, %344 : vector<8x256xf32>
    %c7_i32_133 = arith.constant 7 : i32
    %346 = arith.subi %c7_i32_133, %c1_i32_127 : i32
    %c8_i32_134 = arith.constant 8 : i32
    %347 = arith.muli %346, %c8_i32_134 : i32
    %348 = tpu.assume_multiple %347, 8 : i32
    %349 = arith.index_cast %348 : i32 to index
    %c0_135 = arith.constant 0 : index
    %350 = vector.load %arg13[%349, %c0_135] : memref<64x256xf32, #tpu.memory_space<vmem>>, vector<8x256xf32>
    %351 = arith.addf %345, %350 : vector<8x256xf32>
    %352 = vector.extract_strided_slice %351 {offsets = [0, 0], sizes = [8, 192], strides = [1, 1]} : vector<8x256xf32> to vector<8x192xf32>
    %353 = arith.negf %352 : vector<8x192xf32>
    %354 = math.exp %353 : vector<8x192xf32>
    %cst_136 = arith.constant 1.000000e+00 : f32
    %355 = vector.broadcast %cst_136 : f32 to vector<8x192xf32>
    %356 = arith.addf %355, %354 : vector<8x192xf32>
    %357 = arith.divf %355, %356 : vector<8x192xf32>
    %358 = vector.extract_strided_slice %357 {offsets = [0, 0], sizes = [8, 64], strides = [1, 1]} : vector<8x192xf32> to vector<8x64xf32>
    %359 = vector.extract_strided_slice %357 {offsets = [0, 64], sizes = [8, 64], strides = [1, 1]} : vector<8x192xf32> to vector<8x64xf32>
    %360 = vector.extract_strided_slice %357 {offsets = [0, 128], sizes = [8, 64], strides = [1, 1]} : vector<8x192xf32> to vector<8x64xf32>
    %361 = vector.extract_strided_slice %351 {offsets = [0, 192], sizes = [8, 64], strides = [1, 1]} : vector<8x256xf32> to vector<8x64xf32>
    %362 = math.tanh %361 : vector<8x64xf32>
    %363 = arith.mulf %359, %330 : vector<8x64xf32>
    %364 = arith.mulf %358, %362 : vector<8x64xf32>
    %365 = arith.addf %363, %364 : vector<8x64xf32>
    %366 = math.tanh %365 : vector<8x64xf32>
    %367 = arith.mulf %360, %366 : vector<8x64xf32>
    %368 = vector.extract_strided_slice %367 {offsets = [0, 0], sizes = [8, 32], strides = [1, 1]} : vector<8x64xf32> to vector<8x32xf32>
    %369 = arith.index_cast %340 : i32 to index
    %c0_137 = arith.constant 0 : index
    %370 = vector.load %arg15[%369, %c0_137] : memref<64x64xf32, #tpu.memory_space<vmem>>, vector<8x32xf32>
    tpu.vector_store %arg15[%369, %c0_137], %368 {strides = array<i32>} : memref<64x64xf32, #tpu.memory_space<vmem>>, vector<8x32xf32>,
    %371 = vector.extract_strided_slice %367 {offsets = [0, 32], sizes = [8, 32], strides = [1, 1]} : vector<8x64xf32> to vector<8x32xf32>
    %372 = arith.index_cast %348 : i32 to index
    %c32_138 = arith.constant 32 : index
    %373 = vector.load %arg15[%372, %c32_138] : memref<64x64xf32, #tpu.memory_space<vmem>>, vector<8x32xf32>
    tpu.vector_store %arg15[%372, %c32_138], %371 {strides = array<i32>} : memref<64x64xf32, #tpu.memory_space<vmem>>, vector<8x32xf32>,
    %c2_i32_139 = arith.constant 2 : i32
    %c8_i32_140 = arith.constant 8 : i32
    %374 = arith.muli %c2_i32_139, %c8_i32_140 : i32
    %375 = tpu.assume_multiple %374, 8 : i32
    %c0_141 = arith.constant 0 : index
    %c0_142 = arith.constant 0 : index
    %376 = vector.load %arg7[%c0_141, %c0_142] : memref<64x256xf32, #tpu.memory_space<vmem>>, vector<64x256xf32>
    %cst_143 = arith.constant dense<0.000000e+00> : vector<8x256xf32>
    %377 = tpu.matmul %367, %376, %cst_143 {dimension_numbers = #tpu.dot_dimension_numbers<[1], [0], [0], [1], [0, 0, 1, 1], [], []>} : vector<8x64xf32>, vector<64x256xf32>, vector<8x256xf32> -> vector<8x256xf32>
    %378 = arith.index_cast %375 : i32 to index
    %c0_144 = arith.constant 0 : index
    %379 = vector.load %arg12[%378, %c0_144] : memref<64x256xf32, #tpu.memory_space<vmem>>, vector<8x256xf32>
    %380 = arith.addf %377, %379 : vector<8x256xf32>
    %c7_i32_145 = arith.constant 7 : i32
    %381 = arith.subi %c7_i32_145, %c2_i32_139 : i32
    %c8_i32_146 = arith.constant 8 : i32
    %382 = arith.muli %381, %c8_i32_146 : i32
    %383 = tpu.assume_multiple %382, 8 : i32
    %384 = arith.index_cast %383 : i32 to index
    %c0_147 = arith.constant 0 : index
    %385 = vector.load %arg13[%384, %c0_147] : memref<64x256xf32, #tpu.memory_space<vmem>>, vector<8x256xf32>
    %386 = arith.addf %380, %385 : vector<8x256xf32>
    %387 = vector.extract_strided_slice %386 {offsets = [0, 0], sizes = [8, 192], strides = [1, 1]} : vector<8x256xf32> to vector<8x192xf32>
    %388 = arith.negf %387 : vector<8x192xf32>
    %389 = math.exp %388 : vector<8x192xf32>
    %cst_148 = arith.constant 1.000000e+00 : f32
    %390 = vector.broadcast %cst_148 : f32 to vector<8x192xf32>
    %391 = arith.addf %390, %389 : vector<8x192xf32>
    %392 = arith.divf %390, %391 : vector<8x192xf32>
    %393 = vector.extract_strided_slice %392 {offsets = [0, 0], sizes = [8, 64], strides = [1, 1]} : vector<8x192xf32> to vector<8x64xf32>
    %394 = vector.extract_strided_slice %392 {offsets = [0, 64], sizes = [8, 64], strides = [1, 1]} : vector<8x192xf32> to vector<8x64xf32>
    %395 = vector.extract_strided_slice %392 {offsets = [0, 128], sizes = [8, 64], strides = [1, 1]} : vector<8x192xf32> to vector<8x64xf32>
    %396 = vector.extract_strided_slice %386 {offsets = [0, 192], sizes = [8, 64], strides = [1, 1]} : vector<8x256xf32> to vector<8x64xf32>
    %397 = math.tanh %396 : vector<8x64xf32>
    %398 = arith.mulf %394, %365 : vector<8x64xf32>
    %399 = arith.mulf %393, %397 : vector<8x64xf32>
    %400 = arith.addf %398, %399 : vector<8x64xf32>
    %401 = math.tanh %400 : vector<8x64xf32>
    %402 = arith.mulf %395, %401 : vector<8x64xf32>
    %403 = vector.extract_strided_slice %402 {offsets = [0, 0], sizes = [8, 32], strides = [1, 1]} : vector<8x64xf32> to vector<8x32xf32>
    %404 = arith.index_cast %375 : i32 to index
    %c0_149 = arith.constant 0 : index
    %405 = vector.load %arg15[%404, %c0_149] : memref<64x64xf32, #tpu.memory_space<vmem>>, vector<8x32xf32>
    tpu.vector_store %arg15[%404, %c0_149], %403 {strides = array<i32>} : memref<64x64xf32, #tpu.memory_space<vmem>>, vector<8x32xf32>,
    %406 = vector.extract_strided_slice %402 {offsets = [0, 32], sizes = [8, 32], strides = [1, 1]} : vector<8x64xf32> to vector<8x32xf32>
    %407 = arith.index_cast %383 : i32 to index
    %c32_150 = arith.constant 32 : index
    %408 = vector.load %arg15[%407, %c32_150] : memref<64x64xf32, #tpu.memory_space<vmem>>, vector<8x32xf32>
    tpu.vector_store %arg15[%407, %c32_150], %406 {strides = array<i32>} : memref<64x64xf32, #tpu.memory_space<vmem>>, vector<8x32xf32>,
    %c3_i32_151 = arith.constant 3 : i32
    %c8_i32_152 = arith.constant 8 : i32
    %409 = arith.muli %c3_i32_151, %c8_i32_152 : i32
    %410 = tpu.assume_multiple %409, 8 : i32
    %c0_153 = arith.constant 0 : index
    %c0_154 = arith.constant 0 : index
    %411 = vector.load %arg7[%c0_153, %c0_154] : memref<64x256xf32, #tpu.memory_space<vmem>>, vector<64x256xf32>
    %cst_155 = arith.constant dense<0.000000e+00> : vector<8x256xf32>
    %412 = tpu.matmul %402, %411, %cst_155 {dimension_numbers = #tpu.dot_dimension_numbers<[1], [0], [0], [1], [0, 0, 1, 1], [], []>} : vector<8x64xf32>, vector<64x256xf32>, vector<8x256xf32> -> vector<8x256xf32>
    %413 = arith.index_cast %410 : i32 to index
    %c0_156 = arith.constant 0 : index
    %414 = vector.load %arg12[%413, %c0_156] : memref<64x256xf32, #tpu.memory_space<vmem>>, vector<8x256xf32>
    %415 = arith.addf %412, %414 : vector<8x256xf32>
    %c7_i32_157 = arith.constant 7 : i32
    %416 = arith.subi %c7_i32_157, %c3_i32_151 : i32
    %c8_i32_158 = arith.constant 8 : i32
    %417 = arith.muli %416, %c8_i32_158 : i32
    %418 = tpu.assume_multiple %417, 8 : i32
    %419 = arith.index_cast %418 : i32 to index
    %c0_159 = arith.constant 0 : index
    %420 = vector.load %arg13[%419, %c0_159] : memref<64x256xf32, #tpu.memory_space<vmem>>, vector<8x256xf32>
    %421 = arith.addf %415, %420 : vector<8x256xf32>
    %422 = vector.extract_strided_slice %421 {offsets = [0, 0], sizes = [8, 192], strides = [1, 1]} : vector<8x256xf32> to vector<8x192xf32>
    %423 = arith.negf %422 : vector<8x192xf32>
    %424 = math.exp %423 : vector<8x192xf32>
    %cst_160 = arith.constant 1.000000e+00 : f32
    %425 = vector.broadcast %cst_160 : f32 to vector<8x192xf32>
    %426 = arith.addf %425, %424 : vector<8x192xf32>
    %427 = arith.divf %425, %426 : vector<8x192xf32>
    %428 = vector.extract_strided_slice %427 {offsets = [0, 0], sizes = [8, 64], strides = [1, 1]} : vector<8x192xf32> to vector<8x64xf32>
    %429 = vector.extract_strided_slice %427 {offsets = [0, 64], sizes = [8, 64], strides = [1, 1]} : vector<8x192xf32> to vector<8x64xf32>
    %430 = vector.extract_strided_slice %427 {offsets = [0, 128], sizes = [8, 64], strides = [1, 1]} : vector<8x192xf32> to vector<8x64xf32>
    %431 = vector.extract_strided_slice %421 {offsets = [0, 192], sizes = [8, 64], strides = [1, 1]} : vector<8x256xf32> to vector<8x64xf32>
    %432 = math.tanh %431 : vector<8x64xf32>
    %433 = arith.mulf %429, %400 : vector<8x64xf32>
    %434 = arith.mulf %428, %432 : vector<8x64xf32>
    %435 = arith.addf %433, %434 : vector<8x64xf32>
    %436 = math.tanh %435 : vector<8x64xf32>
    %437 = arith.mulf %430, %436 : vector<8x64xf32>
    %438 = vector.extract_strided_slice %437 {offsets = [0, 0], sizes = [8, 32], strides = [1, 1]} : vector<8x64xf32> to vector<8x32xf32>
    %439 = arith.index_cast %410 : i32 to index
    %c0_161 = arith.constant 0 : index
    %440 = vector.load %arg15[%439, %c0_161] : memref<64x64xf32, #tpu.memory_space<vmem>>, vector<8x32xf32>
    tpu.vector_store %arg15[%439, %c0_161], %438 {strides = array<i32>} : memref<64x64xf32, #tpu.memory_space<vmem>>, vector<8x32xf32>,
    %441 = vector.extract_strided_slice %437 {offsets = [0, 32], sizes = [8, 32], strides = [1, 1]} : vector<8x64xf32> to vector<8x32xf32>
    %442 = arith.index_cast %418 : i32 to index
    %c32_162 = arith.constant 32 : index
    %443 = vector.load %arg15[%442, %c32_162] : memref<64x64xf32, #tpu.memory_space<vmem>>, vector<8x32xf32>
    tpu.vector_store %arg15[%442, %c32_162], %441 {strides = array<i32>} : memref<64x64xf32, #tpu.memory_space<vmem>>, vector<8x32xf32>,
    %c4_i32_163 = arith.constant 4 : i32
    %c8_i32_164 = arith.constant 8 : i32
    %444 = arith.muli %c4_i32_163, %c8_i32_164 : i32
    %445 = tpu.assume_multiple %444, 8 : i32
    %c0_165 = arith.constant 0 : index
    %c0_166 = arith.constant 0 : index
    %446 = vector.load %arg7[%c0_165, %c0_166] : memref<64x256xf32, #tpu.memory_space<vmem>>, vector<64x256xf32>
    %cst_167 = arith.constant dense<0.000000e+00> : vector<8x256xf32>
    %447 = tpu.matmul %437, %446, %cst_167 {dimension_numbers = #tpu.dot_dimension_numbers<[1], [0], [0], [1], [0, 0, 1, 1], [], []>} : vector<8x64xf32>, vector<64x256xf32>, vector<8x256xf32> -> vector<8x256xf32>
    %448 = arith.index_cast %445 : i32 to index
    %c0_168 = arith.constant 0 : index
    %449 = vector.load %arg12[%448, %c0_168] : memref<64x256xf32, #tpu.memory_space<vmem>>, vector<8x256xf32>
    %450 = arith.addf %447, %449 : vector<8x256xf32>
    %c7_i32_169 = arith.constant 7 : i32
    %451 = arith.subi %c7_i32_169, %c4_i32_163 : i32
    %c8_i32_170 = arith.constant 8 : i32
    %452 = arith.muli %451, %c8_i32_170 : i32
    %453 = tpu.assume_multiple %452, 8 : i32
    %454 = arith.index_cast %453 : i32 to index
    %c0_171 = arith.constant 0 : index
    %455 = vector.load %arg13[%454, %c0_171] : memref<64x256xf32, #tpu.memory_space<vmem>>, vector<8x256xf32>
    %456 = arith.addf %450, %455 : vector<8x256xf32>
    %457 = vector.extract_strided_slice %456 {offsets = [0, 0], sizes = [8, 192], strides = [1, 1]} : vector<8x256xf32> to vector<8x192xf32>
    %458 = arith.negf %457 : vector<8x192xf32>
    %459 = math.exp %458 : vector<8x192xf32>
    %cst_172 = arith.constant 1.000000e+00 : f32
    %460 = vector.broadcast %cst_172 : f32 to vector<8x192xf32>
    %461 = arith.addf %460, %459 : vector<8x192xf32>
    %462 = arith.divf %460, %461 : vector<8x192xf32>
    %463 = vector.extract_strided_slice %462 {offsets = [0, 0], sizes = [8, 64], strides = [1, 1]} : vector<8x192xf32> to vector<8x64xf32>
    %464 = vector.extract_strided_slice %462 {offsets = [0, 64], sizes = [8, 64], strides = [1, 1]} : vector<8x192xf32> to vector<8x64xf32>
    %465 = vector.extract_strided_slice %462 {offsets = [0, 128], sizes = [8, 64], strides = [1, 1]} : vector<8x192xf32> to vector<8x64xf32>
    %466 = vector.extract_strided_slice %456 {offsets = [0, 192], sizes = [8, 64], strides = [1, 1]} : vector<8x256xf32> to vector<8x64xf32>
    %467 = math.tanh %466 : vector<8x64xf32>
    %468 = arith.mulf %464, %435 : vector<8x64xf32>
    %469 = arith.mulf %463, %467 : vector<8x64xf32>
    %470 = arith.addf %468, %469 : vector<8x64xf32>
    %471 = math.tanh %470 : vector<8x64xf32>
    %472 = arith.mulf %465, %471 : vector<8x64xf32>
    %473 = vector.extract_strided_slice %472 {offsets = [0, 0], sizes = [8, 32], strides = [1, 1]} : vector<8x64xf32> to vector<8x32xf32>
    %474 = arith.index_cast %445 : i32 to index
    %c0_173 = arith.constant 0 : index
    %475 = vector.load %arg15[%474, %c0_173] : memref<64x64xf32, #tpu.memory_space<vmem>>, vector<8x32xf32>
    tpu.vector_store %arg15[%474, %c0_173], %473 {strides = array<i32>} : memref<64x64xf32, #tpu.memory_space<vmem>>, vector<8x32xf32>,
    %476 = vector.extract_strided_slice %472 {offsets = [0, 32], sizes = [8, 32], strides = [1, 1]} : vector<8x64xf32> to vector<8x32xf32>
    %477 = arith.index_cast %453 : i32 to index
    %c32_174 = arith.constant 32 : index
    %478 = vector.load %arg15[%477, %c32_174] : memref<64x64xf32, #tpu.memory_space<vmem>>, vector<8x32xf32>
    tpu.vector_store %arg15[%477, %c32_174], %476 {strides = array<i32>} : memref<64x64xf32, #tpu.memory_space<vmem>>, vector<8x32xf32>,
    %c5_i32_175 = arith.constant 5 : i32
    %c8_i32_176 = arith.constant 8 : i32
    %479 = arith.muli %c5_i32_175, %c8_i32_176 : i32
    %480 = tpu.assume_multiple %479, 8 : i32
    %c0_177 = arith.constant 0 : index
    %c0_178 = arith.constant 0 : index
    %481 = vector.load %arg7[%c0_177, %c0_178] : memref<64x256xf32, #tpu.memory_space<vmem>>, vector<64x256xf32>
    %cst_179 = arith.constant dense<0.000000e+00> : vector<8x256xf32>
    %482 = tpu.matmul %472, %481, %cst_179 {dimension_numbers = #tpu.dot_dimension_numbers<[1], [0], [0], [1], [0, 0, 1, 1], [], []>} : vector<8x64xf32>, vector<64x256xf32>, vector<8x256xf32> -> vector<8x256xf32>
    %483 = arith.index_cast %480 : i32 to index
    %c0_180 = arith.constant 0 : index
    %484 = vector.load %arg12[%483, %c0_180] : memref<64x256xf32, #tpu.memory_space<vmem>>, vector<8x256xf32>
    %485 = arith.addf %482, %484 : vector<8x256xf32>
    %c7_i32_181 = arith.constant 7 : i32
    %486 = arith.subi %c7_i32_181, %c5_i32_175 : i32
    %c8_i32_182 = arith.constant 8 : i32
    %487 = arith.muli %486, %c8_i32_182 : i32
    %488 = tpu.assume_multiple %487, 8 : i32
    %489 = arith.index_cast %488 : i32 to index
    %c0_183 = arith.constant 0 : index
    %490 = vector.load %arg13[%489, %c0_183] : memref<64x256xf32, #tpu.memory_space<vmem>>, vector<8x256xf32>
    %491 = arith.addf %485, %490 : vector<8x256xf32>
    %492 = vector.extract_strided_slice %491 {offsets = [0, 0], sizes = [8, 192], strides = [1, 1]} : vector<8x256xf32> to vector<8x192xf32>
    %493 = arith.negf %492 : vector<8x192xf32>
    %494 = math.exp %493 : vector<8x192xf32>
    %cst_184 = arith.constant 1.000000e+00 : f32
    %495 = vector.broadcast %cst_184 : f32 to vector<8x192xf32>
    %496 = arith.addf %495, %494 : vector<8x192xf32>
    %497 = arith.divf %495, %496 : vector<8x192xf32>
    %498 = vector.extract_strided_slice %497 {offsets = [0, 0], sizes = [8, 64], strides = [1, 1]} : vector<8x192xf32> to vector<8x64xf32>
    %499 = vector.extract_strided_slice %497 {offsets = [0, 64], sizes = [8, 64], strides = [1, 1]} : vector<8x192xf32> to vector<8x64xf32>
    %500 = vector.extract_strided_slice %497 {offsets = [0, 128], sizes = [8, 64], strides = [1, 1]} : vector<8x192xf32> to vector<8x64xf32>
    %501 = vector.extract_strided_slice %491 {offsets = [0, 192], sizes = [8, 64], strides = [1, 1]} : vector<8x256xf32> to vector<8x64xf32>
    %502 = math.tanh %501 : vector<8x64xf32>
    %503 = arith.mulf %499, %470 : vector<8x64xf32>
    %504 = arith.mulf %498, %502 : vector<8x64xf32>
    %505 = arith.addf %503, %504 : vector<8x64xf32>
    %506 = math.tanh %505 : vector<8x64xf32>
    %507 = arith.mulf %500, %506 : vector<8x64xf32>
    %508 = vector.extract_strided_slice %507 {offsets = [0, 0], sizes = [8, 32], strides = [1, 1]} : vector<8x64xf32> to vector<8x32xf32>
    %509 = arith.index_cast %480 : i32 to index
    %c0_185 = arith.constant 0 : index
    %510 = vector.load %arg15[%509, %c0_185] : memref<64x64xf32, #tpu.memory_space<vmem>>, vector<8x32xf32>
    tpu.vector_store %arg15[%509, %c0_185], %508 {strides = array<i32>} : memref<64x64xf32, #tpu.memory_space<vmem>>, vector<8x32xf32>,
    %511 = vector.extract_strided_slice %507 {offsets = [0, 32], sizes = [8, 32], strides = [1, 1]} : vector<8x64xf32> to vector<8x32xf32>
    %512 = arith.index_cast %488 : i32 to index
    %c32_186 = arith.constant 32 : index
    %513 = vector.load %arg15[%512, %c32_186] : memref<64x64xf32, #tpu.memory_space<vmem>>, vector<8x32xf32>
    tpu.vector_store %arg15[%512, %c32_186], %511 {strides = array<i32>} : memref<64x64xf32, #tpu.memory_space<vmem>>, vector<8x32xf32>,
    %c6_i32_187 = arith.constant 6 : i32
    %c8_i32_188 = arith.constant 8 : i32
    %514 = arith.muli %c6_i32_187, %c8_i32_188 : i32
    %515 = tpu.assume_multiple %514, 8 : i32
    %c0_189 = arith.constant 0 : index
    %c0_190 = arith.constant 0 : index
    %516 = vector.load %arg7[%c0_189, %c0_190] : memref<64x256xf32, #tpu.memory_space<vmem>>, vector<64x256xf32>
    %cst_191 = arith.constant dense<0.000000e+00> : vector<8x256xf32>
    %517 = tpu.matmul %507, %516, %cst_191 {dimension_numbers = #tpu.dot_dimension_numbers<[1], [0], [0], [1], [0, 0, 1, 1], [], []>} : vector<8x64xf32>, vector<64x256xf32>, vector<8x256xf32> -> vector<8x256xf32>
    %518 = arith.index_cast %515 : i32 to index
    %c0_192 = arith.constant 0 : index
    %519 = vector.load %arg12[%518, %c0_192] : memref<64x256xf32, #tpu.memory_space<vmem>>, vector<8x256xf32>
    %520 = arith.addf %517, %519 : vector<8x256xf32>
    %c7_i32_193 = arith.constant 7 : i32
    %521 = arith.subi %c7_i32_193, %c6_i32_187 : i32
    %c8_i32_194 = arith.constant 8 : i32
    %522 = arith.muli %521, %c8_i32_194 : i32
    %523 = tpu.assume_multiple %522, 8 : i32
    %524 = arith.index_cast %523 : i32 to index
    %c0_195 = arith.constant 0 : index
    %525 = vector.load %arg13[%524, %c0_195] : memref<64x256xf32, #tpu.memory_space<vmem>>, vector<8x256xf32>
    %526 = arith.addf %520, %525 : vector<8x256xf32>
    %527 = vector.extract_strided_slice %526 {offsets = [0, 0], sizes = [8, 192], strides = [1, 1]} : vector<8x256xf32> to vector<8x192xf32>
    %528 = arith.negf %527 : vector<8x192xf32>
    %529 = math.exp %528 : vector<8x192xf32>
    %cst_196 = arith.constant 1.000000e+00 : f32
    %530 = vector.broadcast %cst_196 : f32 to vector<8x192xf32>
    %531 = arith.addf %530, %529 : vector<8x192xf32>
    %532 = arith.divf %530, %531 : vector<8x192xf32>
    %533 = vector.extract_strided_slice %532 {offsets = [0, 0], sizes = [8, 64], strides = [1, 1]} : vector<8x192xf32> to vector<8x64xf32>
    %534 = vector.extract_strided_slice %532 {offsets = [0, 64], sizes = [8, 64], strides = [1, 1]} : vector<8x192xf32> to vector<8x64xf32>
    %535 = vector.extract_strided_slice %532 {offsets = [0, 128], sizes = [8, 64], strides = [1, 1]} : vector<8x192xf32> to vector<8x64xf32>
    %536 = vector.extract_strided_slice %526 {offsets = [0, 192], sizes = [8, 64], strides = [1, 1]} : vector<8x256xf32> to vector<8x64xf32>
    %537 = math.tanh %536 : vector<8x64xf32>
    %538 = arith.mulf %534, %505 : vector<8x64xf32>
    %539 = arith.mulf %533, %537 : vector<8x64xf32>
    %540 = arith.addf %538, %539 : vector<8x64xf32>
    %541 = math.tanh %540 : vector<8x64xf32>
    %542 = arith.mulf %535, %541 : vector<8x64xf32>
    %543 = vector.extract_strided_slice %542 {offsets = [0, 0], sizes = [8, 32], strides = [1, 1]} : vector<8x64xf32> to vector<8x32xf32>
    %544 = arith.index_cast %515 : i32 to index
    %c0_197 = arith.constant 0 : index
    %545 = vector.load %arg15[%544, %c0_197] : memref<64x64xf32, #tpu.memory_space<vmem>>, vector<8x32xf32>
    tpu.vector_store %arg15[%544, %c0_197], %543 {strides = array<i32>} : memref<64x64xf32, #tpu.memory_space<vmem>>, vector<8x32xf32>,
    %546 = vector.extract_strided_slice %542 {offsets = [0, 32], sizes = [8, 32], strides = [1, 1]} : vector<8x64xf32> to vector<8x32xf32>
    %547 = arith.index_cast %523 : i32 to index
    %c32_198 = arith.constant 32 : index
    %548 = vector.load %arg15[%547, %c32_198] : memref<64x64xf32, #tpu.memory_space<vmem>>, vector<8x32xf32>
    tpu.vector_store %arg15[%547, %c32_198], %546 {strides = array<i32>} : memref<64x64xf32, #tpu.memory_space<vmem>>, vector<8x32xf32>,
    %c7_i32_199 = arith.constant 7 : i32
    %c8_i32_200 = arith.constant 8 : i32
    %549 = arith.muli %c7_i32_199, %c8_i32_200 : i32
    %550 = tpu.assume_multiple %549, 8 : i32
    %c0_201 = arith.constant 0 : index
    %c0_202 = arith.constant 0 : index
    %551 = vector.load %arg7[%c0_201, %c0_202] : memref<64x256xf32, #tpu.memory_space<vmem>>, vector<64x256xf32>
    %cst_203 = arith.constant dense<0.000000e+00> : vector<8x256xf32>
    %552 = tpu.matmul %542, %551, %cst_203 {dimension_numbers = #tpu.dot_dimension_numbers<[1], [0], [0], [1], [0, 0, 1, 1], [], []>} : vector<8x64xf32>, vector<64x256xf32>, vector<8x256xf32> -> vector<8x256xf32>
    %553 = arith.index_cast %550 : i32 to index
    %c0_204 = arith.constant 0 : index
    %554 = vector.load %arg12[%553, %c0_204] : memref<64x256xf32, #tpu.memory_space<vmem>>, vector<8x256xf32>
    %555 = arith.addf %552, %554 : vector<8x256xf32>
    %c7_i32_205 = arith.constant 7 : i32
    %556 = arith.subi %c7_i32_205, %c7_i32_199 : i32
    %c8_i32_206 = arith.constant 8 : i32
    %557 = arith.muli %556, %c8_i32_206 : i32
    %558 = tpu.assume_multiple %557, 8 : i32
    %559 = arith.index_cast %558 : i32 to index
    %c0_207 = arith.constant 0 : index
    %560 = vector.load %arg13[%559, %c0_207] : memref<64x256xf32, #tpu.memory_space<vmem>>, vector<8x256xf32>
    %561 = arith.addf %555, %560 : vector<8x256xf32>
    %562 = vector.extract_strided_slice %561 {offsets = [0, 0], sizes = [8, 192], strides = [1, 1]} : vector<8x256xf32> to vector<8x192xf32>
    %563 = arith.negf %562 : vector<8x192xf32>
    %564 = math.exp %563 : vector<8x192xf32>
    %cst_208 = arith.constant 1.000000e+00 : f32
    %565 = vector.broadcast %cst_208 : f32 to vector<8x192xf32>
    %566 = arith.addf %565, %564 : vector<8x192xf32>
    %567 = arith.divf %565, %566 : vector<8x192xf32>
    %568 = vector.extract_strided_slice %567 {offsets = [0, 0], sizes = [8, 64], strides = [1, 1]} : vector<8x192xf32> to vector<8x64xf32>
    %569 = vector.extract_strided_slice %567 {offsets = [0, 64], sizes = [8, 64], strides = [1, 1]} : vector<8x192xf32> to vector<8x64xf32>
    %570 = vector.extract_strided_slice %567 {offsets = [0, 128], sizes = [8, 64], strides = [1, 1]} : vector<8x192xf32> to vector<8x64xf32>
    %571 = vector.extract_strided_slice %561 {offsets = [0, 192], sizes = [8, 64], strides = [1, 1]} : vector<8x256xf32> to vector<8x64xf32>
    %572 = math.tanh %571 : vector<8x64xf32>
    %573 = arith.mulf %569, %540 : vector<8x64xf32>
    %574 = arith.mulf %568, %572 : vector<8x64xf32>
    %575 = arith.addf %573, %574 : vector<8x64xf32>
    %576 = math.tanh %575 : vector<8x64xf32>
    %577 = arith.mulf %570, %576 : vector<8x64xf32>
    %578 = vector.extract_strided_slice %577 {offsets = [0, 0], sizes = [8, 32], strides = [1, 1]} : vector<8x64xf32> to vector<8x32xf32>
    %579 = arith.index_cast %550 : i32 to index
    %c0_209 = arith.constant 0 : index
    %580 = vector.load %arg15[%579, %c0_209] : memref<64x64xf32, #tpu.memory_space<vmem>>, vector<8x32xf32>
    tpu.vector_store %arg15[%579, %c0_209], %578 {strides = array<i32>} : memref<64x64xf32, #tpu.memory_space<vmem>>, vector<8x32xf32>,
    %581 = vector.extract_strided_slice %577 {offsets = [0, 32], sizes = [8, 32], strides = [1, 1]} : vector<8x64xf32> to vector<8x32xf32>
    %582 = arith.index_cast %558 : i32 to index
    %c32_210 = arith.constant 32 : index
    %583 = vector.load %arg15[%582, %c32_210] : memref<64x64xf32, #tpu.memory_space<vmem>>, vector<8x32xf32>
    tpu.vector_store %arg15[%582, %c32_210], %581 {strides = array<i32>} : memref<64x64xf32, #tpu.memory_space<vmem>>, vector<8x32xf32>,
    %c8_i32_211 = arith.constant 8 : i32
    %c0_212 = arith.constant 0 : index
    %c0_213 = arith.constant 0 : index
    %584 = vector.load %arg15[%c0_212, %c0_213] : memref<64x64xf32, #tpu.memory_space<vmem>>, vector<64x64xf32>
    %c0_214 = arith.constant 0 : index
    %c0_215 = arith.constant 0 : index
    %585 = vector.load %arg9[%c0_214, %c0_215] : memref<64x128xf32, #tpu.memory_space<vmem>>, vector<64x128xf32>
    %cst_216 = arith.constant dense<0.000000e+00> : vector<64x128xf32>
    %586 = tpu.matmul %584, %585, %cst_216 {dimension_numbers = #tpu.dot_dimension_numbers<[1], [0], [0], [1], [0, 0, 1, 1], [], []>} : vector<64x64xf32>, vector<64x128xf32>, vector<64x128xf32> -> vector<64x128xf32>
    %c0_217 = arith.constant 0 : index
    %c0_218 = arith.constant 0 : index
    %587 = vector.load %arg10[%c0_217, %c0_218] : memref<1x128xf32, #tpu.memory_space<vmem>>, vector<1x128xf32>
    %588 = vector.shape_cast %587 : vector<1x128xf32> to vector<1x128xf32>
    %589 = vector.broadcast %588 : vector<1x128xf32> to vector<64x128xf32>
    %590 = arith.addf %586, %589 : vector<64x128xf32>
    %c0_219 = arith.constant 0 : index
    %c0_220 = arith.constant 0 : index
    %591 = vector.load %arg11[%c0_219, %c0_220] : memref<64x128xf32, #tpu.memory_space<vmem>>, vector<64x128xf32>
    tpu.vector_store %arg11[%c0_219, %c0_220], %590 {strides = array<i32>} : memref<64x128xf32, #tpu.memory_space<vmem>>, vector<64x128xf32>,
    return
  }
}

</mosaic_0001>

<llo_original>
// kernel: ner_lstm_forward.1
$region0: #{ner_lstm_forward.1}
  #allocation0 [shape = 'u32[]', space=smem, size = 0x4, offset = 0x4, fixed_abs, tag = 'smem constant byte address 0x4 - core index']
  #allocation1 [shape = 'u32[144,128]{1,0:T(1,128)}', space=vmem, size = 0x12000, scoped, tag = 'internal scratch']
  #allocation2 [shape = 'f32[64,256]{1,0:T(8,128)}', space=vmem, size = 0x10000, scoped, tag = 'scratch operand']
  #allocation3 [shape = 'f32[64,256]{1,0:T(8,128)}', space=vmem, size = 0x10000, scoped, tag = 'scratch operand']
  #allocation4 [shape = 'f32[64,64]{1,0:T(8,128)}', space=vmem, size = 0x8000, scoped, tag = 'scratch operand']
  #allocation5 [shape = 'f32[64,64]{1,0:T(8,128)}', space=vmem, size = 0x8000, scoped, tag = 'scratch operand']
  %s0 = inlined_call_operand.vmem [shape: f32[64,32], index: 0, kind: input, shape index: {}]
  %s1 = inlined_call_operand.vmem [shape: f32[32,256], index: 1, kind: input, shape index: {}]
  %s2 = inlined_call_operand.vmem [shape: f32[32,256], index: 2, kind: input, shape index: {}]
  %s3 = inlined_call_operand.vmem [shape: f32[64,256], index: 3, kind: input, shape index: {}]
  %s4 = inlined_call_operand.vmem [shape: f32[1,256], index: 4, kind: input, shape index: {}]
  %s5 = inlined_call_operand.vmem [shape: f32[64,256], index: 5, kind: input, shape index: {}]
  %s6 = inlined_call_operand.vmem [shape: f32[64,256], index: 6, kind: input, shape index: {}]
  %s7 = inlined_call_operand.vmem [shape: f32[64,256], index: 7, kind: input, shape index: {}]
  %s8 = inlined_call_operand.vmem [shape: f32[1,256], index: 8, kind: input, shape index: {}]
  %s9 = inlined_call_operand.vmem [shape: f32[64,128], index: 9, kind: input, shape index: {}]
  %s10 = inlined_call_operand.vmem [shape: f32[1,128], index: 10, kind: input, shape index: {}]
  %s11 = inlined_call_operand.vmem [shape: f32[64,128], index: 11, kind: output, shape index: {}]
  %s12 = sld [smem:[#allocation0]]
  $region54: #{ner_lstm_forward.1} parent=0
    _
  %s14 = ssub.s32 1, %s12
  %s15 = scalar_select 0, %s14, %s12
  // Predicated region
  $region2: #{ner_lstm_forward.1} parent=0 // pred_check
    _
  $region3: #{ner_lstm_forward.1} parent=0 // pred_check_branch
    %17 = sbr.rel (0) target = $region5
  $region4: #{ner_lstm_forward.1} parent=0 // pred_region
    _
  $region5: #{ner_lstm_forward.1} parent=0 // pred_fallthru
    _
  // Predicated region
  $region6: #{ner_lstm_forward.1} parent=0 // pred_check
    _
  $region7: #{ner_lstm_forward.1} parent=0 // pred_check_branch
    %19 = sbr.rel (0) target = $region9
  $region8: #{ner_lstm_forward.1} parent=0 // pred_region
    _
  $region9: #{ner_lstm_forward.1} parent=0 // pred_fallthru
    _
  // Predicated region
  $region10: #{ner_lstm_forward.1} parent=0 // pred_check
    _
  $region11: #{ner_lstm_forward.1} parent=0 // pred_check_branch
    %21 = sbr.rel (0) target = $region13
  $region12: #{ner_lstm_forward.1} parent=0 // pred_region
    _
  $region13: #{ner_lstm_forward.1} parent=0 // pred_fallthru
    _
  // Predicated region
  $region14: #{ner_lstm_forward.1} parent=0 // pred_check
    _
  $region15: #{ner_lstm_forward.1} parent=0 // pred_check_branch
    %23 = sbr.rel (0) target = $region17
  $region16: #{ner_lstm_forward.1} parent=0 // pred_region
    _
  $region17: #{ner_lstm_forward.1} parent=0 // pred_fallthru
    _
  // Predicated region
  $region18: #{ner_lstm_forward.1} parent=0 // pred_check
    _
  $region19: #{ner_lstm_forward.1} parent=0 // pred_check_branch
    %25 = sbr.rel (0) target = $region21
  $region20: #{ner_lstm_forward.1} parent=0 // pred_region
    _
  $region21: #{ner_lstm_forward.1} parent=0 // pred_fallthru
    _
  // Predicated region
  $region22: #{ner_lstm_forward.1} parent=0 // pred_check
    _
  $region23: #{ner_lstm_forward.1} parent=0 // pred_check_branch
    %27 = sbr.rel (0) target = $region25
  $region24: #{ner_lstm_forward.1} parent=0 // pred_region
    _
  $region25: #{ner_lstm_forward.1} parent=0 // pred_fallthru
    _
  // Predicated region
  $region26: #{ner_lstm_forward.1} parent=0 // pred_check
    _
  $region27: #{ner_lstm_forward.1} parent=0 // pred_check_branch
    %29 = sbr.rel (0) target = $region29
  $region28: #{ner_lstm_forward.1} parent=0 // pred_region
    _
  $region29: #{ner_lstm_forward.1} parent=0 // pred_fallthru
    _
  // Predicated region
  $region30: #{ner_lstm_forward.1} parent=0 // pred_check
    _
  $region31: #{ner_lstm_forward.1} parent=0 // pred_check_branch
    %31 = sbr.rel (0) target = $region33
  $region32: #{ner_lstm_forward.1} parent=0 // pred_region
    _
  $region33: #{ner_lstm_forward.1} parent=0 // pred_fallthru
    _
  // Predicated region
  $region34: #{ner_lstm_forward.1} parent=0 // pred_check
    _
  $region35: #{ner_lstm_forward.1} parent=0 // pred_check_branch
    %33 = sbr.rel (0) target = $region37
  $region36: #{ner_lstm_forward.1} parent=0 // pred_region
    _
  $region37: #{ner_lstm_forward.1} parent=0 // pred_fallthru
    _
  // Predicated region
  $region38: #{ner_lstm_forward.1} parent=0 // pred_check
    _
  $region39: #{ner_lstm_forward.1} parent=0 // pred_check_branch
    %35 = sbr.rel (0) target = $region41
  $region40: #{ner_lstm_forward.1} parent=0 // pred_region
    _
  $region41: #{ner_lstm_forward.1} parent=0 // pred_fallthru
    _
  // Predicated region
  $region42: #{ner_lstm_forward.1} parent=0 // pred_check
    _
  $region43: #{ner_lstm_forward.1} parent=0 // pred_check_branch
    %37 = sbr.rel (0) target = $region45
  $region44: #{ner_lstm_forward.1} parent=0 // pred_region
    _
  $region45: #{ner_lstm_forward.1} parent=0 // pred_fallthru
    _
  %v38 = vld [vmem:[%s0] sm:$0xff]
  %v39 = vld [vmem:[%s0 + $0x8] sm:$0xff]
  %v40 = vld [vmem:[%s0 + $0x10] sm:$0xff]
  %v41 = vld [vmem:[%s0 + $0x18] sm:$0xff]
  %v42 = vld [vmem:[%s0 + $0x20] sm:$0xff]
  %v43 = vld [vmem:[%s0 + $0x28] sm:$0xff]
  %v44 = vld [vmem:[%s0 + $0x30] sm:$0xff]
  %v45 = vld [vmem:[%s0 + $0x38] sm:$0xff]
  %v46 = vld [vmem:[%s1] sm:$0xff]
  %v47 = vld [vmem:[%s1 + $0x8] sm:$0xff]
  %v48 = vld [vmem:[%s1 + $0x10] sm:$0xff]
  %v49 = vld [vmem:[%s1 + $0x18] sm:$0xff]
  %v50 = vld [vmem:[%s1 + $0x20] sm:$0xff]
  %v51 = vld [vmem:[%s1 + $0x28] sm:$0xff]
  %v52 = vld [vmem:[%s1 + $0x30] sm:$0xff]
  %v53 = vld [vmem:[%s1 + $0x38] sm:$0xff]
  %v54 = vld [vmem:[%s4] sm:$0x3]
  %v56 = vlaneseq
  %v57 = vshrl.u32 %v56, 7
  %v58 = vsub.s32 0, %v57
  %v59 = vrot.slane %v54, %v58
  %v60 = vlaneseq
  %v61 = vshrl.u32 %v60, 7
  %v62 = vsub.s32 1, %v61
  %v63 = vrot.slane %v54, %v62
  %vm66 = vcmask 261120
  %v68 = vsel %vm66, %v38, 0
  %v71 = vsel %vm66, %v39, 0
  %v74 = vsel %vm66, %v40, 0
  %v77 = vsel %vm66, %v41, 0
  %v80 = vsel %vm66, %v42, 0
  %v83 = vsel %vm66, %v43, 0
  %v86 = vsel %vm66, %v44, 0
  %v89 = vsel %vm66, %v45, 0
  %91 = vmatprep.subr.mxu0 %v47
  %92 = vmatpush1.msra.mxu0 %v46
  %93 = vmatprep.subr.mxu0 %v49
  %94 = vmatpush1.msra.mxu0 %v48
  %95 = vmatprep.subr.mxu0 %v51
  %96 = vmatpush1.msra.mxu0 %v50
  %97 = vmatprep.subr.mxu0 %v53
  %98 = vmatpush1.msra.mxu0 %v52
  %99 = vmatprep.subr.mxu0 0.0
  %100 = vmatpush1.msra.mxu0 0.0
  %101 = vmatprep.subr.mxu0 0.0
  %102 = vmatpush1.msra.mxu0 0.0
  %103 = vmatprep.subr.mxu0 0.0
  %104 = vmatpush1.msra.mxu0 0.0
  %105 = vmatprep.subr.mxu0 0.0
  %106 = vmatpush1.msra.mxu0 0.0
  %107 = vmatprep.subr.mxu0 0.0
  %108 = vmatpush1.msra.mxu0 0.0
  %109 = vmatprep.subr.mxu0 0.0
  %110 = vmatpush1.msra.mxu0 0.0
  %111 = vmatprep.subr.mxu0 0.0
  %112 = vmatpush1.msra.mxu0 0.0
  %113 = vmatprep.subr.mxu0 0.0
  %114 = vmatpush1.msra.mxu0 0.0
  %115 = vmatprep.subr.mxu0 0.0
  %116 = vmatpush1.msra.mxu0 0.0
  %117 = vmatprep.subr.mxu0 0.0
  %118 = vmatpush1.msra.mxu0 0.0
  %119 = vmatprep.subr.mxu0 0.0
  %120 = vmatpush1.msra.mxu0 0.0
  %121 = vmatprep.subr.mxu0 0.0
  %122 = vmatpush1.msra.mxu0 0.0
  %123 = vmatprep.subr.mxu0 0.0
  %124 = vmatpush1.msra.mxu0 0.0
  %125 = vmatprep.subr.mxu0 0.0
  %126 = vmatpush1.msra.mxu0 0.0
  %127 = vmatprep.subr.mxu0 0.0
  %128 = vmatpush1.msra.mxu0 0.0
  %129 = vmatprep.subr.mxu0 0.0
  %130 = vmatpush1.msra.mxu0 0.0
  %131 = vmatprep.subr.mxu0 0.0
  %132 = vmatpush1.msra.mxu0 0.0
  %133 = vmatprep.subr.mxu0 0.0
  %134 = vmatpush1.msra.mxu0 0.0
  %135 = vmatprep.subr.mxu0 0.0
  %136 = vmatpush1.msra.mxu0 0.0
  %137 = vmatprep.subr.mxu0 0.0
  %138 = vmatpush1.msra.mxu0 0.0
  %139 = vmatprep.subr.mxu0 0.0
  %140 = vmatpush1.msra.mxu0 0.0
  %141 = vmatprep.subr.mxu0 0.0
  %142 = vmatpush1.msra.mxu0 0.0
  %143 = vmatprep.subr.mxu0 0.0
  %144 = vmatpush1.msra.mxu0 0.0
  %145 = vmatprep.subr.mxu0 0.0
  %146 = vmatpush1.msra.mxu0 0.0
  %147 = vmatprep.subr.mxu0 0.0
  %148 = vmatpush1.msra.mxu0 0.0
  %149 = vmatprep.subr.mxu0 0.0
  %150 = vmatpush1.msra.mxu0 0.0
  %151 = vmatprep.subr.mxu0 0.0
  %152 = vmatpush1.msra.mxu0 0.0
  %153 = vmatprep.subr.mxu0 0.0
  %154 = vmatpush1.msra.mxu0 0.0
  %155 = vmatprep.mubr.f32.mxu0 0.0
  %156 = vmatmul.mubr.f32.gmra.mrb[0].mxu0 %v68
  %v157 = vpop.f32.mrb[0].mxu0
  %v158 = vadd.f32 %v59, %v157
  %v159 = vpop.f32.mrb[0].mxu0
  %v160 = vadd.f32 %v63, %v159
  %161 = vmatprep.mubr.f32.mxu0 0.0
  %162 = vmatmul.mubr.f32.gmra.mrb[0].mxu0 %v71
  %v163 = vpop.f32.mrb[0].mxu0
  %v164 = vadd.f32 %v59, %v163
  %v165 = vpop.f32.mrb[0].mxu0
  %v166 = vadd.f32 %v63, %v165
  %167 = vmatprep.mubr.f32.mxu0 0.0
  %168 = vmatmul.mubr.f32.gmra.mrb[0].mxu0 %v74
  %v169 = vpop.f32.mrb[0].mxu0
  %v170 = vadd.f32 %v59, %v169
  %v171 = vpop.f32.mrb[0].mxu0
  %v172 = vadd.f32 %v63, %v171
  %173 = vmatprep.mubr.f32.mxu0 0.0
  %174 = vmatmul.mubr.f32.gmra.mrb[0].mxu0 %v77
  %v175 = vpop.f32.mrb[0].mxu0
  %v176 = vadd.f32 %v59, %v175
  %v177 = vpop.f32.mrb[0].mxu0
  %v178 = vadd.f32 %v63, %v177
  %179 = vmatprep.mubr.f32.mxu0 0.0
  %180 = vmatmul.mubr.f32.gmra.mrb[0].mxu0 %v80
  %v181 = vpop.f32.mrb[0].mxu0
  %v182 = vadd.f32 %v59, %v181
  %v183 = vpop.f32.mrb[0].mxu0
  %v184 = vadd.f32 %v63, %v183
  %185 = vmatprep.mubr.f32.mxu0 0.0
  %186 = vmatmul.mubr.f32.gmra.mrb[0].mxu0 %v83
  %v187 = vpop.f32.mrb[0].mxu0
  %v188 = vadd.f32 %v59, %v187
  %v189 = vpop.f32.mrb[0].mxu0
  %v190 = vadd.f32 %v63, %v189
  %191 = vmatprep.mubr.f32.mxu0 0.0
  %192 = vmatmul.mubr.f32.gmra.mrb[0].mxu0 %v86
  %v193 = vpop.f32.mrb[0].mxu0
  %v194 = vadd.f32 %v59, %v193
  %v195 = vpop.f32.mrb[0].mxu0
  %v196 = vadd.f32 %v63, %v195
  %197 = vmatprep.mubr.f32.mxu0 0.0
  %198 = vmatmul.mubr.f32.gmra.mrb[0].mxu0 %v89
  %v199 = vpop.f32.mrb[0].mxu0
  %v200 = vadd.f32 %v59, %v199
  %v201 = vpop.f32.mrb[0].mxu0
  %v202 = vadd.f32 %v63, %v201
  %203 = vdwg.mxu0
  %204 = vst [vmem:[#allocation2] sm:$0xff] %v158
  %205 = vst [vmem:[#allocation2 + $0x8] sm:$0xff] %v160
  %206 = vst [vmem:[#allocation2 + $0x10] sm:$0xff] %v164
  %207 = vst [vmem:[#allocation2 + $0x18] sm:$0xff] %v166
  %208 = vst [vmem:[#allocation2 + $0x20] sm:$0xff] %v170
  %209 = vst [vmem:[#allocation2 + $0x28] sm:$0xff] %v172
  %210 = vst [vmem:[#allocation2 + $0x30] sm:$0xff] %v176
  %211 = vst [vmem:[#allocation2 + $0x38] sm:$0xff] %v178
  %212 = vst [vmem:[#allocation2 + $0x40] sm:$0xff] %v182
  %213 = vst [vmem:[#allocation2 + $0x48] sm:$0xff] %v184
  %214 = vst [vmem:[#allocation2 + $0x50] sm:$0xff] %v188
  %215 = vst [vmem:[#allocation2 + $0x58] sm:$0xff] %v190
  %216 = vst [vmem:[#allocation2 + $0x60] sm:$0xff] %v194
  %217 = vst [vmem:[#allocation2 + $0x68] sm:$0xff] %v196
  %218 = vst [vmem:[#allocation2 + $0x70] sm:$0xff] %v200
  %219 = vst [vmem:[#allocation2 + $0x78] sm:$0xff] %v202
  %v220 = vld [vmem:[%s2] sm:$0xff]
  %v221 = vld [vmem:[%s2 + $0x8] sm:$0xff]
  %v222 = vld [vmem:[%s2 + $0x10] sm:$0xff]
  %v223 = vld [vmem:[%s2 + $0x18] sm:$0xff]
  %v224 = vld [vmem:[%s2 + $0x20] sm:$0xff]
  %v225 = vld [vmem:[%s2 + $0x28] sm:$0xff]
  %v226 = vld [vmem:[%s2 + $0x30] sm:$0xff]
  %v227 = vld [vmem:[%s2 + $0x38] sm:$0xff]
  %228 = vmatprep.subr.mxu0 %v221
  %229 = vmatpush1.msra.mxu0 %v220
  %230 = vmatprep.subr.mxu0 %v223
  %231 = vmatpush1.msra.mxu0 %v222
  %232 = vmatprep.subr.mxu0 %v225
  %233 = vmatpush1.msra.mxu0 %v224
  %234 = vmatprep.subr.mxu0 %v227
  %235 = vmatpush1.msra.mxu0 %v226
  %236 = vmatprep.subr.mxu0 0.0
  %237 = vmatpush1.msra.mxu0 0.0
  %238 = vmatprep.subr.mxu0 0.0
  %239 = vmatpush1.msra.mxu0 0.0
  %240 = vmatprep.subr.mxu0 0.0
  %241 = vmatpush1.msra.mxu0 0.0
  %242 = vmatprep.subr.mxu0 0.0
  %243 = vmatpush1.msra.mxu0 0.0
  %244 = vmatprep.subr.mxu0 0.0
  %245 = vmatpush1.msra.mxu0 0.0
  %246 = vmatprep.subr.mxu0 0.0
  %247 = vmatpush1.msra.mxu0 0.0
  %248 = vmatprep.subr.mxu0 0.0
  %249 = vmatpush1.msra.mxu0 0.0
  %250 = vmatprep.subr.mxu0 0.0
  %251 = vmatpush1.msra.mxu0 0.0
  %252 = vmatprep.subr.mxu0 0.0
  %253 = vmatpush1.msra.mxu0 0.0
  %254 = vmatprep.subr.mxu0 0.0
  %255 = vmatpush1.msra.mxu0 0.0
  %256 = vmatprep.subr.mxu0 0.0
  %257 = vmatpush1.msra.mxu0 0.0
  %258 = vmatprep.subr.mxu0 0.0
  %259 = vmatpush1.msra.mxu0 0.0
  %260 = vmatprep.subr.mxu0 0.0
  %261 = vmatpush1.msra.mxu0 0.0
  %262 = vmatprep.subr.mxu0 0.0
  %263 = vmatpush1.msra.mxu0 0.0
  %264 = vmatprep.subr.mxu0 0.0
  %265 = vmatpush1.msra.mxu0 0.0
  %266 = vmatprep.subr.mxu0 0.0
  %267 = vmatpush1.msra.mxu0 0.0
  %268 = vmatprep.subr.mxu0 0.0
  %269 = vmatpush1.msra.mxu0 0.0
  %270 = vmatprep.subr.mxu0 0.0
  %271 = vmatpush1.msra.mxu0 0.0
  %272 = vmatprep.subr.mxu0 0.0
  %273 = vmatpush1.msra.mxu0 0.0
  %274 = vmatprep.subr.mxu0 0.0
  %275 = vmatpush1.msra.mxu0 0.0
  %276 = vmatprep.subr.mxu0 0.0
  %277 = vmatpush1.msra.mxu0 0.0
  %278 = vmatprep.subr.mxu0 0.0
  %279 = vmatpush1.msra.mxu0 0.0
  %280 = vmatprep.subr.mxu0 0.0
  %281 = vmatpush1.msra.mxu0 0.0
  %282 = vmatprep.subr.mxu0 0.0
  %283 = vmatpush1.msra.mxu0 0.0
  %284 = vmatprep.subr.mxu0 0.0
  %285 = vmatpush1.msra.mxu0 0.0
  %286 = vmatprep.subr.mxu0 0.0
  %287 = vmatpush1.msra.mxu0 0.0
  %288 = vmatprep.subr.mxu0 0.0
  %289 = vmatpush1.msra.mxu0 0.0
  %290 = vmatprep.subr.mxu0 0.0
  %291 = vmatpush1.msra.mxu0 0.0
  %292 = vmatprep.mubr.f32.mxu0 0.0
  %293 = vmatmul.mubr.f32.gmra.mrb[0].mxu0 %v68
  %v294 = vpop.f32.mrb[0].mxu0
  %v295 = vadd.f32 0.0, %v294
  %v296 = vpop.f32.mrb[0].mxu0
  %v297 = vadd.f32 0.0, %v296
  %298 = vmatprep.mubr.f32.mxu0 0.0
  %299 = vmatmul.mubr.f32.gmra.mrb[0].mxu0 %v71
  %v300 = vpop.f32.mrb[0].mxu0
  %v301 = vadd.f32 0.0, %v300
  %v302 = vpop.f32.mrb[0].mxu0
  %v303 = vadd.f32 0.0, %v302
  %304 = vmatprep.mubr.f32.mxu0 0.0
  %305 = vmatmul.mubr.f32.gmra.mrb[0].mxu0 %v74
  %v306 = vpop.f32.mrb[0].mxu0
  %v307 = vadd.f32 0.0, %v306
  %v308 = vpop.f32.mrb[0].mxu0
  %v309 = vadd.f32 0.0, %v308
  %310 = vmatprep.mubr.f32.mxu0 0.0
  %311 = vmatmul.mubr.f32.gmra.mrb[0].mxu0 %v77
  %v312 = vpop.f32.mrb[0].mxu0
  %v313 = vadd.f32 0.0, %v312
  %v314 = vpop.f32.mrb[0].mxu0
  %v315 = vadd.f32 0.0, %v314
  %316 = vmatprep.mubr.f32.mxu0 0.0
  %317 = vmatmul.mubr.f32.gmra.mrb[0].mxu0 %v80
  %v318 = vpop.f32.mrb[0].mxu0
  %v319 = vadd.f32 0.0, %v318
  %v320 = vpop.f32.mrb[0].mxu0
  %v321 = vadd.f32 0.0, %v320
  %322 = vmatprep.mubr.f32.mxu0 0.0
  %323 = vmatmul.mubr.f32.gmra.mrb[0].mxu0 %v83
  %v324 = vpop.f32.mrb[0].mxu0
  %v325 = vadd.f32 0.0, %v324
  %v326 = vpop.f32.mrb[0].mxu0
  %v327 = vadd.f32 0.0, %v326
  %328 = vmatprep.mubr.f32.mxu0 0.0
  %329 = vmatmul.mubr.f32.gmra.mrb[0].mxu0 %v86
  %v330 = vpop.f32.mrb[0].mxu0
  %v331 = vadd.f32 0.0, %v330
  %v332 = vpop.f32.mrb[0].mxu0
  %v333 = vadd.f32 0.0, %v332
  %334 = vmatprep.mubr.f32.mxu0 0.0
  %335 = vmatmul.mubr.f32.gmra.mrb[0].mxu0 %v89
  %v336 = vpop.f32.mrb[0].mxu0
  %v337 = vadd.f32 0.0, %v336
  %v338 = vpop.f32.mrb[0].mxu0
  %v339 = vadd.f32 0.0, %v338
  %340 = vdwg.mxu0
  %341 = vst [vmem:[#allocation3] sm:$0xff] %v295
  %342 = vst [vmem:[#allocation3 + $0x8] sm:$0xff] %v297
  %343 = vst [vmem:[#allocation3 + $0x10] sm:$0xff] %v301
  %344 = vst [vmem:[#allocation3 + $0x18] sm:$0xff] %v303
  %345 = vst [vmem:[#allocation3 + $0x20] sm:$0xff] %v307
  %346 = vst [vmem:[#allocation3 + $0x28] sm:$0xff] %v309
  %347 = vst [vmem:[#allocation3 + $0x30] sm:$0xff] %v313
  %348 = vst [vmem:[#allocation3 + $0x38] sm:$0xff] %v315
  %349 = vst [vmem:[#allocation3 + $0x40] sm:$0xff] %v319
  %350 = vst [vmem:[#allocation3 + $0x48] sm:$0xff] %v321
  %351 = vst [vmem:[#allocation3 + $0x50] sm:$0xff] %v325
  %352 = vst [vmem:[#allocation3 + $0x58] sm:$0xff] %v327
  %353 = vst [vmem:[#allocation3 + $0x60] sm:$0xff] %v331
  %354 = vst [vmem:[#allocation3 + $0x68] sm:$0xff] %v333
  %355 = vst [vmem:[#allocation3 + $0x70] sm:$0xff] %v337
  %356 = vst [vmem:[#allocation3 + $0x78] sm:$0xff] %v339
  %v357 = vld [vmem:[%s3] sm:$0xff]
  %v358 = vld [vmem:[%s3 + $0x8] sm:$0xff]
  %v359 = vld [vmem:[%s3 + $0x10] sm:$0xff]
  %v360 = vld [vmem:[%s3 + $0x18] sm:$0xff]
  %v361 = vld [vmem:[%s3 + $0x20] sm:$0xff]
  %v362 = vld [vmem:[%s3 + $0x28] sm:$0xff]
  %v363 = vld [vmem:[%s3 + $0x30] sm:$0xff]
  %v364 = vld [vmem:[%s3 + $0x38] sm:$0xff]
  %v365 = vld [vmem:[%s3 + $0x40] sm:$0xff]
  %v366 = vld [vmem:[%s3 + $0x48] sm:$0xff]
  %v367 = vld [vmem:[%s3 + $0x50] sm:$0xff]
  %v368 = vld [vmem:[%s3 + $0x58] sm:$0xff]
  %v369 = vld [vmem:[%s3 + $0x60] sm:$0xff]
  %v370 = vld [vmem:[%s3 + $0x68] sm:$0xff]
  %v371 = vld [vmem:[%s3 + $0x70] sm:$0xff]
  %v372 = vld [vmem:[%s3 + $0x78] sm:$0xff]
  %s373 = smul.u32 0, 2
  %s374 = smul.addr %s373, 8
  %s375 = scalar_lea.vmem [#allocation2], %s374
  %v376 = vld [vmem:[%s375] sm:$0xff]
  %v377 = vld [vmem:[%s375 + $0x8] sm:$0xff]
  %vm378 = vcmask 523264
  %v380 = vsel %vm378, 0.0, 0
  %382 = vmatprep.subr.mxu0 %v358
  %383 = vmatpush1.msra.mxu0 %v357
  %384 = vmatprep.subr.mxu0 %v360
  %385 = vmatpush1.msra.mxu0 %v359
  %386 = vmatprep.subr.mxu0 %v362
  %387 = vmatpush1.msra.mxu0 %v361
  %388 = vmatprep.subr.mxu0 %v364
  %389 = vmatpush1.msra.mxu0 %v363
  %390 = vmatprep.subr.mxu0 %v366
  %391 = vmatpush1.msra.mxu0 %v365
  %392 = vmatprep.subr.mxu0 %v368
  %393 = vmatpush1.msra.mxu0 %v367
  %394 = vmatprep.subr.mxu0 %v370
  %395 = vmatpush1.msra.mxu0 %v369
  %396 = vmatprep.subr.mxu0 %v372
  %397 = vmatpush1.msra.mxu0 %v371
  %398 = vmatprep.subr.mxu0 0.0
  %399 = vmatpush1.msra.mxu0 0.0
  %400 = vmatprep.subr.mxu0 0.0
  %401 = vmatpush1.msra.mxu0 0.0
  %402 = vmatprep.subr.mxu0 0.0
  %403 = vmatpush1.msra.mxu0 0.0
  %404 = vmatprep.subr.mxu0 0.0
  %405 = vmatpush1.msra.mxu0 0.0
  %406 = vmatprep.subr.mxu0 0.0
  %407 = vmatpush1.msra.mxu0 0.0
  %408 = vmatprep.subr.mxu0 0.0
  %409 = vmatpush1.msra.mxu0 0.0
  %410 = vmatprep.subr.mxu0 0.0
  %411 = vmatpush1.msra.mxu0 0.0
  %412 = vmatprep.subr.mxu0 0.0
  %413 = vmatpush1.msra.mxu0 0.0
  %414 = vmatprep.subr.mxu0 0.0
  %415 = vmatpush1.msra.mxu0 0.0
  %416 = vmatprep.subr.mxu0 0.0
  %417 = vmatpush1.msra.mxu0 0.0
  %418 = vmatprep.subr.mxu0 0.0
  %419 = vmatpush1.msra.mxu0 0.0
  %420 = vmatprep.subr.mxu0 0.0
  %421 = vmatpush1.msra.mxu0 0.0
  %422 = vmatprep.subr.mxu0 0.0
  %423 = vmatpush1.msra.mxu0 0.0
  %424 = vmatprep.subr.mxu0 0.0
  %425 = vmatpush1.msra.mxu0 0.0
  %426 = vmatprep.subr.mxu0 0.0
  %427 = vmatpush1.msra.mxu0 0.0
  %428 = vmatprep.subr.mxu0 0.0
  %429 = vmatpush1.msra.mxu0 0.0
  %430 = vmatprep.subr.mxu0 0.0
  %431 = vmatpush1.msra.mxu0 0.0
  %432 = vmatprep.subr.mxu0 0.0
  %433 = vmatpush1.msra.mxu0 0.0
  %434 = vmatprep.subr.mxu0 0.0
  %435 = vmatpush1.msra.mxu0 0.0
  %436 = vmatprep.subr.mxu0 0.0
  %437 = vmatpush1.msra.mxu0 0.0
  %438 = vmatprep.subr.mxu0 0.0
  %439 = vmatpush1.msra.mxu0 0.0
  %440 = vmatprep.subr.mxu0 0.0
  %441 = vmatpush1.msra.mxu0 0.0
  %442 = vmatprep.subr.mxu0 0.0
  %443 = vmatpush1.msra.mxu0 0.0
  %444 = vmatprep.subr.mxu0 0.0
  %445 = vmatpush1.msra.mxu0 0.0
  %446 = vmatprep.mubr.f32.mxu0 0.0
  %447 = vmatmul.mubr.f32.gmra.mrb[0].mxu0 %v380
  %v448 = vpop.f32.mrb[0].mxu0
  %v449 = vadd.f32 %v376, %v448
  %v450 = vpop.f32.mrb[0].mxu0
  %v451 = vadd.f32 %v377, %v450
  %452 = vdwg.mxu0
  %s453 = smul.u32 7, 2
  %s454 = smul.addr %s453, 8
  %s455 = scalar_lea.vmem [#allocation3], %s454
  %v456 = vld [vmem:[%s455] sm:$0xff]
  %v457 = vld [vmem:[%s455 + $0x8] sm:$0xff]
  %v458 = vadd.f32 %v449, %v456
  %v459 = vadd.f32 %v451, %v457
  %v460 = vxor.u32 %v458, 2147483648
  %v461 = vxor.u32 %v459, 2147483648
  %v462 = vmul.f32 %v460, 1.442695
  %v463 = vpow.pop %v462
  %v464 = vmul.f32 %v461, 1.442695
  %v465 = vpow.pop %v464
  %v466 = vadd.f32 %v463, 1.0
  %v467 = vadd.f32 %v465, 1.0
  %v468 = vrcp.pop %v466
  %v469 = vmul.f32 1.0, %v468
  %v470 = vrcp.pop %v467
  %v471 = vmul.f32 1.0, %v470
  %v472 = vtanh.pop %v459
  %v473 = vmul.f32 %v469, 0.0
  %475 = vrot.lane.b32.xlu0 %v472, 64
  %v476 = vpop.permute.xlu0 %475
  %v478 = vmul.f32 %v469, %v476
  %480 = vrot.lane.b32.xlu0 %v478, 64
  %v481 = vpop.permute.xlu0 %480
  %v483 = vadd.f32 %v473, %v481
  %v484 = vtanh.pop %v483
  %486 = vrot.lane.b32.xlu0 %v484, 64
  %v487 = vpop.permute.xlu0 %486
  %v489 = vmul.f32 %v471, %v487
  %490 = vst.msk [vmem:[#allocation4] sm:$0xff] %vm66, %v489
  %s491 = scalar_lea.vmem [#allocation4], 56
  %vm492 = vcmask 523520
  %493 = vst.msk [vmem:[%s491] sm:$0xff] %vm492, %v489
  %v494 = vld [vmem:[%s3] sm:$0xff]
  %v495 = vld [vmem:[%s3 + $0x8] sm:$0xff]
  %v496 = vld [vmem:[%s3 + $0x10] sm:$0xff]
  %v497 = vld [vmem:[%s3 + $0x18] sm:$0xff]
  %v498 = vld [vmem:[%s3 + $0x20] sm:$0xff]
  %v499 = vld [vmem:[%s3 + $0x28] sm:$0xff]
  %v500 = vld [vmem:[%s3 + $0x30] sm:$0xff]
  %v501 = vld [vmem:[%s3 + $0x38] sm:$0xff]
  %v502 = vld [vmem:[%s3 + $0x40] sm:$0xff]
  %v503 = vld [vmem:[%s3 + $0x48] sm:$0xff]
  %v504 = vld [vmem:[%s3 + $0x50] sm:$0xff]
  %v505 = vld [vmem:[%s3 + $0x58] sm:$0xff]
  %v506 = vld [vmem:[%s3 + $0x60] sm:$0xff]
  %v507 = vld [vmem:[%s3 + $0x68] sm:$0xff]
  %v508 = vld [vmem:[%s3 + $0x70] sm:$0xff]
  %v509 = vld [vmem:[%s3 + $0x78] sm:$0xff]
  %s510 = smul.u32 1, 2
  %s511 = smul.addr %s510, 8
  %s512 = scalar_lea.vmem [#allocation2], %s511
  %v513 = vld [vmem:[%s512] sm:$0xff]
  %v514 = vld [vmem:[%s512 + $0x8] sm:$0xff]
  %v516 = vsel %vm378, %v489, 0
  %518 = vmatprep.subr.mxu0 %v495
  %519 = vmatpush1.msra.mxu0 %v494
  %520 = vmatprep.subr.mxu0 %v497
  %521 = vmatpush1.msra.mxu0 %v496
  %522 = vmatprep.subr.mxu0 %v499
  %523 = vmatpush1.msra.mxu0 %v498
  %524 = vmatprep.subr.mxu0 %v501
  %525 = vmatpush1.msra.mxu0 %v500
  %526 = vmatprep.subr.mxu0 %v503
  %527 = vmatpush1.msra.mxu0 %v502
  %528 = vmatprep.subr.mxu0 %v505
  %529 = vmatpush1.msra.mxu0 %v504
  %530 = vmatprep.subr.mxu0 %v507
  %531 = vmatpush1.msra.mxu0 %v506
  %532 = vmatprep.subr.mxu0 %v509
  %533 = vmatpush1.msra.mxu0 %v508
  %534 = vmatprep.subr.mxu0 0.0
  %535 = vmatpush1.msra.mxu0 0.0
  %536 = vmatprep.subr.mxu0 0.0
  %537 = vmatpush1.msra.mxu0 0.0
  %538 = vmatprep.subr.mxu0 0.0
  %539 = vmatpush1.msra.mxu0 0.0
  %540 = vmatprep.subr.mxu0 0.0
  %541 = vmatpush1.msra.mxu0 0.0
  %542 = vmatprep.subr.mxu0 0.0
  %543 = vmatpush1.msra.mxu0 0.0
  %544 = vmatprep.subr.mxu0 0.0
  %545 = vmatpush1.msra.mxu0 0.0
  %546 = vmatprep.subr.mxu0 0.0
  %547 = vmatpush1.msra.mxu0 0.0
  %548 = vmatprep.subr.mxu0 0.0
  %549 = vmatpush1.msra.mxu0 0.0
  %550 = vmatprep.subr.mxu0 0.0
  %551 = vmatpush1.msra.mxu0 0.0
  %552 = vmatprep.subr.mxu0 0.0
  %553 = vmatpush1.msra.mxu0 0.0
  %554 = vmatprep.subr.mxu0 0.0
  %555 = vmatpush1.msra.mxu0 0.0
  %556 = vmatprep.subr.mxu0 0.0
  %557 = vmatpush1.msra.mxu0 0.0
  %558 = vmatprep.subr.mxu0 0.0
  %559 = vmatpush1.msra.mxu0 0.0
  %560 = vmatprep.subr.mxu0 0.0
  %561 = vmatpush1.msra.mxu0 0.0
  %562 = vmatprep.subr.mxu0 0.0
  %563 = vmatpush1.msra.mxu0 0.0
  %564 = vmatprep.subr.mxu0 0.0
  %565 = vmatpush1.msra.mxu0 0.0
  %566 = vmatprep.subr.mxu0 0.0
  %567 = vmatpush1.msra.mxu0 0.0
  %568 = vmatprep.subr.mxu0 0.0
  %569 = vmatpush1.msra.mxu0 0.0
  %570 = vmatprep.subr.mxu0 0.0
  %571 = vmatpush1.msra.mxu0 0.0
  %572 = vmatprep.subr.mxu0 0.0
  %573 = vmatpush1.msra.mxu0 0.0
  %574 = vmatprep.subr.mxu0 0.0
  %575 = vmatpush1.msra.mxu0 0.0
  %576 = vmatprep.subr.mxu0 0.0
  %577 = vmatpush1.msra.mxu0 0.0
  %578 = vmatprep.subr.mxu0 0.0
  %579 = vmatpush1.msra.mxu0 0.0
  %580 = vmatprep.subr.mxu0 0.0
  %581 = vmatpush1.msra.mxu0 0.0
  %582 = vmatprep.mubr.f32.mxu0 0.0
  %583 = vmatmul.mubr.f32.gmra.mrb[0].mxu0 %v516
  %v584 = vpop.f32.mrb[0].mxu0
  %v585 = vadd.f32 %v513, %v584
  %v586 = vpop.f32.mrb[0].mxu0
  %v587 = vadd.f32 %v514, %v586
  %588 = vdwg.mxu0
  %s589 = smul.u32 6, 2
  %s590 = smul.addr %s589, 8
  %s591 = scalar_lea.vmem [#allocation3], %s590
  %v592 = vld [vmem:[%s591] sm:$0xff]
  %v593 = vld [vmem:[%s591 + $0x8] sm:$0xff]
  %v594 = vadd.f32 %v585, %v592
  %v595 = vadd.f32 %v587, %v593
  %v596 = vxor.u32 %v594, 2147483648
  %v597 = vxor.u32 %v595, 2147483648
  %v598 = vmul.f32 %v596, 1.442695
  %v599 = vpow.pop %v598
  %v600 = vmul.f32 %v597, 1.442695
  %v601 = vpow.pop %v600
  %v602 = vadd.f32 %v599, 1.0
  %v603 = vadd.f32 %v601, 1.0
  %v604 = vrcp.pop %v602
  %v605 = vmul.f32 1.0, %v604
  %v606 = vrcp.pop %v603
  %v607 = vmul.f32 1.0, %v606
  %v608 = vtanh.pop %v595
  %v609 = vmul.f32 %v605, %v483
  %611 = vrot.lane.b32.xlu0 %v608, 64
  %v612 = vpop.permute.xlu0 %611
  %v614 = vmul.f32 %v605, %v612
  %616 = vrot.lane.b32.xlu0 %v614, 64
  %v617 = vpop.permute.xlu0 %616
  %v619 = vadd.f32 %v609, %v617
  %v620 = vtanh.pop %v619
  %622 = vrot.lane.b32.xlu0 %v620, 64
  %v623 = vpop.permute.xlu0 %622
  %v625 = vmul.f32 %v607, %v623
  %s626 = scalar_lea.vmem [#allocation4], 8
  %627 = vst.msk [vmem:[%s626] sm:$0xff] %vm66, %v625
  %s628 = scalar_lea.vmem [#allocation4], 48
  %629 = vst.msk [vmem:[%s628] sm:$0xff] %vm492, %v625
  %v630 = vld [vmem:[%s3] sm:$0xff]
  %v631 = vld [vmem:[%s3 + $0x8] sm:$0xff]
  %v632 = vld [vmem:[%s3 + $0x10] sm:$0xff]
  %v633 = vld [vmem:[%s3 + $0x18] sm:$0xff]
  %v634 = vld [vmem:[%s3 + $0x20] sm:$0xff]
  %v635 = vld [vmem:[%s3 + $0x28] sm:$0xff]
  %v636 = vld [vmem:[%s3 + $0x30] sm:$0xff]
  %v637 = vld [vmem:[%s3 + $0x38] sm:$0xff]
  %v638 = vld [vmem:[%s3 + $0x40] sm:$0xff]
  %v639 = vld [vmem:[%s3 + $0x48] sm:$0xff]
  %v640 = vld [vmem:[%s3 + $0x50] sm:$0xff]
  %v641 = vld [vmem:[%s3 + $0x58] sm:$0xff]
  %v642 = vld [vmem:[%s3 + $0x60] sm:$0xff]
  %v643 = vld [vmem:[%s3 + $0x68] sm:$0xff]
  %v644 = vld [vmem:[%s3 + $0x70] sm:$0xff]
  %v645 = vld [vmem:[%s3 + $0x78] sm:$0xff]
  %s646 = smul.u32 2, 2
  %s647 = smul.addr %s646, 8
  %s648 = scalar_lea.vmem [#allocation2], %s647
  %v649 = vld [vmem:[%s648] sm:$0xff]
  %v650 = vld [vmem:[%s648 + $0x8] sm:$0xff]
  %v652 = vsel %vm378, %v625, 0
  %654 = vmatprep.subr.mxu0 %v631
  %655 = vmatpush1.msra.mxu0 %v630
  %656 = vmatprep.subr.mxu0 %v633
  %657 = vmatpush1.msra.mxu0 %v632
  %658 = vmatprep.subr.mxu0 %v635
  %659 = vmatpush1.msra.mxu0 %v634
  %660 = vmatprep.subr.mxu0 %v637
  %661 = vmatpush1.msra.mxu0 %v636
  %662 = vmatprep.subr.mxu0 %v639
  %663 = vmatpush1.msra.mxu0 %v638
  %664 = vmatprep.subr.mxu0 %v641
  %665 = vmatpush1.msra.mxu0 %v640
  %666 = vmatprep.subr.mxu0 %v643
  %667 = vmatpush1.msra.mxu0 %v642
  %668 = vmatprep.subr.mxu0 %v645
  %669 = vmatpush1.msra.mxu0 %v644
  %670 = vmatprep.subr.mxu0 0.0
  %671 = vmatpush1.msra.mxu0 0.0
  %672 = vmatprep.subr.mxu0 0.0
  %673 = vmatpush1.msra.mxu0 0.0
  %674 = vmatprep.subr.mxu0 0.0
  %675 = vmatpush1.msra.mxu0 0.0
  %676 = vmatprep.subr.mxu0 0.0
  %677 = vmatpush1.msra.mxu0 0.0
  %678 = vmatprep.subr.mxu0 0.0
  %679 = vmatpush1.msra.mxu0 0.0
  %680 = vmatprep.subr.mxu0 0.0
  %681 = vmatpush1.msra.mxu0 0.0
  %682 = vmatprep.subr.mxu0 0.0
  %683 = vmatpush1.msra.mxu0 0.0
  %684 = vmatprep.subr.mxu0 0.0
  %685 = vmatpush1.msra.mxu0 0.0
  %686 = vmatprep.subr.mxu0 0.0
  %687 = vmatpush1.msra.mxu0 0.0
  %688 = vmatprep.subr.mxu0 0.0
  %689 = vmatpush1.msra.mxu0 0.0
  %690 = vmatprep.subr.mxu0 0.0
  %691 = vmatpush1.msra.mxu0 0.0
  %692 = vmatprep.subr.mxu0 0.0
  %693 = vmatpush1.msra.mxu0 0.0
  %694 = vmatprep.subr.mxu0 0.0
  %695 = vmatpush1.msra.mxu0 0.0
  %696 = vmatprep.subr.mxu0 0.0
  %697 = vmatpush1.msra.mxu0 0.0
  %698 = vmatprep.subr.mxu0 0.0
  %699 = vmatpush1.msra.mxu0 0.0
  %700 = vmatprep.subr.mxu0 0.0
  %701 = vmatpush1.msra.mxu0 0.0
  %702 = vmatprep.subr.mxu0 0.0
  %703 = vmatpush1.msra.mxu0 0.0
  %704 = vmatprep.subr.mxu0 0.0
  %705 = vmatpush1.msra.mxu0 0.0
  %706 = vmatprep.subr.mxu0 0.0
  %707 = vmatpush1.msra.mxu0 0.0
  %708 = vmatprep.subr.mxu0 0.0
  %709 = vmatpush1.msra.mxu0 0.0
  %710 = vmatprep.subr.mxu0 0.0
  %711 = vmatpush1.msra.mxu0 0.0
  %712 = vmatprep.subr.mxu0 0.0
  %713 = vmatpush1.msra.mxu0 0.0
  %714 = vmatprep.subr.mxu0 0.0
  %715 = vmatpush1.msra.mxu0 0.0
  %716 = vmatprep.subr.mxu0 0.0
  %717 = vmatpush1.msra.mxu0 0.0
  %718 = vmatprep.mubr.f32.mxu0 0.0
  %719 = vmatmul.mubr.f32.gmra.mrb[0].mxu0 %v652
  %v720 = vpop.f32.mrb[0].mxu0
  %v721 = vadd.f32 %v649, %v720
  %v722 = vpop.f32.mrb[0].mxu0
  %v723 = vadd.f32 %v650, %v722
  %724 = vdwg.mxu0
  %s725 = smul.u32 5, 2
  %s726 = smul.addr %s725, 8
  %s727 = scalar_lea.vmem [#allocation3], %s726
  %v728 = vld [vmem:[%s727] sm:$0xff]
  %v729 = vld [vmem:[%s727 + $0x8] sm:$0xff]
  %v730 = vadd.f32 %v721, %v728
  %v731 = vadd.f32 %v723, %v729
  %v732 = vxor.u32 %v730, 2147483648
  %v733 = vxor.u32 %v731, 2147483648
  %v734 = vmul.f32 %v732, 1.442695
  %v735 = vpow.pop %v734
  %v736 = vmul.f32 %v733, 1.442695
  %v737 = vpow.pop %v736
  %v738 = vadd.f32 %v735, 1.0
  %v739 = vadd.f32 %v737, 1.0
  %v740 = vrcp.pop %v738
  %v741 = vmul.f32 1.0, %v740
  %v742 = vrcp.pop %v739
  %v743 = vmul.f32 1.0, %v742
  %v744 = vtanh.pop %v731
  %v745 = vmul.f32 %v741, %v619
  %747 = vrot.lane.b32.xlu0 %v744, 64
  %v748 = vpop.permute.xlu0 %747
  %v750 = vmul.f32 %v741, %v748
  %752 = vrot.lane.b32.xlu0 %v750, 64
  %v753 = vpop.permute.xlu0 %752
  %v755 = vadd.f32 %v745, %v753
  %v756 = vtanh.pop %v755
  %758 = vrot.lane.b32.xlu0 %v756, 64
  %v759 = vpop.permute.xlu0 %758
  %v761 = vmul.f32 %v743, %v759
  %s762 = scalar_lea.vmem [#allocation4], 16
  %763 = vst.msk [vmem:[%s762] sm:$0xff] %vm66, %v761
  %s764 = scalar_lea.vmem [#allocation4], 40
  %765 = vst.msk [vmem:[%s764] sm:$0xff] %vm492, %v761
  %v766 = vld [vmem:[%s3] sm:$0xff]
  %v767 = vld [vmem:[%s3 + $0x8] sm:$0xff]
  %v768 = vld [vmem:[%s3 + $0x10] sm:$0xff]
  %v769 = vld [vmem:[%s3 + $0x18] sm:$0xff]
  %v770 = vld [vmem:[%s3 + $0x20] sm:$0xff]
  %v771 = vld [vmem:[%s3 + $0x28] sm:$0xff]
  %v772 = vld [vmem:[%s3 + $0x30] sm:$0xff]
  %v773 = vld [vmem:[%s3 + $0x38] sm:$0xff]
  %v774 = vld [vmem:[%s3 + $0x40] sm:$0xff]
  %v775 = vld [vmem:[%s3 + $0x48] sm:$0xff]
  %v776 = vld [vmem:[%s3 + $0x50] sm:$0xff]
  %v777 = vld [vmem:[%s3 + $0x58] sm:$0xff]
  %v778 = vld [vmem:[%s3 + $0x60] sm:$0xff]
  %v779 = vld [vmem:[%s3 + $0x68] sm:$0xff]
  %v780 = vld [vmem:[%s3 + $0x70] sm:$0xff]
  %v781 = vld [vmem:[%s3 + $0x78] sm:$0xff]
  %s782 = smul.u32 3, 2
  %s783 = smul.addr %s782, 8
  %s784 = scalar_lea.vmem [#allocation2], %s783
  %v785 = vld [vmem:[%s784] sm:$0xff]
  %v786 = vld [vmem:[%s784 + $0x8] sm:$0xff]
  %v788 = vsel %vm378, %v761, 0
  %790 = vmatprep.subr.mxu0 %v767
  %791 = vmatpush1.msra.mxu0 %v766
  %792 = vmatprep.subr.mxu0 %v769
  %793 = vmatpush1.msra.mxu0 %v768
  %794 = vmatprep.subr.mxu0 %v771
  %795 = vmatpush1.msra.mxu0 %v770
  %796 = vmatprep.subr.mxu0 %v773
  %797 = vmatpush1.msra.mxu0 %v772
  %798 = vmatprep.subr.mxu0 %v775
  %799 = vmatpush1.msra.mxu0 %v774
  %800 = vmatprep.subr.mxu0 %v777
  %801 = vmatpush1.msra.mxu0 %v776
  %802 = vmatprep.subr.mxu0 %v779
  %803 = vmatpush1.msra.mxu0 %v778
  %804 = vmatprep.subr.mxu0 %v781
  %805 = vmatpush1.msra.mxu0 %v780
  %806 = vmatprep.subr.mxu0 0.0
  %807 = vmatpush1.msra.mxu0 0.0
  %808 = vmatprep.subr.mxu0 0.0
  %809 = vmatpush1.msra.mxu0 0.0
  %810 = vmatprep.subr.mxu0 0.0
  %811 = vmatpush1.msra.mxu0 0.0
  %812 = vmatprep.subr.mxu0 0.0
  %813 = vmatpush1.msra.mxu0 0.0
  %814 = vmatprep.subr.mxu0 0.0
  %815 = vmatpush1.msra.mxu0 0.0
  %816 = vmatprep.subr.mxu0 0.0
  %817 = vmatpush1.msra.mxu0 0.0
  %818 = vmatprep.subr.mxu0 0.0
  %819 = vmatpush1.msra.mxu0 0.0
  %820 = vmatprep.subr.mxu0 0.0
  %821 = vmatpush1.msra.mxu0 0.0
  %822 = vmatprep.subr.mxu0 0.0
  %823 = vmatpush1.msra.mxu0 0.0
  %824 = vmatprep.subr.mxu0 0.0
  %825 = vmatpush1.msra.mxu0 0.0
  %826 = vmatprep.subr.mxu0 0.0
  %827 = vmatpush1.msra.mxu0 0.0
  %828 = vmatprep.subr.mxu0 0.0
  %829 = vmatpush1.msra.mxu0 0.0
  %830 = vmatprep.subr.mxu0 0.0
  %831 = vmatpush1.msra.mxu0 0.0
  %832 = vmatprep.subr.mxu0 0.0
  %833 = vmatpush1.msra.mxu0 0.0
  %834 = vmatprep.subr.mxu0 0.0
  %835 = vmatpush1.msra.mxu0 0.0
  %836 = vmatprep.subr.mxu0 0.0
  %837 = vmatpush1.msra.mxu0 0.0
  %838 = vmatprep.subr.mxu0 0.0
  %839 = vmatpush1.msra.mxu0 0.0
  %840 = vmatprep.subr.mxu0 0.0
  %841 = vmatpush1.msra.mxu0 0.0
  %842 = vmatprep.subr.mxu0 0.0
  %843 = vmatpush1.msra.mxu0 0.0
  %844 = vmatprep.subr.mxu0 0.0
  %845 = vmatpush1.msra.mxu0 0.0
  %846 = vmatprep.subr.mxu0 0.0
  %847 = vmatpush1.msra.mxu0 0.0
  %848 = vmatprep.subr.mxu0 0.0
  %849 = vmatpush1.msra.mxu0 0.0
  %850 = vmatprep.subr.mxu0 0.0
  %851 = vmatpush1.msra.mxu0 0.0
  %852 = vmatprep.subr.mxu0 0.0
  %853 = vmatpush1.msra.mxu0 0.0
  %854 = vmatprep.mubr.f32.mxu0 0.0
  %855 = vmatmul.mubr.f32.gmra.mrb[0].mxu0 %v788
  %v856 = vpop.f32.mrb[0].mxu0
  %v857 = vadd.f32 %v785, %v856
  %v858 = vpop.f32.mrb[0].mxu0
  %v859 = vadd.f32 %v786, %v858
  %860 = vdwg.mxu0
  %s861 = smul.u32 4, 2
  %s862 = smul.addr %s861, 8
  %s863 = scalar_lea.vmem [#allocation3], %s862
  %v864 = vld [vmem:[%s863] sm:$0xff]
  %v865 = vld [vmem:[%s863 + $0x8] sm:$0xff]
  %v866 = vadd.f32 %v857, %v864
  %v867 = vadd.f32 %v859, %v865
  %v868 = vxor.u32 %v866, 2147483648
  %v869 = vxor.u32 %v867, 2147483648
  %v870 = vmul.f32 %v868, 1.442695
  %v871 = vpow.pop %v870
  %v872 = vmul.f32 %v869, 1.442695
  %v873 = vpow.pop %v872
  %v874 = vadd.f32 %v871, 1.0
  %v875 = vadd.f32 %v873, 1.0
  %v876 = vrcp.pop %v874
  %v877 = vmul.f32 1.0, %v876
  %v878 = vrcp.pop %v875
  %v879 = vmul.f32 1.0, %v878
  %v880 = vtanh.pop %v867
  %v881 = vmul.f32 %v877, %v755
  %883 = vrot.lane.b32.xlu0 %v880, 64
  %v884 = vpop.permute.xlu0 %883
  %v886 = vmul.f32 %v877, %v884
  %888 = vrot.lane.b32.xlu0 %v886, 64
  %v889 = vpop.permute.xlu0 %888
  %v891 = vadd.f32 %v881, %v889
  %v892 = vtanh.pop %v891
  %894 = vrot.lane.b32.xlu0 %v892, 64
  %v895 = vpop.permute.xlu0 %894
  %v897 = vmul.f32 %v879, %v895
  %s898 = scalar_lea.vmem [#allocation4], 24
  %899 = vst.msk [vmem:[%s898] sm:$0xff] %vm66, %v897
  %s900 = scalar_lea.vmem [#allocation4], 32
  %901 = vst.msk [vmem:[%s900] sm:$0xff] %vm492, %v897
  %v902 = vld [vmem:[%s3] sm:$0xff]
  %v903 = vld [vmem:[%s3 + $0x8] sm:$0xff]
  %v904 = vld [vmem:[%s3 + $0x10] sm:$0xff]
  %v905 = vld [vmem:[%s3 + $0x18] sm:$0xff]
  %v906 = vld [vmem:[%s3 + $0x20] sm:$0xff]
  %v907 = vld [vmem:[%s3 + $0x28] sm:$0xff]
  %v908 = vld [vmem:[%s3 + $0x30] sm:$0xff]
  %v909 = vld [vmem:[%s3 + $0x38] sm:$0xff]
  %v910 = vld [vmem:[%s3 + $0x40] sm:$0xff]
  %v911 = vld [vmem:[%s3 + $0x48] sm:$0xff]
  %v912 = vld [vmem:[%s3 + $0x50] sm:$0xff]
  %v913 = vld [vmem:[%s3 + $0x58] sm:$0xff]
  %v914 = vld [vmem:[%s3 + $0x60] sm:$0xff]
  %v915 = vld [vmem:[%s3 + $0x68] sm:$0xff]
  %v916 = vld [vmem:[%s3 + $0x70] sm:$0xff]
  %v917 = vld [vmem:[%s3 + $0x78] sm:$0xff]
  %s918 = smul.addr %s861, 8
  %s919 = scalar_lea.vmem [#allocation2], %s918
  %v920 = vld [vmem:[%s919] sm:$0xff]
  %v921 = vld [vmem:[%s919 + $0x8] sm:$0xff]
  %v923 = vsel %vm378, %v897, 0
  %925 = vmatprep.subr.mxu0 %v903
  %926 = vmatpush1.msra.mxu0 %v902
  %927 = vmatprep.subr.mxu0 %v905
  %928 = vmatpush1.msra.mxu0 %v904
  %929 = vmatprep.subr.mxu0 %v907
  %930 = vmatpush1.msra.mxu0 %v906
  %931 = vmatprep.subr.mxu0 %v909
  %932 = vmatpush1.msra.mxu0 %v908
  %933 = vmatprep.subr.mxu0 %v911
  %934 = vmatpush1.msra.mxu0 %v910
  %935 = vmatprep.subr.mxu0 %v913
  %936 = vmatpush1.msra.mxu0 %v912
  %937 = vmatprep.subr.mxu0 %v915
  %938 = vmatpush1.msra.mxu0 %v914
  %939 = vmatprep.subr.mxu0 %v917
  %940 = vmatpush1.msra.mxu0 %v916
  %941 = vmatprep.subr.mxu0 0.0
  %942 = vmatpush1.msra.mxu0 0.0
  %943 = vmatprep.subr.mxu0 0.0
  %944 = vmatpush1.msra.mxu0 0.0
  %945 = vmatprep.subr.mxu0 0.0
  %946 = vmatpush1.msra.mxu0 0.0
  %947 = vmatprep.subr.mxu0 0.0
  %948 = vmatpush1.msra.mxu0 0.0
  %949 = vmatprep.subr.mxu0 0.0
  %950 = vmatpush1.msra.mxu0 0.0
  %951 = vmatprep.subr.mxu0 0.0
  %952 = vmatpush1.msra.mxu0 0.0
  %953 = vmatprep.subr.mxu0 0.0
  %954 = vmatpush1.msra.mxu0 0.0
  %955 = vmatprep.subr.mxu0 0.0
  %956 = vmatpush1.msra.mxu0 0.0
  %957 = vmatprep.subr.mxu0 0.0
  %958 = vmatpush1.msra.mxu0 0.0
  %959 = vmatprep.subr.mxu0 0.0
  %960 = vmatpush1.msra.mxu0 0.0
  %961 = vmatprep.subr.mxu0 0.0
  %962 = vmatpush1.msra.mxu0 0.0
  %963 = vmatprep.subr.mxu0 0.0
  %964 = vmatpush1.msra.mxu0 0.0
  %965 = vmatprep.subr.mxu0 0.0
  %966 = vmatpush1.msra.mxu0 0.0
  %967 = vmatprep.subr.mxu0 0.0
  %968 = vmatpush1.msra.mxu0 0.0
  %969 = vmatprep.subr.mxu0 0.0
  %970 = vmatpush1.msra.mxu0 0.0
  %971 = vmatprep.subr.mxu0 0.0
  %972 = vmatpush1.msra.mxu0 0.0
  %973 = vmatprep.subr.mxu0 0.0
  %974 = vmatpush1.msra.mxu0 0.0
  %975 = vmatprep.subr.mxu0 0.0
  %976 = vmatpush1.msra.mxu0 0.0
  %977 = vmatprep.subr.mxu0 0.0
  %978 = vmatpush1.msra.mxu0 0.0
  %979 = vmatprep.subr.mxu0 0.0
  %980 = vmatpush1.msra.mxu0 0.0
  %981 = vmatprep.subr.mxu0 0.0
  %982 = vmatpush1.msra.mxu0 0.0
  %983 = vmatprep.subr.mxu0 0.0
  %984 = vmatpush1.msra.mxu0 0.0
  %985 = vmatprep.subr.mxu0 0.0
  %986 = vmatpush1.msra.mxu0 0.0
  %987 = vmatprep.subr.mxu0 0.0
  %988 = vmatpush1.msra.mxu0 0.0
  %989 = vmatprep.mubr.f32.mxu0 0.0
  %990 = vmatmul.mubr.f32.gmra.mrb[0].mxu0 %v923
  %v991 = vpop.f32.mrb[0].mxu0
  %v992 = vadd.f32 %v920, %v991
  %v993 = vpop.f32.mrb[0].mxu0
  %v994 = vadd.f32 %v921, %v993
  %995 = vdwg.mxu0
  %s996 = smul.addr %s782, 8
  %s997 = scalar_lea.vmem [#allocation3], %s996
  %v998 = vld [vmem:[%s997] sm:$0xff]
  %v999 = vld [vmem:[%s997 + $0x8] sm:$0xff]
  %v1000 = vadd.f32 %v992, %v998
  %v1001 = vadd.f32 %v994, %v999
  %v1002 = vxor.u32 %v1000, 2147483648
  %v1003 = vxor.u32 %v1001, 2147483648
  %v1004 = vmul.f32 %v1002, 1.442695
  %v1005 = vpow.pop %v1004
  %v1006 = vmul.f32 %v1003, 1.442695
  %v1007 = vpow.pop %v1006
  %v1008 = vadd.f32 %v1005, 1.0
  %v1009 = vadd.f32 %v1007, 1.0
  %v1010 = vrcp.pop %v1008
  %v1011 = vmul.f32 1.0, %v1010
  %v1012 = vrcp.pop %v1009
  %v1013 = vmul.f32 1.0, %v1012
  %v1014 = vtanh.pop %v1001
  %v1015 = vmul.f32 %v1011, %v891
  %1017 = vrot.lane.b32.xlu0 %v1014, 64
  %v1018 = vpop.permute.xlu0 %1017
  %v1020 = vmul.f32 %v1011, %v1018
  %1022 = vrot.lane.b32.xlu0 %v1020, 64
  %v1023 = vpop.permute.xlu0 %1022
  %v1025 = vadd.f32 %v1015, %v1023
  %v1026 = vtanh.pop %v1025
  %1028 = vrot.lane.b32.xlu0 %v1026, 64
  %v1029 = vpop.permute.xlu0 %1028
  %v1031 = vmul.f32 %v1013, %v1029
  %1032 = vst.msk [vmem:[%s900] sm:$0xff] %vm66, %v1031
  %1033 = vst.msk [vmem:[%s898] sm:$0xff] %vm492, %v1031
  %v1034 = vld [vmem:[%s3] sm:$0xff]
  %v1035 = vld [vmem:[%s3 + $0x8] sm:$0xff]
  %v1036 = vld [vmem:[%s3 + $0x10] sm:$0xff]
  %v1037 = vld [vmem:[%s3 + $0x18] sm:$0xff]
  %v1038 = vld [vmem:[%s3 + $0x20] sm:$0xff]
  %v1039 = vld [vmem:[%s3 + $0x28] sm:$0xff]
  %v1040 = vld [vmem:[%s3 + $0x30] sm:$0xff]
  %v1041 = vld [vmem:[%s3 + $0x38] sm:$0xff]
  %v1042 = vld [vmem:[%s3 + $0x40] sm:$0xff]
  %v1043 = vld [vmem:[%s3 + $0x48] sm:$0xff]
  %v1044 = vld [vmem:[%s3 + $0x50] sm:$0xff]
  %v1045 = vld [vmem:[%s3 + $0x58] sm:$0xff]
  %v1046 = vld [vmem:[%s3 + $0x60] sm:$0xff]
  %v1047 = vld [vmem:[%s3 + $0x68] sm:$0xff]
  %v1048 = vld [vmem:[%s3 + $0x70] sm:$0xff]
  %v1049 = vld [vmem:[%s3 + $0x78] sm:$0xff]
  %s1050 = smul.addr %s725, 8
  %s1051 = scalar_lea.vmem [#allocation2], %s1050
  %v1052 = vld [vmem:[%s1051] sm:$0xff]
  %v1053 = vld [vmem:[%s1051 + $0x8] sm:$0xff]
  %v1055 = vsel %vm378, %v1031, 0
  %1057 = vmatprep.subr.mxu0 %v1035
  %1058 = vmatpush1.msra.mxu0 %v1034
  %1059 = vmatprep.subr.mxu0 %v1037
  %1060 = vmatpush1.msra.mxu0 %v1036
  %1061 = vmatprep.subr.mxu0 %v1039
  %1062 = vmatpush1.msra.mxu0 %v1038
  %1063 = vmatprep.subr.mxu0 %v1041
  %1064 = vmatpush1.msra.mxu0 %v1040
  %1065 = vmatprep.subr.mxu0 %v1043
  %1066 = vmatpush1.msra.mxu0 %v1042
  %1067 = vmatprep.subr.mxu0 %v1045
  %1068 = vmatpush1.msra.mxu0 %v1044
  %1069 = vmatprep.subr.mxu0 %v1047
  %1070 = vmatpush1.msra.mxu0 %v1046
  %1071 = vmatprep.subr.mxu0 %v1049
  %1072 = vmatpush1.msra.mxu0 %v1048
  %1073 = vmatprep.subr.mxu0 0.0
  %1074 = vmatpush1.msra.mxu0 0.0
  %1075 = vmatprep.subr.mxu0 0.0
  %1076 = vmatpush1.msra.mxu0 0.0
  %1077 = vmatprep.subr.mxu0 0.0
  %1078 = vmatpush1.msra.mxu0 0.0
  %1079 = vmatprep.subr.mxu0 0.0
  %1080 = vmatpush1.msra.mxu0 0.0
  %1081 = vmatprep.subr.mxu0 0.0
  %1082 = vmatpush1.msra.mxu0 0.0
  %1083 = vmatprep.subr.mxu0 0.0
  %1084 = vmatpush1.msra.mxu0 0.0
  %1085 = vmatprep.subr.mxu0 0.0
  %1086 = vmatpush1.msra.mxu0 0.0
  %1087 = vmatprep.subr.mxu0 0.0
  %1088 = vmatpush1.msra.mxu0 0.0
  %1089 = vmatprep.subr.mxu0 0.0
  %1090 = vmatpush1.msra.mxu0 0.0
  %1091 = vmatprep.subr.mxu0 0.0
  %1092 = vmatpush1.msra.mxu0 0.0
  %1093 = vmatprep.subr.mxu0 0.0
  %1094 = vmatpush1.msra.mxu0 0.0
  %1095 = vmatprep.subr.mxu0 0.0
  %1096 = vmatpush1.msra.mxu0 0.0
  %1097 = vmatprep.subr.mxu0 0.0
  %1098 = vmatpush1.msra.mxu0 0.0
  %1099 = vmatprep.subr.mxu0 0.0
  %1100 = vmatpush1.msra.mxu0 0.0
  %1101 = vmatprep.subr.mxu0 0.0
  %1102 = vmatpush1.msra.mxu0 0.0
  %1103 = vmatprep.subr.mxu0 0.0
  %1104 = vmatpush1.msra.mxu0 0.0
  %1105 = vmatprep.subr.mxu0 0.0
  %1106 = vmatpush1.msra.mxu0 0.0
  %1107 = vmatprep.subr.mxu0 0.0
  %1108 = vmatpush1.msra.mxu0 0.0
  %1109 = vmatprep.subr.mxu0 0.0
  %1110 = vmatpush1.msra.mxu0 0.0
  %1111 = vmatprep.subr.mxu0 0.0
  %1112 = vmatpush1.msra.mxu0 0.0
  %1113 = vmatprep.subr.mxu0 0.0
  %1114 = vmatpush1.msra.mxu0 0.0
  %1115 = vmatprep.subr.mxu0 0.0
  %1116 = vmatpush1.msra.mxu0 0.0
  %1117 = vmatprep.subr.mxu0 0.0
  %1118 = vmatpush1.msra.mxu0 0.0
  %1119 = vmatprep.subr.mxu0 0.0
  %1120 = vmatpush1.msra.mxu0 0.0
  %1121 = vmatprep.mubr.f32.mxu0 0.0
  %1122 = vmatmul.mubr.f32.gmra.mrb[0].mxu0 %v1055
  %v1123 = vpop.f32.mrb[0].mxu0
  %v1124 = vadd.f32 %v1052, %v1123
  %v1125 = vpop.f32.mrb[0].mxu0
  %v1126 = vadd.f32 %v1053, %v1125
  %1127 = vdwg.mxu0
  %s1128 = smul.addr %s646, 8
  %s1129 = scalar_lea.vmem [#allocation3], %s1128
  %v1130 = vld [vmem:[%s1129] sm:$0xff]
  %v1131 = vld [vmem:[%s1129 + $0x8] sm:$0xff]
  %v1132 = vadd.f32 %v1124, %v1130
  %v1133 = vadd.f32 %v1126, %v1131
  %v1134 = vxor.u32 %v1132, 2147483648
  %v1135 = vxor.u32 %v1133, 2147483648
  %v1136 = vmul.f32 %v1134, 1.442695
  %v1137 = vpow.pop %v1136
  %v1138 = vmul.f32 %v1135, 1.442695
  %v1139 = vpow.pop %v1138
  %v1140 = vadd.f32 %v1137, 1.0
  %v1141 = vadd.f32 %v1139, 1.0
  %v1142 = vrcp.pop %v1140
  %v1143 = vmul.f32 1.0, %v1142
  %v1144 = vrcp.pop %v1141
  %v1145 = vmul.f32 1.0, %v1144
  %v1146 = vtanh.pop %v1133
  %v1147 = vmul.f32 %v1143, %v1025
  %1149 = vrot.lane.b32.xlu0 %v1146, 64
  %v1150 = vpop.permute.xlu0 %1149
  %v1152 = vmul.f32 %v1143, %v1150
  %1154 = vrot.lane.b32.xlu0 %v1152, 64
  %v1155 = vpop.permute.xlu0 %1154
  %v1157 = vadd.f32 %v1147, %v1155
  %v1158 = vtanh.pop %v1157
  %1160 = vrot.lane.b32.xlu0 %v1158, 64
  %v1161 = vpop.permute.xlu0 %1160
  %v1163 = vmul.f32 %v1145, %v1161
  %1164 = vst.msk [vmem:[%s764] sm:$0xff] %vm66, %v1163
  %1165 = vst.msk [vmem:[%s762] sm:$0xff] %vm492, %v1163
  %v1166 = vld [vmem:[%s3] sm:$0xff]
  %v1167 = vld [vmem:[%s3 + $0x8] sm:$0xff]
  %v1168 = vld [vmem:[%s3 + $0x10] sm:$0xff]
  %v1169 = vld [vmem:[%s3 + $0x18] sm:$0xff]
  %v1170 = vld [vmem:[%s3 + $0x20] sm:$0xff]
  %v1171 = vld [vmem:[%s3 + $0x28] sm:$0xff]
  %v1172 = vld [vmem:[%s3 + $0x30] sm:$0xff]
  %v1173 = vld [vmem:[%s3 + $0x38] sm:$0xff]
  %v1174 = vld [vmem:[%s3 + $0x40] sm:$0xff]
  %v1175 = vld [vmem:[%s3 + $0x48] sm:$0xff]
  %v1176 = vld [vmem:[%s3 + $0x50] sm:$0xff]
  %v1177 = vld [vmem:[%s3 + $0x58] sm:$0xff]
  %v1178 = vld [vmem:[%s3 + $0x60] sm:$0xff]
  %v1179 = vld [vmem:[%s3 + $0x68] sm:$0xff]
  %v1180 = vld [vmem:[%s3 + $0x70] sm:$0xff]
  %v1181 = vld [vmem:[%s3 + $0x78] sm:$0xff]
  %s1182 = smul.addr %s589, 8
  %s1183 = scalar_lea.vmem [#allocation2], %s1182
  %v1184 = vld [vmem:[%s1183] sm:$0xff]
  %v1185 = vld [vmem:[%s1183 + $0x8] sm:$0xff]
  %v1187 = vsel %vm378, %v1163, 0
  %1189 = vmatprep.subr.mxu0 %v1167
  %1190 = vmatpush1.msra.mxu0 %v1166
  %1191 = vmatprep.subr.mxu0 %v1169
  %1192 = vmatpush1.msra.mxu0 %v1168
  %1193 = vmatprep.subr.mxu0 %v1171
  %1194 = vmatpush1.msra.mxu0 %v1170
  %1195 = vmatprep.subr.mxu0 %v1173
  %1196 = vmatpush1.msra.mxu0 %v1172
  %1197 = vmatprep.subr.mxu0 %v1175
  %1198 = vmatpush1.msra.mxu0 %v1174
  %1199 = vmatprep.subr.mxu0 %v1177
  %1200 = vmatpush1.msra.mxu0 %v1176
  %1201 = vmatprep.subr.mxu0 %v1179
  %1202 = vmatpush1.msra.mxu0 %v1178
  %1203 = vmatprep.subr.mxu0 %v1181
  %1204 = vmatpush1.msra.mxu0 %v1180
  %1205 = vmatprep.subr.mxu0 0.0
  %1206 = vmatpush1.msra.mxu0 0.0
  %1207 = vmatprep.subr.mxu0 0.0
  %1208 = vmatpush1.msra.mxu0 0.0
  %1209 = vmatprep.subr.mxu0 0.0
  %1210 = vmatpush1.msra.mxu0 0.0
  %1211 = vmatprep.subr.mxu0 0.0
  %1212 = vmatpush1.msra.mxu0 0.0
  %1213 = vmatprep.subr.mxu0 0.0
  %1214 = vmatpush1.msra.mxu0 0.0
  %1215 = vmatprep.subr.mxu0 0.0
  %1216 = vmatpush1.msra.mxu0 0.0
  %1217 = vmatprep.subr.mxu0 0.0
  %1218 = vmatpush1.msra.mxu0 0.0
  %1219 = vmatprep.subr.mxu0 0.0
  %1220 = vmatpush1.msra.mxu0 0.0
  %1221 = vmatprep.subr.mxu0 0.0
  %1222 = vmatpush1.msra.mxu0 0.0
  %1223 = vmatprep.subr.mxu0 0.0
  %1224 = vmatpush1.msra.mxu0 0.0
  %1225 = vmatprep.subr.mxu0 0.0
  %1226 = vmatpush1.msra.mxu0 0.0
  %1227 = vmatprep.subr.mxu0 0.0
  %1228 = vmatpush1.msra.mxu0 0.0
  %1229 = vmatprep.subr.mxu0 0.0
  %1230 = vmatpush1.msra.mxu0 0.0
  %1231 = vmatprep.subr.mxu0 0.0
  %1232 = vmatpush1.msra.mxu0 0.0
  %1233 = vmatprep.subr.mxu0 0.0
  %1234 = vmatpush1.msra.mxu0 0.0
  %1235 = vmatprep.subr.mxu0 0.0
  %1236 = vmatpush1.msra.mxu0 0.0
  %1237 = vmatprep.subr.mxu0 0.0
  %1238 = vmatpush1.msra.mxu0 0.0
  %1239 = vmatprep.subr.mxu0 0.0
  %1240 = vmatpush1.msra.mxu0 0.0
  %1241 = vmatprep.subr.mxu0 0.0
  %1242 = vmatpush1.msra.mxu0 0.0
  %1243 = vmatprep.subr.mxu0 0.0
  %1244 = vmatpush1.msra.mxu0 0.0
  %1245 = vmatprep.subr.mxu0 0.0
  %1246 = vmatpush1.msra.mxu0 0.0
  %1247 = vmatprep.subr.mxu0 0.0
  %1248 = vmatpush1.msra.mxu0 0.0
  %1249 = vmatprep.subr.mxu0 0.0
  %1250 = vmatpush1.msra.mxu0 0.0
  %1251 = vmatprep.subr.mxu0 0.0
  %1252 = vmatpush1.msra.mxu0 0.0
  %1253 = vmatprep.mubr.f32.mxu0 0.0
  %1254 = vmatmul.mubr.f32.gmra.mrb[0].mxu0 %v1187
  %v1255 = vpop.f32.mrb[0].mxu0
  %v1256 = vadd.f32 %v1184, %v1255
  %v1257 = vpop.f32.mrb[0].mxu0
  %v1258 = vadd.f32 %v1185, %v1257
  %1259 = vdwg.mxu0
  %s1260 = smul.addr %s510, 8
  %s1261 = scalar_lea.vmem [#allocation3], %s1260
  %v1262 = vld [vmem:[%s1261] sm:$0xff]
  %v1263 = vld [vmem:[%s1261 + $0x8] sm:$0xff]
  %v1264 = vadd.f32 %v1256, %v1262
  %v1265 = vadd.f32 %v1258, %v1263
  %v1266 = vxor.u32 %v1264, 2147483648
  %v1267 = vxor.u32 %v1265, 2147483648
  %v1268 = vmul.f32 %v1266, 1.442695
  %v1269 = vpow.pop %v1268
  %v1270 = vmul.f32 %v1267, 1.442695
  %v1271 = vpow.pop %v1270
  %v1272 = vadd.f32 %v1269, 1.0
  %v1273 = vadd.f32 %v1271, 1.0
  %v1274 = vrcp.pop %v1272
  %v1275 = vmul.f32 1.0, %v1274
  %v1276 = vrcp.pop %v1273
  %v1277 = vmul.f32 1.0, %v1276
  %v1278 = vtanh.pop %v1265
  %v1279 = vmul.f32 %v1275, %v1157
  %1281 = vrot.lane.b32.xlu0 %v1278, 64
  %v1282 = vpop.permute.xlu0 %1281
  %v1284 = vmul.f32 %v1275, %v1282
  %1286 = vrot.lane.b32.xlu0 %v1284, 64
  %v1287 = vpop.permute.xlu0 %1286
  %v1289 = vadd.f32 %v1279, %v1287
  %v1290 = vtanh.pop %v1289
  %1292 = vrot.lane.b32.xlu0 %v1290, 64
  %v1293 = vpop.permute.xlu0 %1292
  %v1295 = vmul.f32 %v1277, %v1293
  %1296 = vst.msk [vmem:[%s628] sm:$0xff] %vm66, %v1295
  %1297 = vst.msk [vmem:[%s626] sm:$0xff] %vm492, %v1295
  %v1298 = vld [vmem:[%s3] sm:$0xff]
  %v1299 = vld [vmem:[%s3 + $0x8] sm:$0xff]
  %v1300 = vld [vmem:[%s3 + $0x10] sm:$0xff]
  %v1301 = vld [vmem:[%s3 + $0x18] sm:$0xff]
  %v1302 = vld [vmem:[%s3 + $0x20] sm:$0xff]
  %v1303 = vld [vmem:[%s3 + $0x28] sm:$0xff]
  %v1304 = vld [vmem:[%s3 + $0x30] sm:$0xff]
  %v1305 = vld [vmem:[%s3 + $0x38] sm:$0xff]
  %v1306 = vld [vmem:[%s3 + $0x40] sm:$0xff]
  %v1307 = vld [vmem:[%s3 + $0x48] sm:$0xff]
  %v1308 = vld [vmem:[%s3 + $0x50] sm:$0xff]
  %v1309 = vld [vmem:[%s3 + $0x58] sm:$0xff]
  %v1310 = vld [vmem:[%s3 + $0x60] sm:$0xff]
  %v1311 = vld [vmem:[%s3 + $0x68] sm:$0xff]
  %v1312 = vld [vmem:[%s3 + $0x70] sm:$0xff]
  %v1313 = vld [vmem:[%s3 + $0x78] sm:$0xff]
  %s1314 = smul.addr %s453, 8
  %s1315 = scalar_lea.vmem [#allocation2], %s1314
  %v1316 = vld [vmem:[%s1315] sm:$0xff]
  %v1317 = vld [vmem:[%s1315 + $0x8] sm:$0xff]
  %v1319 = vsel %vm378, %v1295, 0
  %1321 = vmatprep.subr.mxu0 %v1299
  %1322 = vmatpush1.msra.mxu0 %v1298
  %1323 = vmatprep.subr.mxu0 %v1301
  %1324 = vmatpush1.msra.mxu0 %v1300
  %1325 = vmatprep.subr.mxu0 %v1303
  %1326 = vmatpush1.msra.mxu0 %v1302
  %1327 = vmatprep.subr.mxu0 %v1305
  %1328 = vmatpush1.msra.mxu0 %v1304
  %1329 = vmatprep.subr.mxu0 %v1307
  %1330 = vmatpush1.msra.mxu0 %v1306
  %1331 = vmatprep.subr.mxu0 %v1309
  %1332 = vmatpush1.msra.mxu0 %v1308
  %1333 = vmatprep.subr.mxu0 %v1311
  %1334 = vmatpush1.msra.mxu0 %v1310
  %1335 = vmatprep.subr.mxu0 %v1313
  %1336 = vmatpush1.msra.mxu0 %v1312
  %1337 = vmatprep.subr.mxu0 0.0
  %1338 = vmatpush1.msra.mxu0 0.0
  %1339 = vmatprep.subr.mxu0 0.0
  %1340 = vmatpush1.msra.mxu0 0.0
  %1341 = vmatprep.subr.mxu0 0.0
  %1342 = vmatpush1.msra.mxu0 0.0
  %1343 = vmatprep.subr.mxu0 0.0
  %1344 = vmatpush1.msra.mxu0 0.0
  %1345 = vmatprep.subr.mxu0 0.0
  %1346 = vmatpush1.msra.mxu0 0.0
  %1347 = vmatprep.subr.mxu0 0.0
  %1348 = vmatpush1.msra.mxu0 0.0
  %1349 = vmatprep.subr.mxu0 0.0
  %1350 = vmatpush1.msra.mxu0 0.0
  %1351 = vmatprep.subr.mxu0 0.0
  %1352 = vmatpush1.msra.mxu0 0.0
  %1353 = vmatprep.subr.mxu0 0.0
  %1354 = vmatpush1.msra.mxu0 0.0
  %1355 = vmatprep.subr.mxu0 0.0
  %1356 = vmatpush1.msra.mxu0 0.0
  %1357 = vmatprep.subr.mxu0 0.0
  %1358 = vmatpush1.msra.mxu0 0.0
  %1359 = vmatprep.subr.mxu0 0.0
  %1360 = vmatpush1.msra.mxu0 0.0
  %1361 = vmatprep.subr.mxu0 0.0
  %1362 = vmatpush1.msra.mxu0 0.0
  %1363 = vmatprep.subr.mxu0 0.0
  %1364 = vmatpush1.msra.mxu0 0.0
  %1365 = vmatprep.subr.mxu0 0.0
  %1366 = vmatpush1.msra.mxu0 0.0
  %1367 = vmatprep.subr.mxu0 0.0
  %1368 = vmatpush1.msra.mxu0 0.0
  %1369 = vmatprep.subr.mxu0 0.0
  %1370 = vmatpush1.msra.mxu0 0.0
  %1371 = vmatprep.subr.mxu0 0.0
  %1372 = vmatpush1.msra.mxu0 0.0
  %1373 = vmatprep.subr.mxu0 0.0
  %1374 = vmatpush1.msra.mxu0 0.0
  %1375 = vmatprep.subr.mxu0 0.0
  %1376 = vmatpush1.msra.mxu0 0.0
  %1377 = vmatprep.subr.mxu0 0.0
  %1378 = vmatpush1.msra.mxu0 0.0
  %1379 = vmatprep.subr.mxu0 0.0
  %1380 = vmatpush1.msra.mxu0 0.0
  %1381 = vmatprep.subr.mxu0 0.0
  %1382 = vmatpush1.msra.mxu0 0.0
  %1383 = vmatprep.subr.mxu0 0.0
  %1384 = vmatpush1.msra.mxu0 0.0
  %1385 = vmatprep.mubr.f32.mxu0 0.0
  %1386 = vmatmul.mubr.f32.gmra.mrb[0].mxu0 %v1319
  %v1387 = vpop.f32.mrb[0].mxu0
  %v1388 = vadd.f32 %v1316, %v1387
  %v1389 = vpop.f32.mrb[0].mxu0
  %v1390 = vadd.f32 %v1317, %v1389
  %1391 = vdwg.mxu0
  %s1392 = smul.addr %s373, 8
  %s1393 = scalar_lea.vmem [#allocation3], %s1392
  %v1394 = vld [vmem:[%s1393] sm:$0xff]
  %v1395 = vld [vmem:[%s1393 + $0x8] sm:$0xff]
  %v1396 = vadd.f32 %v1388, %v1394
  %v1397 = vadd.f32 %v1390, %v1395
  %v1398 = vxor.u32 %v1396, 2147483648
  %v1399 = vxor.u32 %v1397, 2147483648
  %v1400 = vmul.f32 %v1398, 1.442695
  %v1401 = vpow.pop %v1400
  %v1402 = vmul.f32 %v1399, 1.442695
  %v1403 = vpow.pop %v1402
  %v1404 = vadd.f32 %v1401, 1.0
  %v1405 = vadd.f32 %v1403, 1.0
  %v1406 = vrcp.pop %v1404
  %v1407 = vmul.f32 1.0, %v1406
  %v1408 = vrcp.pop %v1405
  %v1409 = vmul.f32 1.0, %v1408
  %v1410 = vtanh.pop %v1397
  %v1411 = vmul.f32 %v1407, %v1289
  %1413 = vrot.lane.b32.xlu0 %v1410, 64
  %v1414 = vpop.permute.xlu0 %1413
  %v1416 = vmul.f32 %v1407, %v1414
  %1418 = vrot.lane.b32.xlu0 %v1416, 64
  %v1419 = vpop.permute.xlu0 %1418
  %v1421 = vadd.f32 %v1411, %v1419
  %v1422 = vtanh.pop %v1421
  %1424 = vrot.lane.b32.xlu0 %v1422, 64
  %v1425 = vpop.permute.xlu0 %1424
  %v1427 = vmul.f32 %v1409, %v1425
  %1428 = vst.msk [vmem:[%s491] sm:$0xff] %vm66, %v1427
  %1429 = vst.msk [vmem:[#allocation4] sm:$0xff] %vm492, %v1427
  %v1430 = vld [vmem:[#allocation4] sm:$0xff]
  %v1431 = vld [vmem:[#allocation4 + $0x8] sm:$0xff]
  %v1432 = vld [vmem:[#allocation4 + $0x10] sm:$0xff]
  %v1433 = vld [vmem:[#allocation4 + $0x18] sm:$0xff]
  %v1434 = vld [vmem:[#allocation4 + $0x20] sm:$0xff]
  %v1435 = vld [vmem:[#allocation4 + $0x28] sm:$0xff]
  %v1436 = vld [vmem:[#allocation4 + $0x30] sm:$0xff]
  %v1437 = vld [vmem:[#allocation4 + $0x38] sm:$0xff]
  %v1438 = vld [vmem:[%s5] sm:$0xff]
  %v1439 = vld [vmem:[%s5 + $0x8] sm:$0xff]
  %v1440 = vld [vmem:[%s5 + $0x10] sm:$0xff]
  %v1441 = vld [vmem:[%s5 + $0x18] sm:$0xff]
  %v1442 = vld [vmem:[%s5 + $0x20] sm:$0xff]
  %v1443 = vld [vmem:[%s5 + $0x28] sm:$0xff]
  %v1444 = vld [vmem:[%s5 + $0x30] sm:$0xff]
  %v1445 = vld [vmem:[%s5 + $0x38] sm:$0xff]
  %v1446 = vld [vmem:[%s5 + $0x40] sm:$0xff]
  %v1447 = vld [vmem:[%s5 + $0x48] sm:$0xff]
  %v1448 = vld [vmem:[%s5 + $0x50] sm:$0xff]
  %v1449 = vld [vmem:[%s5 + $0x58] sm:$0xff]
  %v1450 = vld [vmem:[%s5 + $0x60] sm:$0xff]
  %v1451 = vld [vmem:[%s5 + $0x68] sm:$0xff]
  %v1452 = vld [vmem:[%s5 + $0x70] sm:$0xff]
  %v1453 = vld [vmem:[%s5 + $0x78] sm:$0xff]
  %v1454 = vld [vmem:[%s8] sm:$0x3]
  %v1456 = vlaneseq
  %v1457 = vshrl.u32 %v1456, 7
  %v1458 = vsub.s32 0, %v1457
  %v1459 = vrot.slane %v1454, %v1458
  %v1460 = vlaneseq
  %v1461 = vshrl.u32 %v1460, 7
  %v1462 = vsub.s32 1, %v1461
  %v1463 = vrot.slane %v1454, %v1462
  %v1467 = vsel %vm378, %v1430, 0
  %v1470 = vsel %vm378, %v1431, 0
  %v1473 = vsel %vm378, %v1432, 0
  %v1476 = vsel %vm378, %v1433, 0
  %v1479 = vsel %vm378, %v1434, 0
  %v1482 = vsel %vm378, %v1435, 0
  %v1485 = vsel %vm378, %v1436, 0
  %v1488 = vsel %vm378, %v1437, 0
  %1490 = vmatprep.subr.mxu0 %v1439
  %1491 = vmatpush1.msra.mxu0 %v1438
  %1492 = vmatprep.subr.mxu0 %v1441
  %1493 = vmatpush1.msra.mxu0 %v1440
  %1494 = vmatprep.subr.mxu0 %v1443
  %1495 = vmatpush1.msra.mxu0 %v1442
  %1496 = vmatprep.subr.mxu0 %v1445
  %1497 = vmatpush1.msra.mxu0 %v1444
  %1498 = vmatprep.subr.mxu0 %v1447
  %1499 = vmatpush1.msra.mxu0 %v1446
  %1500 = vmatprep.subr.mxu0 %v1449
  %1501 = vmatpush1.msra.mxu0 %v1448
  %1502 = vmatprep.subr.mxu0 %v1451
  %1503 = vmatpush1.msra.mxu0 %v1450
  %1504 = vmatprep.subr.mxu0 %v1453
  %1505 = vmatpush1.msra.mxu0 %v1452
  %1506 = vmatprep.subr.mxu0 0.0
  %1507 = vmatpush1.msra.mxu0 0.0
  %1508 = vmatprep.subr.mxu0 0.0
  %1509 = vmatpush1.msra.mxu0 0.0
  %1510 = vmatprep.subr.mxu0 0.0
  %1511 = vmatpush1.msra.mxu0 0.0
  %1512 = vmatprep.subr.mxu0 0.0
  %1513 = vmatpush1.msra.mxu0 0.0
  %1514 = vmatprep.subr.mxu0 0.0
  %1515 = vmatpush1.msra.mxu0 0.0
  %1516 = vmatprep.subr.mxu0 0.0
  %1517 = vmatpush1.msra.mxu0 0.0
  %1518 = vmatprep.subr.mxu0 0.0
  %1519 = vmatpush1.msra.mxu0 0.0
  %1520 = vmatprep.subr.mxu0 0.0
  %1521 = vmatpush1.msra.mxu0 0.0
  %1522 = vmatprep.subr.mxu0 0.0
  %1523 = vmatpush1.msra.mxu0 0.0
  %1524 = vmatprep.subr.mxu0 0.0
  %1525 = vmatpush1.msra.mxu0 0.0
  %1526 = vmatprep.subr.mxu0 0.0
  %1527 = vmatpush1.msra.mxu0 0.0
  %1528 = vmatprep.subr.mxu0 0.0
  %1529 = vmatpush1.msra.mxu0 0.0
  %1530 = vmatprep.subr.mxu0 0.0
  %1531 = vmatpush1.msra.mxu0 0.0
  %1532 = vmatprep.subr.mxu0 0.0
  %1533 = vmatpush1.msra.mxu0 0.0
  %1534 = vmatprep.subr.mxu0 0.0
  %1535 = vmatpush1.msra.mxu0 0.0
  %1536 = vmatprep.subr.mxu0 0.0
  %1537 = vmatpush1.msra.mxu0 0.0
  %1538 = vmatprep.subr.mxu0 0.0
  %1539 = vmatpush1.msra.mxu0 0.0
  %1540 = vmatprep.subr.mxu0 0.0
  %1541 = vmatpush1.msra.mxu0 0.0
  %1542 = vmatprep.subr.mxu0 0.0
  %1543 = vmatpush1.msra.mxu0 0.0
  %1544 = vmatprep.subr.mxu0 0.0
  %1545 = vmatpush1.msra.mxu0 0.0
  %1546 = vmatprep.subr.mxu0 0.0
  %1547 = vmatpush1.msra.mxu0 0.0
  %1548 = vmatprep.subr.mxu0 0.0
  %1549 = vmatpush1.msra.mxu0 0.0
  %1550 = vmatprep.subr.mxu0 0.0
  %1551 = vmatpush1.msra.mxu0 0.0
  %1552 = vmatprep.subr.mxu0 0.0
  %1553 = vmatpush1.msra.mxu0 0.0
  %1554 = vmatprep.mubr.f32.mxu0 0.0
  %1555 = vmatmul.mubr.f32.gmra.mrb[0].mxu0 %v1467
  %v1556 = vpop.f32.mrb[0].mxu0
  %v1557 = vadd.f32 %v1459, %v1556
  %v1558 = vpop.f32.mrb[0].mxu0
  %v1559 = vadd.f32 %v1463, %v1558
  %1560 = vmatprep.mubr.f32.mxu0 0.0
  %1561 = vmatmul.mubr.f32.gmra.mrb[0].mxu0 %v1470
  %v1562 = vpop.f32.mrb[0].mxu0
  %v1563 = vadd.f32 %v1459, %v1562
  %v1564 = vpop.f32.mrb[0].mxu0
  %v1565 = vadd.f32 %v1463, %v1564
  %1566 = vmatprep.mubr.f32.mxu0 0.0
  %1567 = vmatmul.mubr.f32.gmra.mrb[0].mxu0 %v1473
  %v1568 = vpop.f32.mrb[0].mxu0
  %v1569 = vadd.f32 %v1459, %v1568
  %v1570 = vpop.f32.mrb[0].mxu0
  %v1571 = vadd.f32 %v1463, %v1570
  %1572 = vmatprep.mubr.f32.mxu0 0.0
  %1573 = vmatmul.mubr.f32.gmra.mrb[0].mxu0 %v1476
  %v1574 = vpop.f32.mrb[0].mxu0
  %v1575 = vadd.f32 %v1459, %v1574
  %v1576 = vpop.f32.mrb[0].mxu0
  %v1577 = vadd.f32 %v1463, %v1576
  %1578 = vmatprep.mubr.f32.mxu0 0.0
  %1579 = vmatmul.mubr.f32.gmra.mrb[0].mxu0 %v1479
  %v1580 = vpop.f32.mrb[0].mxu0
  %v1581 = vadd.f32 %v1459, %v1580
  %v1582 = vpop.f32.mrb[0].mxu0
  %v1583 = vadd.f32 %v1463, %v1582
  %1584 = vmatprep.mubr.f32.mxu0 0.0
  %1585 = vmatmul.mubr.f32.gmra.mrb[0].mxu0 %v1482
  %v1586 = vpop.f32.mrb[0].mxu0
  %v1587 = vadd.f32 %v1459, %v1586
  %v1588 = vpop.f32.mrb[0].mxu0
  %v1589 = vadd.f32 %v1463, %v1588
  %1590 = vmatprep.mubr.f32.mxu0 0.0
  %1591 = vmatmul.mubr.f32.gmra.mrb[0].mxu0 %v1485
  %v1592 = vpop.f32.mrb[0].mxu0
  %v1593 = vadd.f32 %v1459, %v1592
  %v1594 = vpop.f32.mrb[0].mxu0
  %v1595 = vadd.f32 %v1463, %v1594
  %1596 = vmatprep.mubr.f32.mxu0 0.0
  %1597 = vmatmul.mubr.f32.gmra.mrb[0].mxu0 %v1488
  %v1598 = vpop.f32.mrb[0].mxu0
  %v1599 = vadd.f32 %v1459, %v1598
  %v1600 = vpop.f32.mrb[0].mxu0
  %v1601 = vadd.f32 %v1463, %v1600
  %1602 = vdwg.mxu0
  %1603 = vst [vmem:[#allocation2] sm:$0xff] %v1557
  %1604 = vst [vmem:[#allocation2 + $0x8] sm:$0xff] %v1559
  %1605 = vst [vmem:[#allocation2 + $0x10] sm:$0xff] %v1563
  %1606 = vst [vmem:[#allocation2 + $0x18] sm:$0xff] %v1565
  %1607 = vst [vmem:[#allocation2 + $0x20] sm:$0xff] %v1569
  %1608 = vst [vmem:[#allocation2 + $0x28] sm:$0xff] %v1571
  %1609 = vst [vmem:[#allocation2 + $0x30] sm:$0xff] %v1575
  %1610 = vst [vmem:[#allocation2 + $0x38] sm:$0xff] %v1577
  %1611 = vst [vmem:[#allocation2 + $0x40] sm:$0xff] %v1581
  %1612 = vst [vmem:[#allocation2 + $0x48] sm:$0xff] %v1583
  %1613 = vst [vmem:[#allocation2 + $0x50] sm:$0xff] %v1587
  %1614 = vst [vmem:[#allocation2 + $0x58] sm:$0xff] %v1589
  %1615 = vst [vmem:[#allocation2 + $0x60] sm:$0xff] %v1593
  %1616 = vst [vmem:[#allocation2 + $0x68] sm:$0xff] %v1595
  %1617 = vst [vmem:[#allocation2 + $0x70] sm:$0xff] %v1599
  %1618 = vst [vmem:[#allocation2 + $0x78] sm:$0xff] %v1601
  %v1619 = vld [vmem:[%s6] sm:$0xff]
  %v1620 = vld [vmem:[%s6 + $0x8] sm:$0xff]
  %v1621 = vld [vmem:[%s6 + $0x10] sm:$0xff]
  %v1622 = vld [vmem:[%s6 + $0x18] sm:$0xff]
  %v1623 = vld [vmem:[%s6 + $0x20] sm:$0xff]
  %v1624 = vld [vmem:[%s6 + $0x28] sm:$0xff]
  %v1625 = vld [vmem:[%s6 + $0x30] sm:$0xff]
  %v1626 = vld [vmem:[%s6 + $0x38] sm:$0xff]
  %v1627 = vld [vmem:[%s6 + $0x40] sm:$0xff]
  %v1628 = vld [vmem:[%s6 + $0x48] sm:$0xff]
  %v1629 = vld [vmem:[%s6 + $0x50] sm:$0xff]
  %v1630 = vld [vmem:[%s6 + $0x58] sm:$0xff]
  %v1631 = vld [vmem:[%s6 + $0x60] sm:$0xff]
  %v1632 = vld [vmem:[%s6 + $0x68] sm:$0xff]
  %v1633 = vld [vmem:[%s6 + $0x70] sm:$0xff]
  %v1634 = vld [vmem:[%s6 + $0x78] sm:$0xff]
  %1635 = vmatprep.subr.mxu0 %v1620
  %1636 = vmatpush1.msra.mxu0 %v1619
  %1637 = vmatprep.subr.mxu0 %v1622
  %1638 = vmatpush1.msra.mxu0 %v1621
  %1639 = vmatprep.subr.mxu0 %v1624
  %1640 = vmatpush1.msra.mxu0 %v1623
  %1641 = vmatprep.subr.mxu0 %v1626
  %1642 = vmatpush1.msra.mxu0 %v1625
  %1643 = vmatprep.subr.mxu0 %v1628
  %1644 = vmatpush1.msra.mxu0 %v1627
  %1645 = vmatprep.subr.mxu0 %v1630
  %1646 = vmatpush1.msra.mxu0 %v1629
  %1647 = vmatprep.subr.mxu0 %v1632
  %1648 = vmatpush1.msra.mxu0 %v1631
  %1649 = vmatprep.subr.mxu0 %v1634
  %1650 = vmatpush1.msra.mxu0 %v1633
  %1651 = vmatprep.subr.mxu0 0.0
  %1652 = vmatpush1.msra.mxu0 0.0
  %1653 = vmatprep.subr.mxu0 0.0
  %1654 = vmatpush1.msra.mxu0 0.0
  %1655 = vmatprep.subr.mxu0 0.0
  %1656 = vmatpush1.msra.mxu0 0.0
  %1657 = vmatprep.subr.mxu0 0.0
  %1658 = vmatpush1.msra.mxu0 0.0
  %1659 = vmatprep.subr.mxu0 0.0
  %1660 = vmatpush1.msra.mxu0 0.0
  %1661 = vmatprep.subr.mxu0 0.0
  %1662 = vmatpush1.msra.mxu0 0.0
  %1663 = vmatprep.subr.mxu0 0.0
  %1664 = vmatpush1.msra.mxu0 0.0
  %1665 = vmatprep.subr.mxu0 0.0
  %1666 = vmatpush1.msra.mxu0 0.0
  %1667 = vmatprep.subr.mxu0 0.0
  %1668 = vmatpush1.msra.mxu0 0.0
  %1669 = vmatprep.subr.mxu0 0.0
  %1670 = vmatpush1.msra.mxu0 0.0
  %1671 = vmatprep.subr.mxu0 0.0
  %1672 = vmatpush1.msra.mxu0 0.0
  %1673 = vmatprep.subr.mxu0 0.0
  %1674 = vmatpush1.msra.mxu0 0.0
  %1675 = vmatprep.subr.mxu0 0.0
  %1676 = vmatpush1.msra.mxu0 0.0
  %1677 = vmatprep.subr.mxu0 0.0
  %1678 = vmatpush1.msra.mxu0 0.0
  %1679 = vmatprep.subr.mxu0 0.0
  %1680 = vmatpush1.msra.mxu0 0.0
  %1681 = vmatprep.subr.mxu0 0.0
  %1682 = vmatpush1.msra.mxu0 0.0
  %1683 = vmatprep.subr.mxu0 0.0
  %1684 = vmatpush1.msra.mxu0 0.0
  %1685 = vmatprep.subr.mxu0 0.0
  %1686 = vmatpush1.msra.mxu0 0.0
  %1687 = vmatprep.subr.mxu0 0.0
  %1688 = vmatpush1.msra.mxu0 0.0
  %1689 = vmatprep.subr.mxu0 0.0
  %1690 = vmatpush1.msra.mxu0 0.0
  %1691 = vmatprep.subr.mxu0 0.0
  %1692 = vmatpush1.msra.mxu0 0.0
  %1693 = vmatprep.subr.mxu0 0.0
  %1694 = vmatpush1.msra.mxu0 0.0
  %1695 = vmatprep.subr.mxu0 0.0
  %1696 = vmatpush1.msra.mxu0 0.0
  %1697 = vmatprep.subr.mxu0 0.0
  %1698 = vmatpush1.msra.mxu0 0.0
  %1699 = vmatprep.mubr.f32.mxu0 0.0
  %1700 = vmatmul.mubr.f32.gmra.mrb[0].mxu0 %v1467
  %v1701 = vpop.f32.mrb[0].mxu0
  %v1702 = vadd.f32 0.0, %v1701
  %v1703 = vpop.f32.mrb[0].mxu0
  %v1704 = vadd.f32 0.0, %v1703
  %1705 = vmatprep.mubr.f32.mxu0 0.0
  %1706 = vmatmul.mubr.f32.gmra.mrb[0].mxu0 %v1470
  %v1707 = vpop.f32.mrb[0].mxu0
  %v1708 = vadd.f32 0.0, %v1707
  %v1709 = vpop.f32.mrb[0].mxu0
  %v1710 = vadd.f32 0.0, %v1709
  %1711 = vmatprep.mubr.f32.mxu0 0.0
  %1712 = vmatmul.mubr.f32.gmra.mrb[0].mxu0 %v1473
  %v1713 = vpop.f32.mrb[0].mxu0
  %v1714 = vadd.f32 0.0, %v1713
  %v1715 = vpop.f32.mrb[0].mxu0
  %v1716 = vadd.f32 0.0, %v1715
  %1717 = vmatprep.mubr.f32.mxu0 0.0
  %1718 = vmatmul.mubr.f32.gmra.mrb[0].mxu0 %v1476
  %v1719 = vpop.f32.mrb[0].mxu0
  %v1720 = vadd.f32 0.0, %v1719
  %v1721 = vpop.f32.mrb[0].mxu0
  %v1722 = vadd.f32 0.0, %v1721
  %1723 = vmatprep.mubr.f32.mxu0 0.0
  %1724 = vmatmul.mubr.f32.gmra.mrb[0].mxu0 %v1479
  %v1725 = vpop.f32.mrb[0].mxu0
  %v1726 = vadd.f32 0.0, %v1725
  %v1727 = vpop.f32.mrb[0].mxu0
  %v1728 = vadd.f32 0.0, %v1727
  %1729 = vmatprep.mubr.f32.mxu0 0.0
  %1730 = vmatmul.mubr.f32.gmra.mrb[0].mxu0 %v1482
  %v1731 = vpop.f32.mrb[0].mxu0
  %v1732 = vadd.f32 0.0, %v1731
  %v1733 = vpop.f32.mrb[0].mxu0
  %v1734 = vadd.f32 0.0, %v1733
  %1735 = vmatprep.mubr.f32.mxu0 0.0
  %1736 = vmatmul.mubr.f32.gmra.mrb[0].mxu0 %v1485
  %v1737 = vpop.f32.mrb[0].mxu0
  %v1738 = vadd.f32 0.0, %v1737
  %v1739 = vpop.f32.mrb[0].mxu0
  %v1740 = vadd.f32 0.0, %v1739
  %1741 = vmatprep.mubr.f32.mxu0 0.0
  %1742 = vmatmul.mubr.f32.gmra.mrb[0].mxu0 %v1488
  %v1743 = vpop.f32.mrb[0].mxu0
  %v1744 = vadd.f32 0.0, %v1743
  %v1745 = vpop.f32.mrb[0].mxu0
  %v1746 = vadd.f32 0.0, %v1745
  %1747 = vdwg.mxu0
  %1748 = vst [vmem:[#allocation3] sm:$0xff] %v1702
  %1749 = vst [vmem:[#allocation3 + $0x8] sm:$0xff] %v1704
  %1750 = vst [vmem:[#allocation3 + $0x10] sm:$0xff] %v1708
  %1751 = vst [vmem:[#allocation3 + $0x18] sm:$0xff] %v1710
  %1752 = vst [vmem:[#allocation3 + $0x20] sm:$0xff] %v1714
  %1753 = vst [vmem:[#allocation3 + $0x28] sm:$0xff] %v1716
  %1754 = vst [vmem:[#allocation3 + $0x30] sm:$0xff] %v1720
  %1755 = vst [vmem:[#allocation3 + $0x38] sm:$0xff] %v1722
  %1756 = vst [vmem:[#allocation3 + $0x40] sm:$0xff] %v1726
  %1757 = vst [vmem:[#allocation3 + $0x48] sm:$0xff] %v1728
  %1758 = vst [vmem:[#allocation3 + $0x50] sm:$0xff] %v1732
  %1759 = vst [vmem:[#allocation3 + $0x58] sm:$0xff] %v1734
  %1760 = vst [vmem:[#allocation3 + $0x60] sm:$0xff] %v1738
  %1761 = vst [vmem:[#allocation3 + $0x68] sm:$0xff] %v1740
  %1762 = vst [vmem:[#allocation3 + $0x70] sm:$0xff] %v1744
  %1763 = vst [vmem:[#allocation3 + $0x78] sm:$0xff] %v1746
  %v1764 = vld [vmem:[%s7] sm:$0xff]
  %v1765 = vld [vmem:[%s7 + $0x8] sm:$0xff]
  %v1766 = vld [vmem:[%s7 + $0x10] sm:$0xff]
  %v1767 = vld [vmem:[%s7 + $0x18] sm:$0xff]
  %v1768 = vld [vmem:[%s7 + $0x20] sm:$0xff]
  %v1769 = vld [vmem:[%s7 + $0x28] sm:$0xff]
  %v1770 = vld [vmem:[%s7 + $0x30] sm:$0xff]
  %v1771 = vld [vmem:[%s7 + $0x38] sm:$0xff]
  %v1772 = vld [vmem:[%s7 + $0x40] sm:$0xff]
  %v1773 = vld [vmem:[%s7 + $0x48] sm:$0xff]
  %v1774 = vld [vmem:[%s7 + $0x50] sm:$0xff]
  %v1775 = vld [vmem:[%s7 + $0x58] sm:$0xff]
  %v1776 = vld [vmem:[%s7 + $0x60] sm:$0xff]
  %v1777 = vld [vmem:[%s7 + $0x68] sm:$0xff]
  %v1778 = vld [vmem:[%s7 + $0x70] sm:$0xff]
  %v1779 = vld [vmem:[%s7 + $0x78] sm:$0xff]
  %v1780 = vld [vmem:[%s375] sm:$0xff]
  %v1781 = vld [vmem:[%s375 + $0x8] sm:$0xff]
  %1782 = vmatprep.subr.mxu0 %v1765
  %1783 = vmatpush1.msra.mxu0 %v1764
  %1784 = vmatprep.subr.mxu0 %v1767
  %1785 = vmatpush1.msra.mxu0 %v1766
  %1786 = vmatprep.subr.mxu0 %v1769
  %1787 = vmatpush1.msra.mxu0 %v1768
  %1788 = vmatprep.subr.mxu0 %v1771
  %1789 = vmatpush1.msra.mxu0 %v1770
  %1790 = vmatprep.subr.mxu0 %v1773
  %1791 = vmatpush1.msra.mxu0 %v1772
  %1792 = vmatprep.subr.mxu0 %v1775
  %1793 = vmatpush1.msra.mxu0 %v1774
  %1794 = vmatprep.subr.mxu0 %v1777
  %1795 = vmatpush1.msra.mxu0 %v1776
  %1796 = vmatprep.subr.mxu0 %v1779
  %1797 = vmatpush1.msra.mxu0 %v1778
  %1798 = vmatprep.subr.mxu0 0.0
  %1799 = vmatpush1.msra.mxu0 0.0
  %1800 = vmatprep.subr.mxu0 0.0
  %1801 = vmatpush1.msra.mxu0 0.0
  %1802 = vmatprep.subr.mxu0 0.0
  %1803 = vmatpush1.msra.mxu0 0.0
  %1804 = vmatprep.subr.mxu0 0.0
  %1805 = vmatpush1.msra.mxu0 0.0
  %1806 = vmatprep.subr.mxu0 0.0
  %1807 = vmatpush1.msra.mxu0 0.0
  %1808 = vmatprep.subr.mxu0 0.0
  %1809 = vmatpush1.msra.mxu0 0.0
  %1810 = vmatprep.subr.mxu0 0.0
  %1811 = vmatpush1.msra.mxu0 0.0
  %1812 = vmatprep.subr.mxu0 0.0
  %1813 = vmatpush1.msra.mxu0 0.0
  %1814 = vmatprep.subr.mxu0 0.0
  %1815 = vmatpush1.msra.mxu0 0.0
  %1816 = vmatprep.subr.mxu0 0.0
  %1817 = vmatpush1.msra.mxu0 0.0
  %1818 = vmatprep.subr.mxu0 0.0
  %1819 = vmatpush1.msra.mxu0 0.0
  %1820 = vmatprep.subr.mxu0 0.0
  %1821 = vmatpush1.msra.mxu0 0.0
  %1822 = vmatprep.subr.mxu0 0.0
  %1823 = vmatpush1.msra.mxu0 0.0
  %1824 = vmatprep.subr.mxu0 0.0
  %1825 = vmatpush1.msra.mxu0 0.0
  %1826 = vmatprep.subr.mxu0 0.0
  %1827 = vmatpush1.msra.mxu0 0.0
  %1828 = vmatprep.subr.mxu0 0.0
  %1829 = vmatpush1.msra.mxu0 0.0
  %1830 = vmatprep.subr.mxu0 0.0
  %1831 = vmatpush1.msra.mxu0 0.0
  %1832 = vmatprep.subr.mxu0 0.0
  %1833 = vmatpush1.msra.mxu0 0.0
  %1834 = vmatprep.subr.mxu0 0.0
  %1835 = vmatpush1.msra.mxu0 0.0
  %1836 = vmatprep.subr.mxu0 0.0
  %1837 = vmatpush1.msra.mxu0 0.0
  %1838 = vmatprep.subr.mxu0 0.0
  %1839 = vmatpush1.msra.mxu0 0.0
  %1840 = vmatprep.subr.mxu0 0.0
  %1841 = vmatpush1.msra.mxu0 0.0
  %1842 = vmatprep.subr.mxu0 0.0
  %1843 = vmatpush1.msra.mxu0 0.0
  %1844 = vmatprep.subr.mxu0 0.0
  %1845 = vmatpush1.msra.mxu0 0.0
  %1846 = vmatprep.mubr.f32.mxu0 0.0
  %1847 = vmatmul.mubr.f32.gmra.mrb[0].mxu0 %v380
  %v1848 = vpop.f32.mrb[0].mxu0
  %v1849 = vadd.f32 %v1780, %v1848
  %v1850 = vpop.f32.mrb[0].mxu0
  %v1851 = vadd.f32 %v1781, %v1850
  %1852 = vdwg.mxu0
  %v1853 = vld [vmem:[%s455] sm:$0xff]
  %v1854 = vld [vmem:[%s455 + $0x8] sm:$0xff]
  %v1855 = vadd.f32 %v1849, %v1853
  %v1856 = vadd.f32 %v1851, %v1854
  %v1857 = vxor.u32 %v1855, 2147483648
  %v1858 = vxor.u32 %v1856, 2147483648
  %v1859 = vmul.f32 %v1857, 1.442695
  %v1860 = vpow.pop %v1859
  %v1861 = vmul.f32 %v1858, 1.442695
  %v1862 = vpow.pop %v1861
  %v1863 = vadd.f32 %v1860, 1.0
  %v1864 = vadd.f32 %v1862, 1.0
  %v1865 = vrcp.pop %v1863
  %v1866 = vmul.f32 1.0, %v1865
  %v1867 = vrcp.pop %v1864
  %v1868 = vmul.f32 1.0, %v1867
  %v1869 = vtanh.pop %v1856
  %v1870 = vmul.f32 %v1866, 0.0
  %1872 = vrot.lane.b32.xlu0 %v1869, 64
  %v1873 = vpop.permute.xlu0 %1872
  %v1875 = vmul.f32 %v1866, %v1873
  %1877 = vrot.lane.b32.xlu0 %v1875, 64
  %v1878 = vpop.permute.xlu0 %1877
  %v1880 = vadd.f32 %v1870, %v1878
  %v1881 = vtanh.pop %v1880
  %1883 = vrot.lane.b32.xlu0 %v1881, 64
  %v1884 = vpop.permute.xlu0 %1883
  %v1886 = vmul.f32 %v1868, %v1884
  %1887 = vst.msk [vmem:[#allocation5] sm:$0xff] %vm66, %v1886
  %s1888 = scalar_lea.vmem [#allocation5], 56
  %1889 = vst.msk [vmem:[%s1888] sm:$0xff] %vm492, %v1886
  %v1890 = vld [vmem:[%s7] sm:$0xff]
  %v1891 = vld [vmem:[%s7 + $0x8] sm:$0xff]
  %v1892 = vld [vmem:[%s7 + $0x10] sm:$0xff]
  %v1893 = vld [vmem:[%s7 + $0x18] sm:$0xff]
  %v1894 = vld [vmem:[%s7 + $0x20] sm:$0xff]
  %v1895 = vld [vmem:[%s7 + $0x28] sm:$0xff]
  %v1896 = vld [vmem:[%s7 + $0x30] sm:$0xff]
  %v1897 = vld [vmem:[%s7 + $0x38] sm:$0xff]
  %v1898 = vld [vmem:[%s7 + $0x40] sm:$0xff]
  %v1899 = vld [vmem:[%s7 + $0x48] sm:$0xff]
  %v1900 = vld [vmem:[%s7 + $0x50] sm:$0xff]
  %v1901 = vld [vmem:[%s7 + $0x58] sm:$0xff]
  %v1902 = vld [vmem:[%s7 + $0x60] sm:$0xff]
  %v1903 = vld [vmem:[%s7 + $0x68] sm:$0xff]
  %v1904 = vld [vmem:[%s7 + $0x70] sm:$0xff]
  %v1905 = vld [vmem:[%s7 + $0x78] sm:$0xff]
  %v1906 = vld [vmem:[%s512] sm:$0xff]
  %v1907 = vld [vmem:[%s512 + $0x8] sm:$0xff]
  %v1909 = vsel %vm378, %v1886, 0
  %1911 = vmatprep.subr.mxu0 %v1891
  %1912 = vmatpush1.msra.mxu0 %v1890
  %1913 = vmatprep.subr.mxu0 %v1893
  %1914 = vmatpush1.msra.mxu0 %v1892
  %1915 = vmatprep.subr.mxu0 %v1895
  %1916 = vmatpush1.msra.mxu0 %v1894
  %1917 = vmatprep.subr.mxu0 %v1897
  %1918 = vmatpush1.msra.mxu0 %v1896
  %1919 = vmatprep.subr.mxu0 %v1899
  %1920 = vmatpush1.msra.mxu0 %v1898
  %1921 = vmatprep.subr.mxu0 %v1901
  %1922 = vmatpush1.msra.mxu0 %v1900
  %1923 = vmatprep.subr.mxu0 %v1903
  %1924 = vmatpush1.msra.mxu0 %v1902
  %1925 = vmatprep.subr.mxu0 %v1905
  %1926 = vmatpush1.msra.mxu0 %v1904
  %1927 = vmatprep.subr.mxu0 0.0
  %1928 = vmatpush1.msra.mxu0 0.0
  %1929 = vmatprep.subr.mxu0 0.0
  %1930 = vmatpush1.msra.mxu0 0.0
  %1931 = vmatprep.subr.mxu0 0.0
  %1932 = vmatpush1.msra.mxu0 0.0
  %1933 = vmatprep.subr.mxu0 0.0
  %1934 = vmatpush1.msra.mxu0 0.0
  %1935 = vmatprep.subr.mxu0 0.0
  %1936 = vmatpush1.msra.mxu0 0.0
  %1937 = vmatprep.subr.mxu0 0.0
  %1938 = vmatpush1.msra.mxu0 0.0
  %1939 = vmatprep.subr.mxu0 0.0
  %1940 = vmatpush1.msra.mxu0 0.0
  %1941 = vmatprep.subr.mxu0 0.0
  %1942 = vmatpush1.msra.mxu0 0.0
  %1943 = vmatprep.subr.mxu0 0.0
  %1944 = vmatpush1.msra.mxu0 0.0
  %1945 = vmatprep.subr.mxu0 0.0
  %1946 = vmatpush1.msra.mxu0 0.0
  %1947 = vmatprep.subr.mxu0 0.0
  %1948 = vmatpush1.msra.mxu0 0.0
  %1949 = vmatprep.subr.mxu0 0.0
  %1950 = vmatpush1.msra.mxu0 0.0
  %1951 = vmatprep.subr.mxu0 0.0
  %1952 = vmatpush1.msra.mxu0 0.0
  %1953 = vmatprep.subr.mxu0 0.0
  %1954 = vmatpush1.msra.mxu0 0.0
  %1955 = vmatprep.subr.mxu0 0.0
  %1956 = vmatpush1.msra.mxu0 0.0
  %1957 = vmatprep.subr.mxu0 0.0
  %1958 = vmatpush1.msra.mxu0 0.0
  %1959 = vmatprep.subr.mxu0 0.0
  %1960 = vmatpush1.msra.mxu0 0.0
  %1961 = vmatprep.subr.mxu0 0.0
  %1962 = vmatpush1.msra.mxu0 0.0
  %1963 = vmatprep.subr.mxu0 0.0
  %1964 = vmatpush1.msra.mxu0 0.0
  %1965 = vmatprep.subr.mxu0 0.0
  %1966 = vmatpush1.msra.mxu0 0.0
  %1967 = vmatprep.subr.mxu0 0.0
  %1968 = vmatpush1.msra.mxu0 0.0
  %1969 = vmatprep.subr.mxu0 0.0
  %1970 = vmatpush1.msra.mxu0 0.0
  %1971 = vmatprep.subr.mxu0 0.0
  %1972 = vmatpush1.msra.mxu0 0.0
  %1973 = vmatprep.subr.mxu0 0.0
  %1974 = vmatpush1.msra.mxu0 0.0
  %1975 = vmatprep.mubr.f32.mxu0 0.0
  %1976 = vmatmul.mubr.f32.gmra.mrb[0].mxu0 %v1909
  %v1977 = vpop.f32.mrb[0].mxu0
  %v1978 = vadd.f32 %v1906, %v1977
  %v1979 = vpop.f32.mrb[0].mxu0
  %v1980 = vadd.f32 %v1907, %v1979
  %1981 = vdwg.mxu0
  %v1982 = vld [vmem:[%s591] sm:$0xff]
  %v1983 = vld [vmem:[%s591 + $0x8] sm:$0xff]
  %v1984 = vadd.f32 %v1978, %v1982
  %v1985 = vadd.f32 %v1980, %v1983
  %v1986 = vxor.u32 %v1984, 2147483648
  %v1987 = vxor.u32 %v1985, 2147483648
  %v1988 = vmul.f32 %v1986, 1.442695
  %v1989 = vpow.pop %v1988
  %v1990 = vmul.f32 %v1987, 1.442695
  %v1991 = vpow.pop %v1990
  %v1992 = vadd.f32 %v1989, 1.0
  %v1993 = vadd.f32 %v1991, 1.0
  %v1994 = vrcp.pop %v1992
  %v1995 = vmul.f32 1.0, %v1994
  %v1996 = vrcp.pop %v1993
  %v1997 = vmul.f32 1.0, %v1996
  %v1998 = vtanh.pop %v1985
  %v1999 = vmul.f32 %v1995, %v1880
  %2001 = vrot.lane.b32.xlu0 %v1998, 64
  %v2002 = vpop.permute.xlu0 %2001
  %v2004 = vmul.f32 %v1995, %v2002
  %2006 = vrot.lane.b32.xlu0 %v2004, 64
  %v2007 = vpop.permute.xlu0 %2006
  %v2009 = vadd.f32 %v1999, %v2007
  %v2010 = vtanh.pop %v2009
  %2012 = vrot.lane.b32.xlu0 %v2010, 64
  %v2013 = vpop.permute.xlu0 %2012
  %v2015 = vmul.f32 %v1997, %v2013
  %s2016 = scalar_lea.vmem [#allocation5], 8
  %2017 = vst.msk [vmem:[%s2016] sm:$0xff] %vm66, %v2015
  %s2018 = scalar_lea.vmem [#allocation5], 48
  %2019 = vst.msk [vmem:[%s2018] sm:$0xff] %vm492, %v2015
  %v2020 = vld [vmem:[%s7] sm:$0xff]
  %v2021 = vld [vmem:[%s7 + $0x8] sm:$0xff]
  %v2022 = vld [vmem:[%s7 + $0x10] sm:$0xff]
  %v2023 = vld [vmem:[%s7 + $0x18] sm:$0xff]
  %v2024 = vld [vmem:[%s7 + $0x20] sm:$0xff]
  %v2025 = vld [vmem:[%s7 + $0x28] sm:$0xff]
  %v2026 = vld [vmem:[%s7 + $0x30] sm:$0xff]
  %v2027 = vld [vmem:[%s7 + $0x38] sm:$0xff]
  %v2028 = vld [vmem:[%s7 + $0x40] sm:$0xff]
  %v2029 = vld [vmem:[%s7 + $0x48] sm:$0xff]
  %v2030 = vld [vmem:[%s7 + $0x50] sm:$0xff]
  %v2031 = vld [vmem:[%s7 + $0x58] sm:$0xff]
  %v2032 = vld [vmem:[%s7 + $0x60] sm:$0xff]
  %v2033 = vld [vmem:[%s7 + $0x68] sm:$0xff]
  %v2034 = vld [vmem:[%s7 + $0x70] sm:$0xff]
  %v2035 = vld [vmem:[%s7 + $0x78] sm:$0xff]
  %v2036 = vld [vmem:[%s648] sm:$0xff]
  %v2037 = vld [vmem:[%s648 + $0x8] sm:$0xff]
  %v2039 = vsel %vm378, %v2015, 0
  %2041 = vmatprep.subr.mxu0 %v2021
  %2042 = vmatpush1.msra.mxu0 %v2020
  %2043 = vmatprep.subr.mxu0 %v2023
  %2044 = vmatpush1.msra.mxu0 %v2022
  %2045 = vmatprep.subr.mxu0 %v2025
  %2046 = vmatpush1.msra.mxu0 %v2024
  %2047 = vmatprep.subr.mxu0 %v2027
  %2048 = vmatpush1.msra.mxu0 %v2026
  %2049 = vmatprep.subr.mxu0 %v2029
  %2050 = vmatpush1.msra.mxu0 %v2028
  %2051 = vmatprep.subr.mxu0 %v2031
  %2052 = vmatpush1.msra.mxu0 %v2030
  %2053 = vmatprep.subr.mxu0 %v2033
  %2054 = vmatpush1.msra.mxu0 %v2032
  %2055 = vmatprep.subr.mxu0 %v2035
  %2056 = vmatpush1.msra.mxu0 %v2034
  %2057 = vmatprep.subr.mxu0 0.0
  %2058 = vmatpush1.msra.mxu0 0.0
  %2059 = vmatprep.subr.mxu0 0.0
  %2060 = vmatpush1.msra.mxu0 0.0
  %2061 = vmatprep.subr.mxu0 0.0
  %2062 = vmatpush1.msra.mxu0 0.0
  %2063 = vmatprep.subr.mxu0 0.0
  %2064 = vmatpush1.msra.mxu0 0.0
  %2065 = vmatprep.subr.mxu0 0.0
  %2066 = vmatpush1.msra.mxu0 0.0
  %2067 = vmatprep.subr.mxu0 0.0
  %2068 = vmatpush1.msra.mxu0 0.0
  %2069 = vmatprep.subr.mxu0 0.0
  %2070 = vmatpush1.msra.mxu0 0.0
  %2071 = vmatprep.subr.mxu0 0.0
  %2072 = vmatpush1.msra.mxu0 0.0
  %2073 = vmatprep.subr.mxu0 0.0
  %2074 = vmatpush1.msra.mxu0 0.0
  %2075 = vmatprep.subr.mxu0 0.0
  %2076 = vmatpush1.msra.mxu0 0.0
  %2077 = vmatprep.subr.mxu0 0.0
  %2078 = vmatpush1.msra.mxu0 0.0
  %2079 = vmatprep.subr.mxu0 0.0
  %2080 = vmatpush1.msra.mxu0 0.0
  %2081 = vmatprep.subr.mxu0 0.0
  %2082 = vmatpush1.msra.mxu0 0.0
  %2083 = vmatprep.subr.mxu0 0.0
  %2084 = vmatpush1.msra.mxu0 0.0
  %2085 = vmatprep.subr.mxu0 0.0
  %2086 = vmatpush1.msra.mxu0 0.0
  %2087 = vmatprep.subr.mxu0 0.0
  %2088 = vmatpush1.msra.mxu0 0.0
  %2089 = vmatprep.subr.mxu0 0.0
  %2090 = vmatpush1.msra.mxu0 0.0
  %2091 = vmatprep.subr.mxu0 0.0
  %2092 = vmatpush1.msra.mxu0 0.0
  %2093 = vmatprep.subr.mxu0 0.0
  %2094 = vmatpush1.msra.mxu0 0.0
  %2095 = vmatprep.subr.mxu0 0.0
  %2096 = vmatpush1.msra.mxu0 0.0
  %2097 = vmatprep.subr.mxu0 0.0
  %2098 = vmatpush1.msra.mxu0 0.0
  %2099 = vmatprep.subr.mxu0 0.0
  %2100 = vmatpush1.msra.mxu0 0.0
  %2101 = vmatprep.subr.mxu0 0.0
  %2102 = vmatpush1.msra.mxu0 0.0
  %2103 = vmatprep.subr.mxu0 0.0
  %2104 = vmatpush1.msra.mxu0 0.0
  %2105 = vmatprep.mubr.f32.mxu0 0.0
  %2106 = vmatmul.mubr.f32.gmra.mrb[0].mxu0 %v2039
  %v2107 = vpop.f32.mrb[0].mxu0
  %v2108 = vadd.f32 %v2036, %v2107
  %v2109 = vpop.f32.mrb[0].mxu0
  %v2110 = vadd.f32 %v2037, %v2109
  %2111 = vdwg.mxu0
  %v2112 = vld [vmem:[%s727] sm:$0xff]
  %v2113 = vld [vmem:[%s727 + $0x8] sm:$0xff]
  %v2114 = vadd.f32 %v2108, %v2112
  %v2115 = vadd.f32 %v2110, %v2113
  %v2116 = vxor.u32 %v2114, 2147483648
  %v2117 = vxor.u32 %v2115, 2147483648
  %v2118 = vmul.f32 %v2116, 1.442695
  %v2119 = vpow.pop %v2118
  %v2120 = vmul.f32 %v2117, 1.442695
  %v2121 = vpow.pop %v2120
  %v2122 = vadd.f32 %v2119, 1.0
  %v2123 = vadd.f32 %v2121, 1.0
  %v2124 = vrcp.pop %v2122
  %v2125 = vmul.f32 1.0, %v2124
  %v2126 = vrcp.pop %v2123
  %v2127 = vmul.f32 1.0, %v2126
  %v2128 = vtanh.pop %v2115
  %v2129 = vmul.f32 %v2125, %v2009
  %2131 = vrot.lane.b32.xlu0 %v2128, 64
  %v2132 = vpop.permute.xlu0 %2131
  %v2134 = vmul.f32 %v2125, %v2132
  %2136 = vrot.lane.b32.xlu0 %v2134, 64
  %v2137 = vpop.permute.xlu0 %2136
  %v2139 = vadd.f32 %v2129, %v2137
  %v2140 = vtanh.pop %v2139
  %2142 = vrot.lane.b32.xlu0 %v2140, 64
  %v2143 = vpop.permute.xlu0 %2142
  %v2145 = vmul.f32 %v2127, %v2143
  %s2146 = scalar_lea.vmem [#allocation5], 16
  %2147 = vst.msk [vmem:[%s2146] sm:$0xff] %vm66, %v2145
  %s2148 = scalar_lea.vmem [#allocation5], 40
  %2149 = vst.msk [vmem:[%s2148] sm:$0xff] %vm492, %v2145
  %v2150 = vld [vmem:[%s7] sm:$0xff]
  %v2151 = vld [vmem:[%s7 + $0x8] sm:$0xff]
  %v2152 = vld [vmem:[%s7 + $0x10] sm:$0xff]
  %v2153 = vld [vmem:[%s7 + $0x18] sm:$0xff]
  %v2154 = vld [vmem:[%s7 + $0x20] sm:$0xff]
  %v2155 = vld [vmem:[%s7 + $0x28] sm:$0xff]
  %v2156 = vld [vmem:[%s7 + $0x30] sm:$0xff]
  %v2157 = vld [vmem:[%s7 + $0x38] sm:$0xff]
  %v2158 = vld [vmem:[%s7 + $0x40] sm:$0xff]
  %v2159 = vld [vmem:[%s7 + $0x48] sm:$0xff]
  %v2160 = vld [vmem:[%s7 + $0x50] sm:$0xff]
  %v2161 = vld [vmem:[%s7 + $0x58] sm:$0xff]
  %v2162 = vld [vmem:[%s7 + $0x60] sm:$0xff]
  %v2163 = vld [vmem:[%s7 + $0x68] sm:$0xff]
  %v2164 = vld [vmem:[%s7 + $0x70] sm:$0xff]
  %v2165 = vld [vmem:[%s7 + $0x78] sm:$0xff]
  %v2166 = vld [vmem:[%s784] sm:$0xff]
  %v2167 = vld [vmem:[%s784 + $0x8] sm:$0xff]
  %v2169 = vsel %vm378, %v2145, 0
  %2171 = vmatprep.subr.mxu0 %v2151
  %2172 = vmatpush1.msra.mxu0 %v2150
  %2173 = vmatprep.subr.mxu0 %v2153
  %2174 = vmatpush1.msra.mxu0 %v2152
  %2175 = vmatprep.subr.mxu0 %v2155
  %2176 = vmatpush1.msra.mxu0 %v2154
  %2177 = vmatprep.subr.mxu0 %v2157
  %2178 = vmatpush1.msra.mxu0 %v2156
  %2179 = vmatprep.subr.mxu0 %v2159
  %2180 = vmatpush1.msra.mxu0 %v2158
  %2181 = vmatprep.subr.mxu0 %v2161
  %2182 = vmatpush1.msra.mxu0 %v2160
  %2183 = vmatprep.subr.mxu0 %v2163
  %2184 = vmatpush1.msra.mxu0 %v2162
  %2185 = vmatprep.subr.mxu0 %v2165
  %2186 = vmatpush1.msra.mxu0 %v2164
  %2187 = vmatprep.subr.mxu0 0.0
  %2188 = vmatpush1.msra.mxu0 0.0
  %2189 = vmatprep.subr.mxu0 0.0
  %2190 = vmatpush1.msra.mxu0 0.0
  %2191 = vmatprep.subr.mxu0 0.0
  %2192 = vmatpush1.msra.mxu0 0.0
  %2193 = vmatprep.subr.mxu0 0.0
  %2194 = vmatpush1.msra.mxu0 0.0
  %2195 = vmatprep.subr.mxu0 0.0
  %2196 = vmatpush1.msra.mxu0 0.0
  %2197 = vmatprep.subr.mxu0 0.0
  %2198 = vmatpush1.msra.mxu0 0.0
  %2199 = vmatprep.subr.mxu0 0.0
  %2200 = vmatpush1.msra.mxu0 0.0
  %2201 = vmatprep.subr.mxu0 0.0
  %2202 = vmatpush1.msra.mxu0 0.0
  %2203 = vmatprep.subr.mxu0 0.0
  %2204 = vmatpush1.msra.mxu0 0.0
  %2205 = vmatprep.subr.mxu0 0.0
  %2206 = vmatpush1.msra.mxu0 0.0
  %2207 = vmatprep.subr.mxu0 0.0
  %2208 = vmatpush1.msra.mxu0 0.0
  %2209 = vmatprep.subr.mxu0 0.0
  %2210 = vmatpush1.msra.mxu0 0.0
  %2211 = vmatprep.subr.mxu0 0.0
  %2212 = vmatpush1.msra.mxu0 0.0
  %2213 = vmatprep.subr.mxu0 0.0
  %2214 = vmatpush1.msra.mxu0 0.0
  %2215 = vmatprep.subr.mxu0 0.0
  %2216 = vmatpush1.msra.mxu0 0.0
  %2217 = vmatprep.subr.mxu0 0.0
  %2218 = vmatpush1.msra.mxu0 0.0
  %2219 = vmatprep.subr.mxu0 0.0
  %2220 = vmatpush1.msra.mxu0 0.0
  %2221 = vmatprep.subr.mxu0 0.0
  %2222 = vmatpush1.msra.mxu0 0.0
  %2223 = vmatprep.subr.mxu0 0.0
  %2224 = vmatpush1.msra.mxu0 0.0
  %2225 = vmatprep.subr.mxu0 0.0
  %2226 = vmatpush1.msra.mxu0 0.0
  %2227 = vmatprep.subr.mxu0 0.0
  %2228 = vmatpush1.msra.mxu0 0.0
  %2229 = vmatprep.subr.mxu0 0.0
  %2230 = vmatpush1.msra.mxu0 0.0
  %2231 = vmatprep.subr.mxu0 0.0
  %2232 = vmatpush1.msra.mxu0 0.0
  %2233 = vmatprep.subr.mxu0 0.0
  %2234 = vmatpush1.msra.mxu0 0.0
  %2235 = vmatprep.mubr.f32.mxu0 0.0
  %2236 = vmatmul.mubr.f32.gmra.mrb[0].mxu0 %v2169
  %v2237 = vpop.f32.mrb[0].mxu0
  %v2238 = vadd.f32 %v2166, %v2237
  %v2239 = vpop.f32.mrb[0].mxu0
  %v2240 = vadd.f32 %v2167, %v2239
  %2241 = vdwg.mxu0
  %v2242 = vld [vmem:[%s863] sm:$0xff]
  %v2243 = vld [vmem:[%s863 + $0x8] sm:$0xff]
  %v2244 = vadd.f32 %v2238, %v2242
  %v2245 = vadd.f32 %v2240, %v2243
  %v2246 = vxor.u32 %v2244, 2147483648
  %v2247 = vxor.u32 %v2245, 2147483648
  %v2248 = vmul.f32 %v2246, 1.442695
  %v2249 = vpow.pop %v2248
  %v2250 = vmul.f32 %v2247, 1.442695
  %v2251 = vpow.pop %v2250
  %v2252 = vadd.f32 %v2249, 1.0
  %v2253 = vadd.f32 %v2251, 1.0
  %v2254 = vrcp.pop %v2252
  %v2255 = vmul.f32 1.0, %v2254
  %v2256 = vrcp.pop %v2253
  %v2257 = vmul.f32 1.0, %v2256
  %v2258 = vtanh.pop %v2245
  %v2259 = vmul.f32 %v2255, %v2139
  %2261 = vrot.lane.b32.xlu0 %v2258, 64
  %v2262 = vpop.permute.xlu0 %2261
  %v2264 = vmul.f32 %v2255, %v2262
  %2266 = vrot.lane.b32.xlu0 %v2264, 64
  %v2267 = vpop.permute.xlu0 %2266
  %v2269 = vadd.f32 %v2259, %v2267
  %v2270 = vtanh.pop %v2269
  %2272 = vrot.lane.b32.xlu0 %v2270, 64
  %v2273 = vpop.permute.xlu0 %2272
  %v2275 = vmul.f32 %v2257, %v2273
  %s2276 = scalar_lea.vmem [#allocation5], 24
  %2277 = vst.msk [vmem:[%s2276] sm:$0xff] %vm66, %v2275
  %s2278 = scalar_lea.vmem [#allocation5], 32
  %2279 = vst.msk [vmem:[%s2278] sm:$0xff] %vm492, %v2275
  %v2280 = vld [vmem:[%s7] sm:$0xff]
  %v2281 = vld [vmem:[%s7 + $0x8] sm:$0xff]
  %v2282 = vld [vmem:[%s7 + $0x10] sm:$0xff]
  %v2283 = vld [vmem:[%s7 + $0x18] sm:$0xff]
  %v2284 = vld [vmem:[%s7 + $0x20] sm:$0xff]
  %v2285 = vld [vmem:[%s7 + $0x28] sm:$0xff]
  %v2286 = vld [vmem:[%s7 + $0x30] sm:$0xff]
  %v2287 = vld [vmem:[%s7 + $0x38] sm:$0xff]
  %v2288 = vld [vmem:[%s7 + $0x40] sm:$0xff]
  %v2289 = vld [vmem:[%s7 + $0x48] sm:$0xff]
  %v2290 = vld [vmem:[%s7 + $0x50] sm:$0xff]
  %v2291 = vld [vmem:[%s7 + $0x58] sm:$0xff]
  %v2292 = vld [vmem:[%s7 + $0x60] sm:$0xff]
  %v2293 = vld [vmem:[%s7 + $0x68] sm:$0xff]
  %v2294 = vld [vmem:[%s7 + $0x70] sm:$0xff]
  %v2295 = vld [vmem:[%s7 + $0x78] sm:$0xff]
  %v2296 = vld [vmem:[%s919] sm:$0xff]
  %v2297 = vld [vmem:[%s919 + $0x8] sm:$0xff]
  %v2299 = vsel %vm378, %v2275, 0
  %2301 = vmatprep.subr.mxu0 %v2281
  %2302 = vmatpush1.msra.mxu0 %v2280
  %2303 = vmatprep.subr.mxu0 %v2283
  %2304 = vmatpush1.msra.mxu0 %v2282
  %2305 = vmatprep.subr.mxu0 %v2285
  %2306 = vmatpush1.msra.mxu0 %v2284
  %2307 = vmatprep.subr.mxu0 %v2287
  %2308 = vmatpush1.msra.mxu0 %v2286
  %2309 = vmatprep.subr.mxu0 %v2289
  %2310 = vmatpush1.msra.mxu0 %v2288
  %2311 = vmatprep.subr.mxu0 %v2291
  %2312 = vmatpush1.msra.mxu0 %v2290
  %2313 = vmatprep.subr.mxu0 %v2293
  %2314 = vmatpush1.msra.mxu0 %v2292
  %2315 = vmatprep.subr.mxu0 %v2295
  %2316 = vmatpush1.msra.mxu0 %v2294
  %2317 = vmatprep.subr.mxu0 0.0
  %2318 = vmatpush1.msra.mxu0 0.0
  %2319 = vmatprep.subr.mxu0 0.0
  %2320 = vmatpush1.msra.mxu0 0.0
  %2321 = vmatprep.subr.mxu0 0.0
  %2322 = vmatpush1.msra.mxu0 0.0
  %2323 = vmatprep.subr.mxu0 0.0
  %2324 = vmatpush1.msra.mxu0 0.0
  %2325 = vmatprep.subr.mxu0 0.0
  %2326 = vmatpush1.msra.mxu0 0.0
  %2327 = vmatprep.subr.mxu0 0.0
  %2328 = vmatpush1.msra.mxu0 0.0
  %2329 = vmatprep.subr.mxu0 0.0
  %2330 = vmatpush1.msra.mxu0 0.0
  %2331 = vmatprep.subr.mxu0 0.0
  %2332 = vmatpush1.msra.mxu0 0.0
  %2333 = vmatprep.subr.mxu0 0.0
  %2334 = vmatpush1.msra.mxu0 0.0
  %2335 = vmatprep.subr.mxu0 0.0
  %2336 = vmatpush1.msra.mxu0 0.0
  %2337 = vmatprep.subr.mxu0 0.0
  %2338 = vmatpush1.msra.mxu0 0.0
  %2339 = vmatprep.subr.mxu0 0.0
  %2340 = vmatpush1.msra.mxu0 0.0
  %2341 = vmatprep.subr.mxu0 0.0
  %2342 = vmatpush1.msra.mxu0 0.0
  %2343 = vmatprep.subr.mxu0 0.0
  %2344 = vmatpush1.msra.mxu0 0.0
  %2345 = vmatprep.subr.mxu0 0.0
  %2346 = vmatpush1.msra.mxu0 0.0
  %2347 = vmatprep.subr.mxu0 0.0
  %2348 = vmatpush1.msra.mxu0 0.0
  %2349 = vmatprep.subr.mxu0 0.0
  %2350 = vmatpush1.msra.mxu0 0.0
  %2351 = vmatprep.subr.mxu0 0.0
  %2352 = vmatpush1.msra.mxu0 0.0
  %2353 = vmatprep.subr.mxu0 0.0
  %2354 = vmatpush1.msra.mxu0 0.0
  %2355 = vmatprep.subr.mxu0 0.0
  %2356 = vmatpush1.msra.mxu0 0.0
  %2357 = vmatprep.subr.mxu0 0.0
  %2358 = vmatpush1.msra.mxu0 0.0
  %2359 = vmatprep.subr.mxu0 0.0
  %2360 = vmatpush1.msra.mxu0 0.0
  %2361 = vmatprep.subr.mxu0 0.0
  %2362 = vmatpush1.msra.mxu0 0.0
  %2363 = vmatprep.subr.mxu0 0.0
  %2364 = vmatpush1.msra.mxu0 0.0
  %2365 = vmatprep.mubr.f32.mxu0 0.0
  %2366 = vmatmul.mubr.f32.gmra.mrb[0].mxu0 %v2299
  %v2367 = vpop.f32.mrb[0].mxu0
  %v2368 = vadd.f32 %v2296, %v2367
  %v2369 = vpop.f32.mrb[0].mxu0
  %v2370 = vadd.f32 %v2297, %v2369
  %2371 = vdwg.mxu0
  %v2372 = vld [vmem:[%s997] sm:$0xff]
  %v2373 = vld [vmem:[%s997 + $0x8] sm:$0xff]
  %v2374 = vadd.f32 %v2368, %v2372
  %v2375 = vadd.f32 %v2370, %v2373
  %v2376 = vxor.u32 %v2374, 2147483648
  %v2377 = vxor.u32 %v2375, 2147483648
  %v2378 = vmul.f32 %v2376, 1.442695
  %v2379 = vpow.pop %v2378
  %v2380 = vmul.f32 %v2377, 1.442695
  %v2381 = vpow.pop %v2380
  %v2382 = vadd.f32 %v2379, 1.0
  %v2383 = vadd.f32 %v2381, 1.0
  %v2384 = vrcp.pop %v2382
  %v2385 = vmul.f32 1.0, %v2384
  %v2386 = vrcp.pop %v2383
  %v2387 = vmul.f32 1.0, %v2386
  %v2388 = vtanh.pop %v2375
  %v2389 = vmul.f32 %v2385, %v2269
  %2391 = vrot.lane.b32.xlu0 %v2388, 64
  %v2392 = vpop.permute.xlu0 %2391
  %v2394 = vmul.f32 %v2385, %v2392
  %2396 = vrot.lane.b32.xlu0 %v2394, 64
  %v2397 = vpop.permute.xlu0 %2396
  %v2399 = vadd.f32 %v2389, %v2397
  %v2400 = vtanh.pop %v2399
  %2402 = vrot.lane.b32.xlu0 %v2400, 64
  %v2403 = vpop.permute.xlu0 %2402
  %v2405 = vmul.f32 %v2387, %v2403
  %2406 = vst.msk [vmem:[%s2278] sm:$0xff] %vm66, %v2405
  %2407 = vst.msk [vmem:[%s2276] sm:$0xff] %vm492, %v2405
  %v2408 = vld [vmem:[%s7] sm:$0xff]
  %v2409 = vld [vmem:[%s7 + $0x8] sm:$0xff]
  %v2410 = vld [vmem:[%s7 + $0x10] sm:$0xff]
  %v2411 = vld [vmem:[%s7 + $0x18] sm:$0xff]
  %v2412 = vld [vmem:[%s7 + $0x20] sm:$0xff]
  %v2413 = vld [vmem:[%s7 + $0x28] sm:$0xff]
  %v2414 = vld [vmem:[%s7 + $0x30] sm:$0xff]
  %v2415 = vld [vmem:[%s7 + $0x38] sm:$0xff]
  %v2416 = vld [vmem:[%s7 + $0x40] sm:$0xff]
  %v2417 = vld [vmem:[%s7 + $0x48] sm:$0xff]
  %v2418 = vld [vmem:[%s7 + $0x50] sm:$0xff]
  %v2419 = vld [vmem:[%s7 + $0x58] sm:$0xff]
  %v2420 = vld [vmem:[%s7 + $0x60] sm:$0xff]
  %v2421 = vld [vmem:[%s7 + $0x68] sm:$0xff]
  %v2422 = vld [vmem:[%s7 + $0x70] sm:$0xff]
  %v2423 = vld [vmem:[%s7 + $0x78] sm:$0xff]
  %v2424 = vld [vmem:[%s1051] sm:$0xff]
  %v2425 = vld [vmem:[%s1051 + $0x8] sm:$0xff]
  %v2427 = vsel %vm378, %v2405, 0
  %2429 = vmatprep.subr.mxu0 %v2409
  %2430 = vmatpush1.msra.mxu0 %v2408
  %2431 = vmatprep.subr.mxu0 %v2411
  %2432 = vmatpush1.msra.mxu0 %v2410
  %2433 = vmatprep.subr.mxu0 %v2413
  %2434 = vmatpush1.msra.mxu0 %v2412
  %2435 = vmatprep.subr.mxu0 %v2415
  %2436 = vmatpush1.msra.mxu0 %v2414
  %2437 = vmatprep.subr.mxu0 %v2417
  %2438 = vmatpush1.msra.mxu0 %v2416
  %2439 = vmatprep.subr.mxu0 %v2419
  %2440 = vmatpush1.msra.mxu0 %v2418
  %2441 = vmatprep.subr.mxu0 %v2421
  %2442 = vmatpush1.msra.mxu0 %v2420
  %2443 = vmatprep.subr.mxu0 %v2423
  %2444 = vmatpush1.msra.mxu0 %v2422
  %2445 = vmatprep.subr.mxu0 0.0
  %2446 = vmatpush1.msra.mxu0 0.0
  %2447 = vmatprep.subr.mxu0 0.0
  %2448 = vmatpush1.msra.mxu0 0.0
  %2449 = vmatprep.subr.mxu0 0.0
  %2450 = vmatpush1.msra.mxu0 0.0
  %2451 = vmatprep.subr.mxu0 0.0
  %2452 = vmatpush1.msra.mxu0 0.0
  %2453 = vmatprep.subr.mxu0 0.0
  %2454 = vmatpush1.msra.mxu0 0.0
  %2455 = vmatprep.subr.mxu0 0.0
  %2456 = vmatpush1.msra.mxu0 0.0
  %2457 = vmatprep.subr.mxu0 0.0
  %2458 = vmatpush1.msra.mxu0 0.0
  %2459 = vmatprep.subr.mxu0 0.0
  %2460 = vmatpush1.msra.mxu0 0.0
  %2461 = vmatprep.subr.mxu0 0.0
  %2462 = vmatpush1.msra.mxu0 0.0
  %2463 = vmatprep.subr.mxu0 0.0
  %2464 = vmatpush1.msra.mxu0 0.0
  %2465 = vmatprep.subr.mxu0 0.0
  %2466 = vmatpush1.msra.mxu0 0.0
  %2467 = vmatprep.subr.mxu0 0.0
  %2468 = vmatpush1.msra.mxu0 0.0
  %2469 = vmatprep.subr.mxu0 0.0
  %2470 = vmatpush1.msra.mxu0 0.0
  %2471 = vmatprep.subr.mxu0 0.0
  %2472 = vmatpush1.msra.mxu0 0.0
  %2473 = vmatprep.subr.mxu0 0.0
  %2474 = vmatpush1.msra.mxu0 0.0
  %2475 = vmatprep.subr.mxu0 0.0
  %2476 = vmatpush1.msra.mxu0 0.0
  %2477 = vmatprep.subr.mxu0 0.0
  %2478 = vmatpush1.msra.mxu0 0.0
  %2479 = vmatprep.subr.mxu0 0.0
  %2480 = vmatpush1.msra.mxu0 0.0
  %2481 = vmatprep.subr.mxu0 0.0
  %2482 = vmatpush1.msra.mxu0 0.0
  %2483 = vmatprep.subr.mxu0 0.0
  %2484 = vmatpush1.msra.mxu0 0.0
  %2485 = vmatprep.subr.mxu0 0.0
  %2486 = vmatpush1.msra.mxu0 0.0
  %2487 = vmatprep.subr.mxu0 0.0
  %2488 = vmatpush1.msra.mxu0 0.0
  %2489 = vmatprep.subr.mxu0 0.0
  %2490 = vmatpush1.msra.mxu0 0.0
  %2491 = vmatprep.subr.mxu0 0.0
  %2492 = vmatpush1.msra.mxu0 0.0
  %2493 = vmatprep.mubr.f32.mxu0 0.0
  %2494 = vmatmul.mubr.f32.gmra.mrb[0].mxu0 %v2427
  %v2495 = vpop.f32.mrb[0].mxu0
  %v2496 = vadd.f32 %v2424, %v2495
  %v2497 = vpop.f32.mrb[0].mxu0
  %v2498 = vadd.f32 %v2425, %v2497
  %2499 = vdwg.mxu0
  %v2500 = vld [vmem:[%s1129] sm:$0xff]
  %v2501 = vld [vmem:[%s1129 + $0x8] sm:$0xff]
  %v2502 = vadd.f32 %v2496, %v2500
  %v2503 = vadd.f32 %v2498, %v2501
  %v2504 = vxor.u32 %v2502, 2147483648
  %v2505 = vxor.u32 %v2503, 2147483648
  %v2506 = vmul.f32 %v2504, 1.442695
  %v2507 = vpow.pop %v2506
  %v2508 = vmul.f32 %v2505, 1.442695
  %v2509 = vpow.pop %v2508
  %v2510 = vadd.f32 %v2507, 1.0
  %v2511 = vadd.f32 %v2509, 1.0
  %v2512 = vrcp.pop %v2510
  %v2513 = vmul.f32 1.0, %v2512
  %v2514 = vrcp.pop %v2511
  %v2515 = vmul.f32 1.0, %v2514
  %v2516 = vtanh.pop %v2503
  %v2517 = vmul.f32 %v2513, %v2399
  %2519 = vrot.lane.b32.xlu0 %v2516, 64
  %v2520 = vpop.permute.xlu0 %2519
  %v2522 = vmul.f32 %v2513, %v2520
  %2524 = vrot.lane.b32.xlu0 %v2522, 64
  %v2525 = vpop.permute.xlu0 %2524
  %v2527 = vadd.f32 %v2517, %v2525
  %v2528 = vtanh.pop %v2527
  %2530 = vrot.lane.b32.xlu0 %v2528, 64
  %v2531 = vpop.permute.xlu0 %2530
  %v2533 = vmul.f32 %v2515, %v2531
  %2534 = vst.msk [vmem:[%s2148] sm:$0xff] %vm66, %v2533
  %2535 = vst.msk [vmem:[%s2146] sm:$0xff] %vm492, %v2533
  %v2536 = vld [vmem:[%s7] sm:$0xff]
  %v2537 = vld [vmem:[%s7 + $0x8] sm:$0xff]
  %v2538 = vld [vmem:[%s7 + $0x10] sm:$0xff]
  %v2539 = vld [vmem:[%s7 + $0x18] sm:$0xff]
  %v2540 = vld [vmem:[%s7 + $0x20] sm:$0xff]
  %v2541 = vld [vmem:[%s7 + $0x28] sm:$0xff]
  %v2542 = vld [vmem:[%s7 + $0x30] sm:$0xff]
  %v2543 = vld [vmem:[%s7 + $0x38] sm:$0xff]
  %v2544 = vld [vmem:[%s7 + $0x40] sm:$0xff]
  %v2545 = vld [vmem:[%s7 + $0x48] sm:$0xff]
  %v2546 = vld [vmem:[%s7 + $0x50] sm:$0xff]
  %v2547 = vld [vmem:[%s7 + $0x58] sm:$0xff]
  %v2548 = vld [vmem:[%s7 + $0x60] sm:$0xff]
  %v2549 = vld [vmem:[%s7 + $0x68] sm:$0xff]
  %v2550 = vld [vmem:[%s7 + $0x70] sm:$0xff]
  %v2551 = vld [vmem:[%s7 + $0x78] sm:$0xff]
  %v2552 = vld [vmem:[%s1183] sm:$0xff]
  %v2553 = vld [vmem:[%s1183 + $0x8] sm:$0xff]
  %v2555 = vsel %vm378, %v2533, 0
  %2557 = vmatprep.subr.mxu0 %v2537
  %2558 = vmatpush1.msra.mxu0 %v2536
  %2559 = vmatprep.subr.mxu0 %v2539
  %2560 = vmatpush1.msra.mxu0 %v2538
  %2561 = vmatprep.subr.mxu0 %v2541
  %2562 = vmatpush1.msra.mxu0 %v2540
  %2563 = vmatprep.subr.mxu0 %v2543
  %2564 = vmatpush1.msra.mxu0 %v2542
  %2565 = vmatprep.subr.mxu0 %v2545
  %2566 = vmatpush1.msra.mxu0 %v2544
  %2567 = vmatprep.subr.mxu0 %v2547
  %2568 = vmatpush1.msra.mxu0 %v2546
  %2569 = vmatprep.subr.mxu0 %v2549
  %2570 = vmatpush1.msra.mxu0 %v2548
  %2571 = vmatprep.subr.mxu0 %v2551
  %2572 = vmatpush1.msra.mxu0 %v2550
  %2573 = vmatprep.subr.mxu0 0.0
  %2574 = vmatpush1.msra.mxu0 0.0
  %2575 = vmatprep.subr.mxu0 0.0
  %2576 = vmatpush1.msra.mxu0 0.0
  %2577 = vmatprep.subr.mxu0 0.0
  %2578 = vmatpush1.msra.mxu0 0.0
  %2579 = vmatprep.subr.mxu0 0.0
  %2580 = vmatpush1.msra.mxu0 0.0
  %2581 = vmatprep.subr.mxu0 0.0
  %2582 = vmatpush1.msra.mxu0 0.0
  %2583 = vmatprep.subr.mxu0 0.0
  %2584 = vmatpush1.msra.mxu0 0.0
  %2585 = vmatprep.subr.mxu0 0.0
  %2586 = vmatpush1.msra.mxu0 0.0
  %2587 = vmatprep.subr.mxu0 0.0
  %2588 = vmatpush1.msra.mxu0 0.0
  %2589 = vmatprep.subr.mxu0 0.0
  %2590 = vmatpush1.msra.mxu0 0.0
  %2591 = vmatprep.subr.mxu0 0.0
  %2592 = vmatpush1.msra.mxu0 0.0
  %2593 = vmatprep.subr.mxu0 0.0
  %2594 = vmatpush1.msra.mxu0 0.0
  %2595 = vmatprep.subr.mxu0 0.0
  %2596 = vmatpush1.msra.mxu0 0.0
  %2597 = vmatprep.subr.mxu0 0.0
  %2598 = vmatpush1.msra.mxu0 0.0
  %2599 = vmatprep.subr.mxu0 0.0
  %2600 = vmatpush1.msra.mxu0 0.0
  %2601 = vmatprep.subr.mxu0 0.0
  %2602 = vmatpush1.msra.mxu0 0.0
  %2603 = vmatprep.subr.mxu0 0.0
  %2604 = vmatpush1.msra.mxu0 0.0
  %2605 = vmatprep.subr.mxu0 0.0
  %2606 = vmatpush1.msra.mxu0 0.0
  %2607 = vmatprep.subr.mxu0 0.0
  %2608 = vmatpush1.msra.mxu0 0.0
  %2609 = vmatprep.subr.mxu0 0.0
  %2610 = vmatpush1.msra.mxu0 0.0
  %2611 = vmatprep.subr.mxu0 0.0
  %2612 = vmatpush1.msra.mxu0 0.0
  %2613 = vmatprep.subr.mxu0 0.0
  %2614 = vmatpush1.msra.mxu0 0.0
  %2615 = vmatprep.subr.mxu0 0.0
  %2616 = vmatpush1.msra.mxu0 0.0
  %2617 = vmatprep.subr.mxu0 0.0
  %2618 = vmatpush1.msra.mxu0 0.0
  %2619 = vmatprep.subr.mxu0 0.0
  %2620 = vmatpush1.msra.mxu0 0.0
  %2621 = vmatprep.mubr.f32.mxu0 0.0
  %2622 = vmatmul.mubr.f32.gmra.mrb[0].mxu0 %v2555
  %v2623 = vpop.f32.mrb[0].mxu0
  %v2624 = vadd.f32 %v2552, %v2623
  %v2625 = vpop.f32.mrb[0].mxu0
  %v2626 = vadd.f32 %v2553, %v2625
  %2627 = vdwg.mxu0
  %v2628 = vld [vmem:[%s1261] sm:$0xff]
  %v2629 = vld [vmem:[%s1261 + $0x8] sm:$0xff]
  %v2630 = vadd.f32 %v2624, %v2628
  %v2631 = vadd.f32 %v2626, %v2629
  %v2632 = vxor.u32 %v2630, 2147483648
  %v2633 = vxor.u32 %v2631, 2147483648
  %v2634 = vmul.f32 %v2632, 1.442695
  %v2635 = vpow.pop %v2634
  %v2636 = vmul.f32 %v2633, 1.442695
  %v2637 = vpow.pop %v2636
  %v2638 = vadd.f32 %v2635, 1.0
  %v2639 = vadd.f32 %v2637, 1.0
  %v2640 = vrcp.pop %v2638
  %v2641 = vmul.f32 1.0, %v2640
  %v2642 = vrcp.pop %v2639
  %v2643 = vmul.f32 1.0, %v2642
  %v2644 = vtanh.pop %v2631
  %v2645 = vmul.f32 %v2641, %v2527
  %2647 = vrot.lane.b32.xlu0 %v2644, 64
  %v2648 = vpop.permute.xlu0 %2647
  %v2650 = vmul.f32 %v2641, %v2648
  %2652 = vrot.lane.b32.xlu0 %v2650, 64
  %v2653 = vpop.permute.xlu0 %2652
  %v2655 = vadd.f32 %v2645, %v2653
  %v2656 = vtanh.pop %v2655
  %2658 = vrot.lane.b32.xlu0 %v2656, 64
  %v2659 = vpop.permute.xlu0 %2658
  %v2661 = vmul.f32 %v2643, %v2659
  %2662 = vst.msk [vmem:[%s2018] sm:$0xff] %vm66, %v2661
  %2663 = vst.msk [vmem:[%s2016] sm:$0xff] %vm492, %v2661
  %v2664 = vld [vmem:[%s7] sm:$0xff]
  %v2665 = vld [vmem:[%s7 + $0x8] sm:$0xff]
  %v2666 = vld [vmem:[%s7 + $0x10] sm:$0xff]
  %v2667 = vld [vmem:[%s7 + $0x18] sm:$0xff]
  %v2668 = vld [vmem:[%s7 + $0x20] sm:$0xff]
  %v2669 = vld [vmem:[%s7 + $0x28] sm:$0xff]
  %v2670 = vld [vmem:[%s7 + $0x30] sm:$0xff]
  %v2671 = vld [vmem:[%s7 + $0x38] sm:$0xff]
  %v2672 = vld [vmem:[%s7 + $0x40] sm:$0xff]
  %v2673 = vld [vmem:[%s7 + $0x48] sm:$0xff]
  %v2674 = vld [vmem:[%s7 + $0x50] sm:$0xff]
  %v2675 = vld [vmem:[%s7 + $0x58] sm:$0xff]
  %v2676 = vld [vmem:[%s7 + $0x60] sm:$0xff]
  %v2677 = vld [vmem:[%s7 + $0x68] sm:$0xff]
  %v2678 = vld [vmem:[%s7 + $0x70] sm:$0xff]
  %v2679 = vld [vmem:[%s7 + $0x78] sm:$0xff]
  %v2680 = vld [vmem:[%s1315] sm:$0xff]
  %v2681 = vld [vmem:[%s1315 + $0x8] sm:$0xff]
  %v2683 = vsel %vm378, %v2661, 0
  %2685 = vmatprep.subr.mxu0 %v2665
  %2686 = vmatpush1.msra.mxu0 %v2664
  %2687 = vmatprep.subr.mxu0 %v2667
  %2688 = vmatpush1.msra.mxu0 %v2666
  %2689 = vmatprep.subr.mxu0 %v2669
  %2690 = vmatpush1.msra.mxu0 %v2668
  %2691 = vmatprep.subr.mxu0 %v2671
  %2692 = vmatpush1.msra.mxu0 %v2670
  %2693 = vmatprep.subr.mxu0 %v2673
  %2694 = vmatpush1.msra.mxu0 %v2672
  %2695 = vmatprep.subr.mxu0 %v2675
  %2696 = vmatpush1.msra.mxu0 %v2674
  %2697 = vmatprep.subr.mxu0 %v2677
  %2698 = vmatpush1.msra.mxu0 %v2676
  %2699 = vmatprep.subr.mxu0 %v2679
  %2700 = vmatpush1.msra.mxu0 %v2678
  %2701 = vmatprep.subr.mxu0 0.0
  %2702 = vmatpush1.msra.mxu0 0.0
  %2703 = vmatprep.subr.mxu0 0.0
  %2704 = vmatpush1.msra.mxu0 0.0
  %2705 = vmatprep.subr.mxu0 0.0
  %2706 = vmatpush1.msra.mxu0 0.0
  %2707 = vmatprep.subr.mxu0 0.0
  %2708 = vmatpush1.msra.mxu0 0.0
  %2709 = vmatprep.subr.mxu0 0.0
  %2710 = vmatpush1.msra.mxu0 0.0
  %2711 = vmatprep.subr.mxu0 0.0
  %2712 = vmatpush1.msra.mxu0 0.0
  %2713 = vmatprep.subr.mxu0 0.0
  %2714 = vmatpush1.msra.mxu0 0.0
  %2715 = vmatprep.subr.mxu0 0.0
  %2716 = vmatpush1.msra.mxu0 0.0
  %2717 = vmatprep.subr.mxu0 0.0
  %2718 = vmatpush1.msra.mxu0 0.0
  %2719 = vmatprep.subr.mxu0 0.0
  %2720 = vmatpush1.msra.mxu0 0.0
  %2721 = vmatprep.subr.mxu0 0.0
  %2722 = vmatpush1.msra.mxu0 0.0
  %2723 = vmatprep.subr.mxu0 0.0
  %2724 = vmatpush1.msra.mxu0 0.0
  %2725 = vmatprep.subr.mxu0 0.0
  %2726 = vmatpush1.msra.mxu0 0.0
  %2727 = vmatprep.subr.mxu0 0.0
  %2728 = vmatpush1.msra.mxu0 0.0
  %2729 = vmatprep.subr.mxu0 0.0
  %2730 = vmatpush1.msra.mxu0 0.0
  %2731 = vmatprep.subr.mxu0 0.0
  %2732 = vmatpush1.msra.mxu0 0.0
  %2733 = vmatprep.subr.mxu0 0.0
  %2734 = vmatpush1.msra.mxu0 0.0
  %2735 = vmatprep.subr.mxu0 0.0
  %2736 = vmatpush1.msra.mxu0 0.0
  %2737 = vmatprep.subr.mxu0 0.0
  %2738 = vmatpush1.msra.mxu0 0.0
  %2739 = vmatprep.subr.mxu0 0.0
  %2740 = vmatpush1.msra.mxu0 0.0
  %2741 = vmatprep.subr.mxu0 0.0
  %2742 = vmatpush1.msra.mxu0 0.0
  %2743 = vmatprep.subr.mxu0 0.0
  %2744 = vmatpush1.msra.mxu0 0.0
  %2745 = vmatprep.subr.mxu0 0.0
  %2746 = vmatpush1.msra.mxu0 0.0
  %2747 = vmatprep.subr.mxu0 0.0
  %2748 = vmatpush1.msra.mxu0 0.0
  %2749 = vmatprep.mubr.f32.mxu0 0.0
  %2750 = vmatmul.mubr.f32.gmra.mrb[0].mxu0 %v2683
  %v2751 = vpop.f32.mrb[0].mxu0
  %v2752 = vadd.f32 %v2680, %v2751
  %v2753 = vpop.f32.mrb[0].mxu0
  %v2754 = vadd.f32 %v2681, %v2753
  %2755 = vdwg.mxu0
  %v2756 = vld [vmem:[%s1393] sm:$0xff]
  %v2757 = vld [vmem:[%s1393 + $0x8] sm:$0xff]
  %v2758 = vadd.f32 %v2752, %v2756
  %v2759 = vadd.f32 %v2754, %v2757
  %v2760 = vxor.u32 %v2758, 2147483648
  %v2761 = vxor.u32 %v2759, 2147483648
  %v2762 = vmul.f32 %v2760, 1.442695
  %v2763 = vpow.pop %v2762
  %v2764 = vmul.f32 %v2761, 1.442695
  %v2765 = vpow.pop %v2764
  %v2766 = vadd.f32 %v2763, 1.0
  %v2767 = vadd.f32 %v2765, 1.0
  %v2768 = vrcp.pop %v2766
  %v2769 = vmul.f32 1.0, %v2768
  %v2770 = vrcp.pop %v2767
  %v2771 = vmul.f32 1.0, %v2770
  %v2772 = vtanh.pop %v2759
  %v2773 = vmul.f32 %v2769, %v2655
  %2775 = vrot.lane.b32.xlu0 %v2772, 64
  %v2776 = vpop.permute.xlu0 %2775
  %v2778 = vmul.f32 %v2769, %v2776
  %2780 = vrot.lane.b32.xlu0 %v2778, 64
  %v2781 = vpop.permute.xlu0 %2780
  %v2783 = vadd.f32 %v2773, %v2781
  %v2784 = vtanh.pop %v2783
  %2786 = vrot.lane.b32.xlu0 %v2784, 64
  %v2787 = vpop.permute.xlu0 %2786
  %v2789 = vmul.f32 %v2771, %v2787
  %2790 = vst.msk [vmem:[%s1888] sm:$0xff] %vm66, %v2789
  %2791 = vst.msk [vmem:[#allocation5] sm:$0xff] %vm492, %v2789
  %v2792 = vld [vmem:[#allocation5] sm:$0xff]
  %v2793 = vld [vmem:[#allocation5 + $0x8] sm:$0xff]
  %v2794 = vld [vmem:[#allocation5 + $0x10] sm:$0xff]
  %v2795 = vld [vmem:[#allocation5 + $0x18] sm:$0xff]
  %v2796 = vld [vmem:[#allocation5 + $0x20] sm:$0xff]
  %v2797 = vld [vmem:[#allocation5 + $0x28] sm:$0xff]
  %v2798 = vld [vmem:[#allocation5 + $0x30] sm:$0xff]
  %v2799 = vld [vmem:[#allocation5 + $0x38] sm:$0xff]
  %v2800 = vld [vmem:[%s9] sm:$0xff]
  %v2801 = vld [vmem:[%s9 + $0x8] sm:$0xff]
  %v2802 = vld [vmem:[%s9 + $0x10] sm:$0xff]
  %v2803 = vld [vmem:[%s9 + $0x18] sm:$0xff]
  %v2804 = vld [vmem:[%s9 + $0x20] sm:$0xff]
  %v2805 = vld [vmem:[%s9 + $0x28] sm:$0xff]
  %v2806 = vld [vmem:[%s9 + $0x30] sm:$0xff]
  %v2807 = vld [vmem:[%s9 + $0x38] sm:$0xff]
  %v2808 = vld [vmem:[%s10] sm:$0x1]
  %v2810 = vlaneseq
  %v2811 = vshrl.u32 %v2810, 7
  %v2812 = vsub.s32 0, %v2811
  %v2813 = vrot.slane %v2808, %v2812
  %v2816 = vsel %vm378, %v2792, 0
  %v2819 = vsel %vm378, %v2793, 0
  %v2822 = vsel %vm378, %v2794, 0
  %v2825 = vsel %vm378, %v2795, 0
  %v2828 = vsel %vm378, %v2796, 0
  %v2831 = vsel %vm378, %v2797, 0
  %v2834 = vsel %vm378, %v2798, 0
  %v2837 = vsel %vm378, %v2799, 0
  %2839 = vmatprep.subr.mxu0 0.0
  %2840 = vmatpush1.msra.mxu0 %v2800
  %2841 = vmatprep.subr.mxu0 0.0
  %2842 = vmatpush1.msra.mxu0 %v2801
  %2843 = vmatprep.subr.mxu0 0.0
  %2844 = vmatpush1.msra.mxu0 %v2802
  %2845 = vmatprep.subr.mxu0 0.0
  %2846 = vmatpush1.msra.mxu0 %v2803
  %2847 = vmatprep.subr.mxu0 0.0
  %2848 = vmatpush1.msra.mxu0 %v2804
  %2849 = vmatprep.subr.mxu0 0.0
  %2850 = vmatpush1.msra.mxu0 %v2805
  %2851 = vmatprep.subr.mxu0 0.0
  %2852 = vmatpush1.msra.mxu0 %v2806
  %2853 = vmatprep.subr.mxu0 0.0
  %2854 = vmatpush1.msra.mxu0 %v2807
  %2855 = vmatprep.subr.mxu0 0.0
  %2856 = vmatpush1.msra.mxu0 0.0
  %2857 = vmatprep.subr.mxu0 0.0
  %2858 = vmatpush1.msra.mxu0 0.0
  %2859 = vmatprep.subr.mxu0 0.0
  %2860 = vmatpush1.msra.mxu0 0.0
  %2861 = vmatprep.subr.mxu0 0.0
  %2862 = vmatpush1.msra.mxu0 0.0
  %2863 = vmatprep.subr.mxu0 0.0
  %2864 = vmatpush1.msra.mxu0 0.0
  %2865 = vmatprep.subr.mxu0 0.0
  %2866 = vmatpush1.msra.mxu0 0.0
  %2867 = vmatprep.subr.mxu0 0.0
  %2868 = vmatpush1.msra.mxu0 0.0
  %2869 = vmatprep.subr.mxu0 0.0
  %2870 = vmatpush1.msra.mxu0 0.0
  %2871 = vmatprep.subr.mxu0 0.0
  %2872 = vmatpush1.msra.mxu0 0.0
  %2873 = vmatprep.subr.mxu0 0.0
  %2874 = vmatpush1.msra.mxu0 0.0
  %2875 = vmatprep.subr.mxu0 0.0
  %2876 = vmatpush1.msra.mxu0 0.0
  %2877 = vmatprep.subr.mxu0 0.0
  %2878 = vmatpush1.msra.mxu0 0.0
  %2879 = vmatprep.subr.mxu0 0.0
  %2880 = vmatpush1.msra.mxu0 0.0
  %2881 = vmatprep.subr.mxu0 0.0
  %2882 = vmatpush1.msra.mxu0 0.0
  %2883 = vmatprep.subr.mxu0 0.0
  %2884 = vmatpush1.msra.mxu0 0.0
  %2885 = vmatprep.subr.mxu0 0.0
  %2886 = vmatpush1.msra.mxu0 0.0
  %2887 = vmatprep.subr.mxu0 0.0
  %2888 = vmatpush1.msra.mxu0 0.0
  %2889 = vmatprep.subr.mxu0 0.0
  %2890 = vmatpush1.msra.mxu0 0.0
  %2891 = vmatprep.subr.mxu0 0.0
  %2892 = vmatpush1.msra.mxu0 0.0
  %2893 = vmatprep.subr.mxu0 0.0
  %2894 = vmatpush1.msra.mxu0 0.0
  %2895 = vmatprep.subr.mxu0 0.0
  %2896 = vmatpush1.msra.mxu0 0.0
  %2897 = vmatprep.subr.mxu0 0.0
  %2898 = vmatpush1.msra.mxu0 0.0
  %2899 = vmatprep.subr.mxu0 0.0
  %2900 = vmatpush1.msra.mxu0 0.0
  %2901 = vmatprep.subr.mxu0 0.0
  %2902 = vmatpush1.msra.mxu0 0.0
  %2903 = vmatprep.mubr.f32.mxu0 0.0
  %2904 = vmatmul.mubr.f32.gmra.mrb[0].mxu0 %v2816
  %v2905 = vpop.f32.mrb[0].mxu0
  %v2906 = vadd.f32 %v2813, %v2905
  %v2907 = vpop.f32.mrb[0].mxu0
  %2908 = vmatprep.mubr.f32.mxu0 0.0
  %2909 = vmatmul.mubr.f32.gmra.mrb[0].mxu0 %v2819
  %v2910 = vpop.f32.mrb[0].mxu0
  %v2911 = vadd.f32 %v2813, %v2910
  %v2912 = vpop.f32.mrb[0].mxu0
  %2913 = vmatprep.mubr.f32.mxu0 0.0
  %2914 = vmatmul.mubr.f32.gmra.mrb[0].mxu0 %v2822
  %v2915 = vpop.f32.mrb[0].mxu0
  %v2916 = vadd.f32 %v2813, %v2915
  %v2917 = vpop.f32.mrb[0].mxu0
  %2918 = vmatprep.mubr.f32.mxu0 0.0
  %2919 = vmatmul.mubr.f32.gmra.mrb[0].mxu0 %v2825
  %v2920 = vpop.f32.mrb[0].mxu0
  %v2921 = vadd.f32 %v2813, %v2920
  %v2922 = vpop.f32.mrb[0].mxu0
  %2923 = vmatprep.mubr.f32.mxu0 0.0
  %2924 = vmatmul.mubr.f32.gmra.mrb[0].mxu0 %v2828
  %v2925 = vpop.f32.mrb[0].mxu0
  %v2926 = vadd.f32 %v2813, %v2925
  %v2927 = vpop.f32.mrb[0].mxu0
  %2928 = vmatprep.mubr.f32.mxu0 0.0
  %2929 = vmatmul.mubr.f32.gmra.mrb[0].mxu0 %v2831
  %v2930 = vpop.f32.mrb[0].mxu0
  %v2931 = vadd.f32 %v2813, %v2930
  %v2932 = vpop.f32.mrb[0].mxu0
  %2933 = vmatprep.mubr.f32.mxu0 0.0
  %2934 = vmatmul.mubr.f32.gmra.mrb[0].mxu0 %v2834
  %v2935 = vpop.f32.mrb[0].mxu0
  %v2936 = vadd.f32 %v2813, %v2935
  %v2937 = vpop.f32.mrb[0].mxu0
  %2938 = vmatprep.mubr.f32.mxu0 0.0
  %2939 = vmatmul.mubr.f32.gmra.mrb[0].mxu0 %v2837
  %v2940 = vpop.f32.mrb[0].mxu0
  %v2941 = vadd.f32 %v2813, %v2940
  %v2942 = vpop.f32.mrb[0].mxu0
  %2943 = vdwg.mxu0
  %2944 = vst [vmem:[%s11] sm:$0xff] %v2906
  %2945 = vst [vmem:[%s11 + $0x8] sm:$0xff] %v2911
  %2946 = vst [vmem:[%s11 + $0x10] sm:$0xff] %v2916
  %2947 = vst [vmem:[%s11 + $0x18] sm:$0xff] %v2921
  %2948 = vst [vmem:[%s11 + $0x20] sm:$0xff] %v2926
  %2949 = vst [vmem:[%s11 + $0x28] sm:$0xff] %v2931
  %2950 = vst [vmem:[%s11 + $0x30] sm:$0xff] %v2936
  %2951 = vst [vmem:[%s11 + $0x38] sm:$0xff] %v2941
  // Predicated region
  $region46: #{ner_lstm_forward.1} parent=0 // pred_check
    _
  $region47: #{ner_lstm_forward.1} parent=0 // pred_check_branch
    %2953 = sbr.rel (0) target = $region49
  $region48: #{ner_lstm_forward.1} parent=0 // pred_region
    _
  $region49: #{ner_lstm_forward.1} parent=0 // pred_fallthru
    _
  // Predicated region
  $region50: #{ner_lstm_forward.1} parent=0 // pred_check
    _
  $region51: #{ner_lstm_forward.1} parent=0 // pred_check_branch
    %2955 = sbr.rel (0) target = $region53
  $region52: #{ner_lstm_forward.1} parent=0 // pred_region
    _
  $region53: #{ner_lstm_forward.1} parent=0 // pred_fallthru
    _

</llo_original>
